<compile_context>
chip_gen: v7x
topology: tpu7x:2x2x1
jax: 0.10.0
libtpu: 0.0.40
codegen_flags: <defaults>
</compile_context>

<pallas_src>
import functools
import math

import jax
import jax.numpy as jnp
from jax.experimental import pallas as pl
from jax.experimental.pallas import tpu as pltpu


# ----------------------------------------------------------------------------
# Synthetic architecture constants
# ----------------------------------------------------------------------------
NUM_LAYERS = 2      # wav2vec2-base has 12 encoder layers; reduced for this synthetic kernel
NUM_HEADS = 4
C1, C2 = 32, 32     # conv feature-extractor channels (wav2vec2 uses 512)
K1, S1 = 10, 5      # conv1 kernel / stride
K2, S2 = 8, 4       # conv2 kernel / stride (S2=4 is what the 4-frames-per-row packing assumes)
K1_PAD = 16         # conv1 im2col contraction dim padded 10 -> 16
N_PAD = 128         # lane-dense padding for the merged (logits, feat) output
LN_EPS = 1e-5


# ----------------------------------------------------------------------------
# The fused Pallas kernel (one grid step == `batch_block` batch elements)
# ----------------------------------------------------------------------------
def _id_network_kernel(
    p1_ref,                                   # (1, BB*G, 4*K1_PAD) bf16  conv1 patches, 4 frames / row
    w1_ref,                                   # (4*K1_PAD, 4*C1)     bf16  block-diagonal conv1 weight
    w2_ref,                                   # (K2*C1, C2)          bf16  conv2 weight
    fp_ln_g_ref, fp_ln_b_ref,                 # (1, C2)              f32
    fp_w_ref, fp_b_ref,                       # (C2, D) bf16 / (1, D) f32
    enc_ln_g_ref, enc_ln_b_ref,               # (1, D)               f32
    wqkv_ref, bqkv_ref,                       # (NL, D, 3D) bf16 / (NL, 1, 3D) f32
    wo_ref, bo_ref,                           # (NL, D, D)  bf16 / (NL, 1, D)  f32
    ln1_g_ref, ln1_b_ref,                     # (NL, 1, D)           f32
    ff1_w_ref, ff1_b_ref,                     # (NL, D, FFN) bf16 / (NL, 1, FFN) f32
    ff2_w_ref, ff2_b_ref,                     # (NL, FFN, D) bf16 / (NL, 1, D)  f32
    ln2_g_ref, ln2_b_ref,                     # (NL, 1, D)           f32
    mask_k_ref,                               # (D, H*R) bf16  head mask, 1/sqrt(dh) folded in
    mask_v_ref,                               # (H*R, D) bf16  head mask
    bias_ref,                                 # (R, H*R) f32   0 within batch elem, -1e9 across
    pwq_ref, pwkv_ref, pwo_ref,               # (D, D) / (D, 2D) / (D, D) bf16
    head_grp_ref,                             # (D, D) bf16    pooling head mask, scale folded in
    wcls_ref, hs_b_ref,                       # (D, N_PAD) bf16 (= pwo @ hs_w) / (1, N_PAD) f32
    out_ref,                                  # (BB, 8, N_PAD) f32  row0=logits, row1=feat
    *, num_layers, num_heads, seq_len, batch_block):
    f32 = jnp.float32
    bf16 = jnp.bfloat16
    T = seq_len
    H = num_heads
    BB = batch_block
    R = BB * T

    def layer_norm(v, g, b):
        # single-pass formulation: var = E[x^2] - mu^2
        mu = jnp.mean(v, axis=-1, keepdims=True)
        ms = jnp.mean(v * v, axis=-1, keepdims=True)
        var = jnp.maximum(ms - mu * mu, 0.0)
        return (v - mu) * jax.lax.rsqrt(var + LN_EPS) * g + b

    mask_k = mask_k_ref[...]                  # (D, H*R) bf16, scale folded
    mask_v = mask_v_ref[...]                  # (H*R, D) bf16
    bias = bias_ref[...]                      # (R, H*R) f32

    # ---- conv feature extractor (both conv stages fused in-kernel) ----------------
    # conv1: one matmul against a block-diagonal weight -> output already packed
    # 4 time-frames per row, so conv2's im2col is just two contiguous row slices.
    G = p1_ref.shape[1] // BB
    h1 = jnp.dot(p1_ref[0], w1_ref[...], preferred_element_type=f32)      # (BB*G, 4*C1)
    h1 = jax.nn.gelu(h1.reshape(BB, G, 4 * C1), approximate=True).astype(bf16)
    p2 = jnp.concatenate([h1[:, 0:T, :], h1[:, 1:T + 1, :]], axis=2)      # (BB, T, K2*C1)
    h2 = jnp.dot(p2.reshape(R, K2 * C1), w2_ref[...], preferred_element_type=f32)
    h2 = jax.nn.gelu(h2, approximate=True)                                # (R, C2)

    # ---- feature projection -------------------------------------------------------
    h2 = layer_norm(h2, fp_ln_g_ref[...], fp_ln_b_ref[...])
    x = jnp.dot(h2.astype(bf16), fp_w_ref[...], preferred_element_type=f32) + fp_b_ref[...]
    x = layer_norm(x, enc_ln_g_ref[...], enc_ln_b_ref[...])              # (R, D)

    D = x.shape[-1]

    # ---- transformer encoder layers (post-norm), weights VMEM-resident -------------
    # Packed multi-head attention: scores for all heads (and BB batch elems) live in
    # one lane-dense (R, H*R) tile; cross-batch pairs are excluded via `bias`.
    for l in range(num_layers):
        xb = x.astype(bf16)
        qkv = jnp.dot(xb, wqkv_ref[l], preferred_element_type=f32) + bqkv_ref[l]   # (R, 3D)
        q = qkv[:, 0:D].astype(bf16)
        kT = qkv[:, D:2 * D].T.astype(bf16)                # f32 transpose, cast before tiling
        v = qkv[:, 2 * D:3 * D].astype(bf16)

        k_rep = jnp.concatenate([kT] * H, axis=1) * mask_k                          # (D, H*R)
        s = jnp.dot(q, k_rep, preferred_element_type=f32) + bias                    # (R, H*R)
        m = jnp.max(s, axis=-1, keepdims=True)
        eb = jnp.exp(s - m).astype(bf16)

        # ctx and per-head softmax denominator in ONE (R,H*R)@(H*R,2D) matmul
        v_rep = jnp.concatenate([v] * H, axis=0) * mask_v                           # (H*R, D)
        vz = jnp.concatenate([v_rep, mask_v], axis=1)                               # (H*R, 2D)
        cz = jnp.dot(eb, vz, preferred_element_type=f32)                            # (R, 2D)
        z = jnp.maximum(cz[:, D:2 * D], 1e-20)            # clamp: no NaN if a head underflows
        ctx = cz[:, 0:D] / z

        attn = jnp.dot(ctx.astype(bf16), wo_ref[l], preferred_element_type=f32) + bo_ref[l]
        x = layer_norm(x + attn, ln1_g_ref[l], ln1_b_ref[l])

        ff = jnp.dot(x.astype(bf16), ff1_w_ref[l], preferred_element_type=f32) + ff1_b_ref[l]
        ff = jax.nn.gelu(ff, approximate=True)
        ff = jnp.dot(ff.astype(bf16), ff2_w_ref[l], preferred_element_type=f32) + ff2_b_ref[l]
        x = layer_norm(x + ff, ln2_g_ref[l], ln2_b_ref[l])

    # ---- AttentionalPool(D, 4, 0.1, 'max'): 'max'-seeded multi-head attention pooling
    xb = x.astype(bf16)
    seed = jnp.max(x.reshape(BB, T, D), axis=1)                                      # (BB, D)
    pq = jnp.dot(seed.astype(bf16), pwq_ref[...], preferred_element_type=f32)        # (BB, D)
    kv = jnp.dot(xb, pwkv_ref[...], preferred_element_type=f32)                      # (R, 2D)
    pk3 = kv[:, 0:D].reshape(BB, T, D)
    pv3 = kv[:, D:2 * D].reshape(BB, T, D)
    sq = (pk3 * pq.reshape(BB, 1, D)).reshape(R, D)
    s = jnp.dot(sq.astype(bf16), head_grp_ref[...], preferred_element_type=f32)      # (R, D)
    s3 = s.reshape(BB, T, D)
    m = jnp.max(s3, axis=1, keepdims=True)
    e = jnp.exp(s3 - m)
    z = jnp.maximum(jnp.sum(e, axis=1, keepdims=True), 1e-20)
    pooled = jnp.sum((e / z) * pv3, axis=1)                                           # (BB, D)
    pooled_b = pooled.astype(bf16)

    # ---- epilogue: feat and logits are independent matmuls (wcls = pwo @ hs_w) ----
    feat = jnp.dot(pooled_b, pwo_ref[...], preferred_element_type=f32)                # (BB, D)
    logits = jnp.dot(pooled_b, wcls_ref[...], preferred_element_type=f32) + hs_b_ref[...]

    n_pad = out_ref.shape[-1]
    feat_pad = jnp.concatenate([feat, jnp.zeros((BB, n_pad - D), f32)], axis=1)       # (BB, N_PAD)
    tail = jnp.zeros((BB, out_ref.shape[1] - 2, n_pad), f32)
    out_ref[...] = jnp.concatenate(
        [logits.reshape(BB, 1, n_pad), feat_pad.reshape(BB, 1, n_pad), tail], axis=1)


# ----------------------------------------------------------------------------
# Parameters (deterministic, synthetic)
# ----------------------------------------------------------------------------
def init_params(key, hparams, n_class):
    D = hparams["fin_channel"]
    ffn = 4 * D
    keys = iter(jax.random.split(key, 64))

    def dense(shape, fan_in):
        return jax.random.normal(next(keys), shape, jnp.float32) / math.sqrt(fan_in)

    params = {
        "conv1_w": dense((C1, 1, K1), 1 * K1),
        "conv2_w": dense((C2, C1, K2), C1 * K2),
        "fp_ln_g": jnp.ones((C2,), jnp.float32),
        "fp_ln_b": jnp.zeros((C2,), jnp.float32),
        "fp_w": dense((C2, D), C2),
        "fp_b": jnp.zeros((D,), jnp.float32),
        "enc_ln_g": jnp.ones((D,), jnp.float32),
        "enc_ln_b": jnp.zeros((D,), jnp.float32),
        "layers": [],
        "pool_wq": dense((D, D), D),
        "pool_wk": dense((D, D), D),
        "pool_wv": dense((D, D), D),
        "pool_wo": dense((D, D), D),
        "hs_w": dense((D, n_class), D),
        "hs_b": jnp.zeros((n_class,), jnp.float32),
    }
    for _ in range(NUM_LAYERS):
        params["layers"].append({
            "wq": dense((D, D), D), "bq": jnp.zeros((D,), jnp.float32),
            "wk": dense((D, D), D), "bk": jnp.zeros((D,), jnp.float32),
            "wv": dense((D, D), D), "bv": jnp.zeros((D,), jnp.float32),
            "wo": dense((D, D), D), "bo": jnp.zeros((D,), jnp.float32),
            "ln1_g": jnp.ones((D,), jnp.float32), "ln1_b": jnp.zeros((D,), jnp.float32),
            "ff1_w": dense((D, ffn), D), "ff1_b": jnp.zeros((ffn,), jnp.float32),
            "ff2_w": dense((ffn, D), ffn), "ff2_b": jnp.zeros((D,), jnp.float32),
            "ln2_g": jnp.ones((D,), jnp.float32), "ln2_b": jnp.zeros((D,), jnp.float32),
        })
    return params


# ----------------------------------------------------------------------------
# ID_Network.forward (id_hs_linear == 'linear' branch)
# ----------------------------------------------------------------------------
def id_network_forward(params, hparams, x, ans, *, batch_block=None):
    B, L = x.shape
    D = hparams["fin_channel"]
    n_class = params["hs_w"].shape[1]
    H = NUM_HEADS
    dh = D // H
    bf16 = jnp.bfloat16

    # batch-row stacking: BB elements per grid step (set batch_block=1 on v7x for B=2
    # to use both TensorCores; BB=2 is the right default on single-TC v5e/v6e).
    BB = batch_block if batch_block is not None else min(B, 2)
    assert B % BB == 0, "batch_block must divide batch size"

    T1 = (L - K1) // S1 + 1
    T2 = (T1 - K2) // S2 + 1
    T = T2
    R = BB * T
    G = max(pl.cdiv(T1, 4), T + 1)
    G = ((G + 7) // 8) * 8                     # sublane-friendly packed-row count
    T1P = G * 4

    # --- conv1 im2col (gather stays in JAX); pack 4 output frames per row so conv2's
    #     im2col is two contiguous row slices inside the kernel; BB elems per block ---
    idx = jnp.arange(T1)[:, None] * S1 + jnp.arange(K1)[None, :]
    p1 = x[:, idx]                                                      # (B, T1, K1)
    p1 = jnp.pad(p1, ((0, 0), (0, T1P - T1), (0, K1_PAD - K1)))
    p1 = p1.reshape(B // BB, BB * G, 4 * K1_PAD).astype(bf16)           # (B/BB, BB*G, 64)

    # --- conv weights as matmul operands ---
    w1 = params["conv1_w"].transpose(2, 1, 0).reshape(K1, C1)
    w1 = jnp.pad(w1, ((0, K1_PAD - K1), (0, 0)))
    w1_wide = jnp.kron(jnp.eye(4, dtype=jnp.float32), w1).astype(bf16)            # (64, 4*C1)
    w2 = params["conv2_w"].transpose(2, 1, 0).reshape(K2 * C1, C2).astype(bf16)   # (256, C2)

    # --- encoder weights: QKV fused, per-layer tensors stacked along a leading axis ---
    def stack(fn):
        return jnp.stack([fn(lyr) for lyr in params["layers"]], axis=0)

    wqkv = stack(lambda l: jnp.concatenate([l["wq"], l["wk"], l["wv"]], axis=1)).astype(bf16)
    bqkv = stack(lambda l: jnp.concatenate([l["bq"], l["bk"], l["bv"]])[None, :])
    wo = stack(lambda l: l["wo"]).astype(bf16)
    bo = stack(lambda l: l["bo"][None, :])
    ln1g = stack(lambda l: l["ln1_g"][None, :])
    ln1b = stack(lambda l: l["ln1_b"][None, :])
    ff1w = stack(lambda l: l["ff1_w"]).astype(bf16)
    ff1b = stack(lambda l: l["ff1_b"][None, :])
    ff2w = stack(lambda l: l["ff2_w"]).astype(bf16)
    ff2b = stack(lambda l: l["ff2_b"][None, :])
    ln2g = stack(lambda l: l["ln2_g"][None, :])
    ln2b = stack(lambda l: l["ln2_b"][None, :])

    # --- batch-invariant masks, precomputed in JAX (scale folded in) ---
    scale = 1.0 / math.sqrt(dh)
    d_head = jnp.arange(D)[:, None] // dh
    col_head = jnp.arange(H * R)[None, :] // R
    mask_k = ((d_head == col_head) * scale).astype(bf16)                 # (D, H*R)
    row_head = jnp.arange(H * R)[:, None] // R
    mask_v = (row_head == (jnp.arange(D)[None, :] // dh)).astype(bf16)   # (H*R, D)
    q_batch = jnp.arange(R)[:, None] // T
    k_batch = (jnp.arange(H * R)[None, :] % R) // T
    attn_bias = jnp.where(q_batch == k_batch, 0.0, -1e9).astype(jnp.float32)  # (R, H*R)
    head_grp = ((d_head == d_head.T) * scale).astype(bf16)               # (D, D) pooling mask

    # --- pooling / classifier weights (pwo @ hs_w prefused, lane-dense padded) ---
    pwq = params["pool_wq"].astype(bf16)
    pwkv = jnp.concatenate([params["pool_wk"], params["pool_wv"]], axis=1).astype(bf16)
    pwo = params["pool_wo"].astype(bf16)
    wcls = jnp.dot(params["pool_wo"], params["hs_w"])                    # (D, n_class) f32
    wcls = jnp.pad(wcls, ((0, 0), (0, N_PAD - n_class))).astype(bf16)    # (D, N_PAD)
    hs_b = jnp.pad(params["hs_b"], (0, N_PAD - n_class))[None, :]

    weight_args = [
        w1_wide, w2,
        params["fp_ln_g"][None, :], params["fp_ln_b"][None, :],
        params["fp_w"].astype(bf16), params["fp_b"][None, :],
        params["enc_ln_g"][None, :], params["enc_ln_b"][None, :],
        wqkv, bqkv, wo, bo, ln1g, ln1b, ff1w, ff1b, ff2w, ff2b, ln2g, ln2b,
        mask_k, mask_v, attn_bias,
        pwq, pwkv, pwo, head_grp, wcls, hs_b,
    ]

    def const_spec(a):
        nd = a.ndim

        def imap(g):
            return (0,) * nd

        return pl.BlockSpec(a.shape, imap)

    in_specs = [pl.BlockSpec((1, BB * G, 4 * K1_PAD), lambda g: (g, 0, 0))]
    in_specs += [const_spec(a) for a in weight_args]

    # merged lane-dense output: row 0 = logits, row 1 = feat, rows 2..7 = 0
    out_shape = jax.ShapeDtypeStruct((B, 8, N_PAD), jnp.float32)
    out_specs = pl.BlockSpec((BB, 8, N_PAD), lambda g: (g, 0, 0))

    kernel = functools.partial(_id_network_kernel,
                               num_layers=len(params["layers"]),
                               num_heads=H,
                               seq_len=T,
                               batch_block=BB)

    res = pl.pallas_call(
        kernel,
        grid=(B // BB,),
        in_specs=in_specs,
        out_specs=out_specs,
        out_shape=out_shape,
        compiler_params=pltpu.CompilerParams(dimension_semantics=("parallel",)),
    )(p1, *weight_args)

    out = res[:, 0, :n_class]       # self.hs(feat)  ('linear' branch)
    feat = res[:, 1, :D]            # x.view(batch, -1)
    return out, ans, feat


# ----------------------------------------------------------------------------
if __name__ == "__main__":
    hparams = {"fin_channel": 64, "id_hs_linear": "linear",
               "id_scale": 30.0, "id_margin": 0.2}
    n_class = 8
    B, L = 2, 680                       # 680 -> conv(10,5)=135 -> conv(8,4)=32 frames

    key = jax.random.PRNGKey(0)
    k_param, k_x, k_ans = jax.random.split(key, 3)
    params = init_params(k_param, hparams, n_class)

    x = jax.random.normal(k_x, (B, L), jnp.float32)               # raw waveform (B, L)
    ans = jax.random.randint(k_ans, (B,), 0, n_class, jnp.int32)  # speaker labels

    out, ans_out, feat = id_network_forward(params, hparams, x, ans)
    jax.block_until_ready((out, ans_out, feat))

    assert out.shape == (B, n_class)
    assert feat.shape == (B, hparams["fin_channel"])
    assert ans_out.shape == (B,)
    assert bool(jnp.all(jnp.isfinite(out))) and bool(jnp.all(jnp.isfinite(feat)))
    print("KERNEL_OK")
</pallas_src>

<mosaic_0001>
module attributes {stable_mosaic.version = 11 : i64} {
  func.func @_id_network_kernel(%arg0: i32, %arg1: memref<1x80x64xbf16, #tpu.memory_space<vmem>>, %arg2: memref<64x128xbf16, #tpu.memory_space<vmem>>, %arg3: memref<256x32xbf16, #tpu.memory_space<vmem>>, %arg4: memref<1x32xf32, #tpu.memory_space<vmem>>, %arg5: memref<1x32xf32, #tpu.memory_space<vmem>>, %arg6: memref<32x64xbf16, #tpu.memory_space<vmem>>, %arg7: memref<1x64xf32, #tpu.memory_space<vmem>>, %arg8: memref<1x64xf32, #tpu.memory_space<vmem>>, %arg9: memref<1x64xf32, #tpu.memory_space<vmem>>, %arg10: memref<2x64x192xbf16, #tpu.memory_space<vmem>>, %arg11: memref<2x1x192xf32, #tpu.memory_space<vmem>>, %arg12: memref<2x64x64xbf16, #tpu.memory_space<vmem>>, %arg13: memref<2x1x64xf32, #tpu.memory_space<vmem>>, %arg14: memref<2x1x64xf32, #tpu.memory_space<vmem>>, %arg15: memref<2x1x64xf32, #tpu.memory_space<vmem>>, %arg16: memref<2x64x256xbf16, #tpu.memory_space<vmem>>, %arg17: memref<2x1x256xf32, #tpu.memory_space<vmem>>, %arg18: memref<2x256x64xbf16, #tpu.memory_space<vmem>>, %arg19: memref<2x1x64xf32, #tpu.memory_space<vmem>>, %arg20: memref<2x1x64xf32, #tpu.memory_space<vmem>>, %arg21: memref<2x1x64xf32, #tpu.memory_space<vmem>>, %arg22: memref<64x256xbf16, #tpu.memory_space<vmem>>, %arg23: memref<256x64xbf16, #tpu.memory_space<vmem>>, %arg24: memref<64x256xf32, #tpu.memory_space<vmem>>, %arg25: memref<64x64xbf16, #tpu.memory_space<vmem>>, %arg26: memref<64x128xbf16, #tpu.memory_space<vmem>>, %arg27: memref<64x64xbf16, #tpu.memory_space<vmem>>, %arg28: memref<64x64xbf16, #tpu.memory_space<vmem>>, %arg29: memref<64x128xbf16, #tpu.memory_space<vmem>>, %arg30: memref<1x128xf32, #tpu.memory_space<vmem>>, %arg31: memref<2x8x128xf32, #tpu.memory_space<vmem>>) attributes {dimension_semantics = [#tpu.dimension_semantics<parallel>], iteration_bounds = array<i64: 1>, scalar_prefetch = 0 : i64, scratch_operands = 0 : i64, tpu.core_type = #tpu.core_type<tc>, window_params = [{transform_indices = @transform_0, window_bounds = array<i64: 1, 80, 64>}, {pipeline_mode = #tpu.pipeline_mode<synchronous>, transform_indices = @transform_1, window_bounds = array<i64: 64, 128>}, {pipeline_mode = #tpu.pipeline_mode<synchronous>, transform_indices = @transform_2, window_bounds = array<i64: 256, 32>}, {pipeline_mode = #tpu.pipeline_mode<synchronous>, transform_indices = @transform_3, window_bounds = array<i64: 1, 32>}, {pipeline_mode = #tpu.pipeline_mode<synchronous>, transform_indices = @transform_4, window_bounds = array<i64: 1, 32>}, {pipeline_mode = #tpu.pipeline_mode<synchronous>, transform_indices = @transform_5, window_bounds = array<i64: 32, 64>}, {pipeline_mode = #tpu.pipeline_mode<synchronous>, transform_indices = @transform_6, window_bounds = array<i64: 1, 64>}, {pipeline_mode = #tpu.pipeline_mode<synchronous>, transform_indices = @transform_7, window_bounds = array<i64: 1, 64>}, {pipeline_mode = #tpu.pipeline_mode<synchronous>, transform_indices = @transform_8, window_bounds = array<i64: 1, 64>}, {pipeline_mode = #tpu.pipeline_mode<synchronous>, transform_indices = @transform_9, window_bounds = array<i64: 2, 64, 192>}, {pipeline_mode = #tpu.pipeline_mode<synchronous>, transform_indices = @transform_10, window_bounds = array<i64: 2, 1, 192>}, {pipeline_mode = #tpu.pipeline_mode<synchronous>, transform_indices = @transform_11, window_bounds = array<i64: 2, 64, 64>}, {pipeline_mode = #tpu.pipeline_mode<synchronous>, transform_indices = @transform_12, window_bounds = array<i64: 2, 1, 64>}, {pipeline_mode = #tpu.pipeline_mode<synchronous>, transform_indices = @transform_13, window_bounds = array<i64: 2, 1, 64>}, {pipeline_mode = #tpu.pipeline_mode<synchronous>, transform_indices = @transform_14, window_bounds = array<i64: 2, 1, 64>}, {pipeline_mode = #tpu.pipeline_mode<synchronous>, transform_indices = @transform_15, window_bounds = array<i64: 2, 64, 256>}, {pipeline_mode = #tpu.pipeline_mode<synchronous>, transform_indices = @transform_16, window_bounds = array<i64: 2, 1, 256>}, {pipeline_mode = #tpu.pipeline_mode<synchronous>, transform_indices = @transform_17, window_bounds = array<i64: 2, 256, 64>}, {pipeline_mode = #tpu.pipeline_mode<synchronous>, transform_indices = @transform_18, window_bounds = array<i64: 2, 1, 64>}, {pipeline_mode = #tpu.pipeline_mode<synchronous>, transform_indices = @transform_19, window_bounds = array<i64: 2, 1, 64>}, {pipeline_mode = #tpu.pipeline_mode<synchronous>, transform_indices = @transform_20, window_bounds = array<i64: 2, 1, 64>}, {pipeline_mode = #tpu.pipeline_mode<synchronous>, transform_indices = @transform_21, window_bounds = array<i64: 64, 256>}, {pipeline_mode = #tpu.pipeline_mode<synchronous>, transform_indices = @transform_22, window_bounds = array<i64: 256, 64>}, {pipeline_mode = #tpu.pipeline_mode<synchronous>, transform_indices = @transform_23, window_bounds = array<i64: 64, 256>}, {pipeline_mode = #tpu.pipeline_mode<synchronous>, transform_indices = @transform_24, window_bounds = array<i64: 64, 64>}, {pipeline_mode = #tpu.pipeline_mode<synchronous>, transform_indices = @transform_25, window_bounds = array<i64: 64, 128>}, {pipeline_mode = #tpu.pipeline_mode<synchronous>, transform_indices = @transform_26, window_bounds = array<i64: 64, 64>}, {pipeline_mode = #tpu.pipeline_mode<synchronous>, transform_indices = @transform_27, window_bounds = array<i64: 64, 64>}, {pipeline_mode = #tpu.pipeline_mode<synchronous>, transform_indices = @transform_28, window_bounds = array<i64: 64, 128>}, {pipeline_mode = #tpu.pipeline_mode<synchronous>, transform_indices = @transform_29, window_bounds = array<i64: 1, 128>}, {transform_indices = @transform_30, window_bounds = array<i64: 2, 8, 128>}]} {
    %c0 = arith.constant 0 : index
    %c0_0 = arith.constant 0 : index
    %0 = vector.load %arg22[%c0, %c0_0] : memref<64x256xbf16, #tpu.memory_space<vmem>>, vector<64x256xbf16>
    %c0_1 = arith.constant 0 : index
    %c0_2 = arith.constant 0 : index
    %1 = vector.load %arg23[%c0_1, %c0_2] : memref<256x64xbf16, #tpu.memory_space<vmem>>, vector<256x64xbf16>
    %c0_3 = arith.constant 0 : index
    %c0_4 = arith.constant 0 : index
    %2 = vector.load %arg24[%c0_3, %c0_4] : memref<64x256xf32, #tpu.memory_space<vmem>>, vector<64x256xf32>
    %c0_5 = arith.constant 0 : index
    %c0_6 = arith.constant 0 : index
    %c0_7 = arith.constant 0 : index
    %3 = vector.load %arg1[%c0_5, %c0_6, %c0_7] : memref<1x80x64xbf16, #tpu.memory_space<vmem>>, vector<1x80x64xbf16>
    %4 = vector.shape_cast %3 : vector<1x80x64xbf16> to vector<80x64xbf16>
    %c0_8 = arith.constant 0 : index
    %c0_9 = arith.constant 0 : index
    %5 = vector.load %arg2[%c0_8, %c0_9] : memref<64x128xbf16, #tpu.memory_space<vmem>>, vector<64x128xbf16>
    %cst = arith.constant dense<0.000000e+00> : vector<80x128xf32>
    %6 = tpu.matmul %4, %5, %cst {dimension_numbers = #tpu.dot_dimension_numbers<[1], [0], [0], [1], [0, 0, 1, 1], [], []>} : vector<80x64xbf16>, vector<64x128xbf16>, vector<80x128xf32> -> vector<80x128xf32>
    %7 = vector.shape_cast %6 : vector<80x128xf32> to vector<2x40x128xf32>
    %8 = arith.mulf %7, %7 : vector<2x40x128xf32>
    %9 = arith.mulf %7, %8 : vector<2x40x128xf32>
    %cst_10 = arith.constant 4.471500e-02 : f32
    %10 = vector.broadcast %cst_10 : f32 to vector<2x40x128xf32>
    %11 = arith.mulf %10, %9 : vector<2x40x128xf32>
    %12 = arith.addf %7, %11 : vector<2x40x128xf32>
    %cst_11 = arith.constant 0.797884583 : f32
    %13 = vector.broadcast %cst_11 : f32 to vector<2x40x128xf32>
    %14 = arith.mulf %13, %12 : vector<2x40x128xf32>
    %15 = math.tanh %14 : vector<2x40x128xf32>
    %cst_12 = arith.constant 1.000000e+00 : f32
    %16 = vector.broadcast %cst_12 : f32 to vector<2x40x128xf32>
    %17 = arith.addf %16, %15 : vector<2x40x128xf32>
    %cst_13 = arith.constant 5.000000e-01 : f32
    %18 = vector.broadcast %cst_13 : f32 to vector<2x40x128xf32>
    %19 = arith.mulf %18, %17 : vector<2x40x128xf32>
    %20 = arith.mulf %7, %19 : vector<2x40x128xf32>
    %21 = arith.truncf %20 : vector<2x40x128xf32> to vector<2x40x128xbf16>
    %22 = vector.extract_strided_slice %21 {offsets = [0, 0, 0], sizes = [2, 32, 128], strides = [1, 1, 1]} : vector<2x40x128xbf16> to vector<2x32x128xbf16>
    %23 = vector.extract_strided_slice %21 {offsets = [0, 1, 0], sizes = [2, 32, 128], strides = [1, 1, 1]} : vector<2x40x128xbf16> to vector<2x32x128xbf16>
    %24 = tpu.concatenate %22, %23 in 2 : vector<2x32x128xbf16>, vector<2x32x128xbf16> -> vector<2x32x256xbf16>
    %25 = vector.shape_cast %24 : vector<2x32x256xbf16> to vector<64x256xbf16>
    %c0_14 = arith.constant 0 : index
    %c0_15 = arith.constant 0 : index
    %26 = vector.load %arg3[%c0_14, %c0_15] : memref<256x32xbf16, #tpu.memory_space<vmem>>, vector<256x32xbf16>
    %cst_16 = arith.constant dense<0.000000e+00> : vector<64x32xf32>
    %27 = tpu.matmul %25, %26, %cst_16 {dimension_numbers = #tpu.dot_dimension_numbers<[1], [0], [0], [1], [0, 0, 1, 1], [], []>} : vector<64x256xbf16>, vector<256x32xbf16>, vector<64x32xf32> -> vector<64x32xf32>
    %28 = arith.mulf %27, %27 : vector<64x32xf32>
    %29 = arith.mulf %27, %28 : vector<64x32xf32>
    %cst_17 = arith.constant 4.471500e-02 : f32
    %30 = vector.broadcast %cst_17 : f32 to vector<64x32xf32>
    %31 = arith.mulf %30, %29 : vector<64x32xf32>
    %32 = arith.addf %27, %31 : vector<64x32xf32>
    %cst_18 = arith.constant 0.797884583 : f32
    %33 = vector.broadcast %cst_18 : f32 to vector<64x32xf32>
    %34 = arith.mulf %33, %32 : vector<64x32xf32>
    %35 = math.tanh %34 : vector<64x32xf32>
    %cst_19 = arith.constant 1.000000e+00 : f32
    %36 = vector.broadcast %cst_19 : f32 to vector<64x32xf32>
    %37 = arith.addf %36, %35 : vector<64x32xf32>
    %cst_20 = arith.constant 5.000000e-01 : f32
    %38 = vector.broadcast %cst_20 : f32 to vector<64x32xf32>
    %39 = arith.mulf %38, %37 : vector<64x32xf32>
    %40 = arith.mulf %27, %39 : vector<64x32xf32>
    %c0_21 = arith.constant 0 : index
    %c0_22 = arith.constant 0 : index
    %41 = vector.load %arg4[%c0_21, %c0_22] : memref<1x32xf32, #tpu.memory_space<vmem>>, vector<1x32xf32>
    %c0_23 = arith.constant 0 : index
    %c0_24 = arith.constant 0 : index
    %42 = vector.load %arg5[%c0_23, %c0_24] : memref<1x32xf32, #tpu.memory_space<vmem>>, vector<1x32xf32>
    %cst_25 = arith.constant dense<0.000000e+00> : vector<64xf32>
    %43 = vector.multi_reduction <add>, %40, %cst_25 [1] : vector<64x32xf32> to vector<64xf32>
    %44 = vector.shape_cast %43 : vector<64xf32> to vector<64x1xf32>
    %cst_26 = arith.constant 3.200000e+01 : f32
    %45 = vector.broadcast %cst_26 : f32 to vector<64x1xf32>
    %46 = arith.divf %44, %45 : vector<64x1xf32>
    %47 = arith.mulf %40, %40 : vector<64x32xf32>
    %cst_27 = arith.constant dense<0.000000e+00> : vector<64xf32>
    %48 = vector.multi_reduction <add>, %47, %cst_27 [1] : vector<64x32xf32> to vector<64xf32>
    %49 = vector.shape_cast %48 : vector<64xf32> to vector<64x1xf32>
    %cst_28 = arith.constant 3.200000e+01 : f32
    %50 = vector.broadcast %cst_28 : f32 to vector<64x1xf32>
    %51 = arith.divf %49, %50 : vector<64x1xf32>
    %52 = arith.mulf %46, %46 : vector<64x1xf32>
    %53 = arith.subf %51, %52 : vector<64x1xf32>
    %cst_29 = arith.constant 0.000000e+00 : f32
    %54 = vector.broadcast %cst_29 : f32 to vector<64x1xf32>
    %55 = arith.maximumf %53, %54 : vector<64x1xf32>
    %56 = vector.broadcast %46 : vector<64x1xf32> to vector<64x32xf32>
    %57 = arith.subf %40, %56 : vector<64x32xf32>
    %cst_30 = arith.constant 9.99999974E-6 : f32
    %58 = vector.broadcast %cst_30 : f32 to vector<64x1xf32>
    %59 = arith.addf %55, %58 : vector<64x1xf32>
    %60 = math.rsqrt %59 : vector<64x1xf32>
    %61 = vector.broadcast %60 : vector<64x1xf32> to vector<64x32xf32>
    %62 = arith.mulf %57, %61 : vector<64x32xf32>
    %63 = vector.broadcast %41 : vector<1x32xf32> to vector<64x32xf32>
    %64 = arith.mulf %62, %63 : vector<64x32xf32>
    %65 = vector.broadcast %42 : vector<1x32xf32> to vector<64x32xf32>
    %66 = arith.addf %64, %65 : vector<64x32xf32>
    %67 = arith.truncf %66 : vector<64x32xf32> to vector<64x32xbf16>
    %c0_31 = arith.constant 0 : index
    %c0_32 = arith.constant 0 : index
    %68 = vector.load %arg6[%c0_31, %c0_32] : memref<32x64xbf16, #tpu.memory_space<vmem>>, vector<32x64xbf16>
    %cst_33 = arith.constant dense<0.000000e+00> : vector<64x64xf32>
    %69 = tpu.matmul %67, %68, %cst_33 {dimension_numbers = #tpu.dot_dimension_numbers<[1], [0], [0], [1], [0, 0, 1, 1], [], []>} : vector<64x32xbf16>, vector<32x64xbf16>, vector<64x64xf32> -> vector<64x64xf32>
    %c0_34 = arith.constant 0 : index
    %c0_35 = arith.constant 0 : index
    %70 = vector.load %arg7[%c0_34, %c0_35] : memref<1x64xf32, #tpu.memory_space<vmem>>, vector<1x64xf32>
    %71 = vector.broadcast %70 : vector<1x64xf32> to vector<64x64xf32>
    %72 = arith.addf %69, %71 : vector<64x64xf32>
    %c0_36 = arith.constant 0 : index
    %c0_37 = arith.constant 0 : index
    %73 = vector.load %arg8[%c0_36, %c0_37] : memref<1x64xf32, #tpu.memory_space<vmem>>, vector<1x64xf32>
    %c0_38 = arith.constant 0 : index
    %c0_39 = arith.constant 0 : index
    %74 = vector.load %arg9[%c0_38, %c0_39] : memref<1x64xf32, #tpu.memory_space<vmem>>, vector<1x64xf32>
    %cst_40 = arith.constant dense<0.000000e+00> : vector<64xf32>
    %75 = vector.multi_reduction <add>, %72, %cst_40 [1] : vector<64x64xf32> to vector<64xf32>
    %76 = vector.shape_cast %75 : vector<64xf32> to vector<64x1xf32>
    %cst_41 = arith.constant 6.400000e+01 : f32
    %77 = vector.broadcast %cst_41 : f32 to vector<64x1xf32>
    %78 = arith.divf %76, %77 : vector<64x1xf32>
    %79 = arith.mulf %72, %72 : vector<64x64xf32>
    %cst_42 = arith.constant dense<0.000000e+00> : vector<64xf32>
    %80 = vector.multi_reduction <add>, %79, %cst_42 [1] : vector<64x64xf32> to vector<64xf32>
    %81 = vector.shape_cast %80 : vector<64xf32> to vector<64x1xf32>
    %cst_43 = arith.constant 6.400000e+01 : f32
    %82 = vector.broadcast %cst_43 : f32 to vector<64x1xf32>
    %83 = arith.divf %81, %82 : vector<64x1xf32>
    %84 = arith.mulf %78, %78 : vector<64x1xf32>
    %85 = arith.subf %83, %84 : vector<64x1xf32>
    %cst_44 = arith.constant 0.000000e+00 : f32
    %86 = vector.broadcast %cst_44 : f32 to vector<64x1xf32>
    %87 = arith.maximumf %85, %86 : vector<64x1xf32>
    %88 = vector.broadcast %78 : vector<64x1xf32> to vector<64x64xf32>
    %89 = arith.subf %72, %88 : vector<64x64xf32>
    %cst_45 = arith.constant 9.99999974E-6 : f32
    %90 = vector.broadcast %cst_45 : f32 to vector<64x1xf32>
    %91 = arith.addf %87, %90 : vector<64x1xf32>
    %92 = math.rsqrt %91 : vector<64x1xf32>
    %93 = vector.broadcast %92 : vector<64x1xf32> to vector<64x64xf32>
    %94 = arith.mulf %89, %93 : vector<64x64xf32>
    %95 = vector.broadcast %73 : vector<1x64xf32> to vector<64x64xf32>
    %96 = arith.mulf %94, %95 : vector<64x64xf32>
    %97 = vector.broadcast %74 : vector<1x64xf32> to vector<64x64xf32>
    %98 = arith.addf %96, %97 : vector<64x64xf32>
    %99 = arith.truncf %98 : vector<64x64xf32> to vector<64x64xbf16>
    %c0_46 = arith.constant 0 : index
    %c0_47 = arith.constant 0 : index
    %c0_48 = arith.constant 0 : index
    %100 = vector.load %arg10[%c0_46, %c0_47, %c0_48] : memref<2x64x192xbf16, #tpu.memory_space<vmem>>, vector<1x64x192xbf16>
    %101 = vector.shape_cast %100 : vector<1x64x192xbf16> to vector<64x192xbf16>
    %cst_49 = arith.constant dense<0.000000e+00> : vector<64x192xf32>
    %102 = tpu.matmul %99, %101, %cst_49 {dimension_numbers = #tpu.dot_dimension_numbers<[1], [0], [0], [1], [0, 0, 1, 1], [], []>} : vector<64x64xbf16>, vector<64x192xbf16>, vector<64x192xf32> -> vector<64x192xf32>
    %c0_50 = arith.constant 0 : index
    %c0_51 = arith.constant 0 : index
    %c0_52 = arith.constant 0 : index
    %103 = vector.load %arg11[%c0_50, %c0_51, %c0_52] : memref<2x1x192xf32, #tpu.memory_space<vmem>>, vector<1x1x192xf32>
    %104 = vector.shape_cast %103 : vector<1x1x192xf32> to vector<1x192xf32>
    %105 = vector.broadcast %104 : vector<1x192xf32> to vector<64x192xf32>
    %106 = arith.addf %102, %105 : vector<64x192xf32>
    %107 = vector.extract_strided_slice %106 {offsets = [0, 0], sizes = [64, 64], strides = [1, 1]} : vector<64x192xf32> to vector<64x64xf32>
    %108 = arith.truncf %107 : vector<64x64xf32> to vector<64x64xbf16>
    %109 = vector.extract_strided_slice %106 {offsets = [0, 64], sizes = [64, 64], strides = [1, 1]} : vector<64x192xf32> to vector<64x64xf32>
    %110 = tpu.transpose %109, [1, 0] : vector<64x64xf32> -> vector<64x64xf32>
    %111 = arith.truncf %110 : vector<64x64xf32> to vector<64x64xbf16>
    %112 = vector.extract_strided_slice %106 {offsets = [0, 128], sizes = [64, 64], strides = [1, 1]} : vector<64x192xf32> to vector<64x64xf32>
    %113 = arith.truncf %112 : vector<64x64xf32> to vector<64x64xbf16>
    %114 = tpu.concatenate %111, %111, %111, %111 in 1 : vector<64x64xbf16>, vector<64x64xbf16>, vector<64x64xbf16>, vector<64x64xbf16> -> vector<64x256xbf16>
    %115 = arith.mulf %114, %0 : vector<64x256xbf16>
    %cst_53 = arith.constant dense<0.000000e+00> : vector<64x256xf32>
    %116 = tpu.matmul %108, %115, %cst_53 {dimension_numbers = #tpu.dot_dimension_numbers<[1], [0], [0], [1], [0, 0, 1, 1], [], []>} : vector<64x64xbf16>, vector<64x256xbf16>, vector<64x256xf32> -> vector<64x256xf32>
    %117 = arith.addf %116, %2 : vector<64x256xf32>
    %cst_54 = arith.constant dense<0xFF800000> : vector<64xf32>
    %118 = vector.multi_reduction <maximumf>, %117, %cst_54 [1] : vector<64x256xf32> to vector<64xf32>
    %119 = vector.shape_cast %118 : vector<64xf32> to vector<64x1xf32>
    %120 = vector.broadcast %119 : vector<64x1xf32> to vector<64x256xf32>
    %121 = arith.subf %117, %120 : vector<64x256xf32>
    %122 = math.exp %121 : vector<64x256xf32>
    %123 = arith.truncf %122 : vector<64x256xf32> to vector<64x256xbf16>
    %124 = tpu.concatenate %113, %113, %113, %113 in 0 : vector<64x64xbf16>, vector<64x64xbf16>, vector<64x64xbf16>, vector<64x64xbf16> -> vector<256x64xbf16>
    %125 = arith.mulf %124, %1 : vector<256x64xbf16>
    %126 = tpu.concatenate %125, %1 in 1 : vector<256x64xbf16>, vector<256x64xbf16> -> vector<256x128xbf16>
    %cst_55 = arith.constant dense<0.000000e+00> : vector<64x128xf32>
    %127 = tpu.matmul %123, %126, %cst_55 {dimension_numbers = #tpu.dot_dimension_numbers<[1], [0], [0], [1], [0, 0, 1, 1], [], []>} : vector<64x256xbf16>, vector<256x128xbf16>, vector<64x128xf32> -> vector<64x128xf32>
    %128 = vector.extract_strided_slice %127 {offsets = [0, 64], sizes = [64, 64], strides = [1, 1]} : vector<64x128xf32> to vector<64x64xf32>
    %cst_56 = arith.constant 9.99999968E-21 : f32
    %129 = vector.broadcast %cst_56 : f32 to vector<64x64xf32>
    %130 = arith.maximumf %128, %129 : vector<64x64xf32>
    %131 = vector.extract_strided_slice %127 {offsets = [0, 0], sizes = [64, 64], strides = [1, 1]} : vector<64x128xf32> to vector<64x64xf32>
    %132 = arith.divf %131, %130 : vector<64x64xf32>
    %133 = arith.truncf %132 : vector<64x64xf32> to vector<64x64xbf16>
    %c0_57 = arith.constant 0 : index
    %c0_58 = arith.constant 0 : index
    %c0_59 = arith.constant 0 : index
    %134 = vector.load %arg12[%c0_57, %c0_58, %c0_59] : memref<2x64x64xbf16, #tpu.memory_space<vmem>>, vector<1x64x64xbf16>
    %135 = vector.shape_cast %134 : vector<1x64x64xbf16> to vector<64x64xbf16>
    %cst_60 = arith.constant dense<0.000000e+00> : vector<64x64xf32>
    %136 = tpu.matmul %133, %135, %cst_60 {dimension_numbers = #tpu.dot_dimension_numbers<[1], [0], [0], [1], [0, 0, 1, 1], [], []>} : vector<64x64xbf16>, vector<64x64xbf16>, vector<64x64xf32> -> vector<64x64xf32>
    %c0_61 = arith.constant 0 : index
    %c0_62 = arith.constant 0 : index
    %c0_63 = arith.constant 0 : index
    %137 = vector.load %arg13[%c0_61, %c0_62, %c0_63] : memref<2x1x64xf32, #tpu.memory_space<vmem>>, vector<1x1x64xf32>
    %138 = vector.shape_cast %137 : vector<1x1x64xf32> to vector<1x64xf32>
    %139 = vector.broadcast %138 : vector<1x64xf32> to vector<64x64xf32>
    %140 = arith.addf %136, %139 : vector<64x64xf32>
    %141 = arith.addf %98, %140 : vector<64x64xf32>
    %c0_64 = arith.constant 0 : index
    %c0_65 = arith.constant 0 : index
    %c0_66 = arith.constant 0 : index
    %142 = vector.load %arg14[%c0_64, %c0_65, %c0_66] : memref<2x1x64xf32, #tpu.memory_space<vmem>>, vector<1x1x64xf32>
    %143 = vector.shape_cast %142 : vector<1x1x64xf32> to vector<1x64xf32>
    %c0_67 = arith.constant 0 : index
    %c0_68 = arith.constant 0 : index
    %c0_69 = arith.constant 0 : index
    %144 = vector.load %arg15[%c0_67, %c0_68, %c0_69] : memref<2x1x64xf32, #tpu.memory_space<vmem>>, vector<1x1x64xf32>
    %145 = vector.shape_cast %144 : vector<1x1x64xf32> to vector<1x64xf32>
    %cst_70 = arith.constant dense<0.000000e+00> : vector<64xf32>
    %146 = vector.multi_reduction <add>, %141, %cst_70 [1] : vector<64x64xf32> to vector<64xf32>
    %147 = vector.shape_cast %146 : vector<64xf32> to vector<64x1xf32>
    %cst_71 = arith.constant 6.400000e+01 : f32
    %148 = vector.broadcast %cst_71 : f32 to vector<64x1xf32>
    %149 = arith.divf %147, %148 : vector<64x1xf32>
    %150 = arith.mulf %141, %141 : vector<64x64xf32>
    %cst_72 = arith.constant dense<0.000000e+00> : vector<64xf32>
    %151 = vector.multi_reduction <add>, %150, %cst_72 [1] : vector<64x64xf32> to vector<64xf32>
    %152 = vector.shape_cast %151 : vector<64xf32> to vector<64x1xf32>
    %cst_73 = arith.constant 6.400000e+01 : f32
    %153 = vector.broadcast %cst_73 : f32 to vector<64x1xf32>
    %154 = arith.divf %152, %153 : vector<64x1xf32>
    %155 = arith.mulf %149, %149 : vector<64x1xf32>
    %156 = arith.subf %154, %155 : vector<64x1xf32>
    %cst_74 = arith.constant 0.000000e+00 : f32
    %157 = vector.broadcast %cst_74 : f32 to vector<64x1xf32>
    %158 = arith.maximumf %156, %157 : vector<64x1xf32>
    %159 = vector.broadcast %149 : vector<64x1xf32> to vector<64x64xf32>
    %160 = arith.subf %141, %159 : vector<64x64xf32>
    %cst_75 = arith.constant 9.99999974E-6 : f32
    %161 = vector.broadcast %cst_75 : f32 to vector<64x1xf32>
    %162 = arith.addf %158, %161 : vector<64x1xf32>
    %163 = math.rsqrt %162 : vector<64x1xf32>
    %164 = vector.broadcast %163 : vector<64x1xf32> to vector<64x64xf32>
    %165 = arith.mulf %160, %164 : vector<64x64xf32>
    %166 = vector.broadcast %143 : vector<1x64xf32> to vector<64x64xf32>
    %167 = arith.mulf %165, %166 : vector<64x64xf32>
    %168 = vector.broadcast %145 : vector<1x64xf32> to vector<64x64xf32>
    %169 = arith.addf %167, %168 : vector<64x64xf32>
    %170 = arith.truncf %169 : vector<64x64xf32> to vector<64x64xbf16>
    %c0_76 = arith.constant 0 : index
    %c0_77 = arith.constant 0 : index
    %c0_78 = arith.constant 0 : index
    %171 = vector.load %arg16[%c0_76, %c0_77, %c0_78] : memref<2x64x256xbf16, #tpu.memory_space<vmem>>, vector<1x64x256xbf16>
    %172 = vector.shape_cast %171 : vector<1x64x256xbf16> to vector<64x256xbf16>
    %cst_79 = arith.constant dense<0.000000e+00> : vector<64x256xf32>
    %173 = tpu.matmul %170, %172, %cst_79 {dimension_numbers = #tpu.dot_dimension_numbers<[1], [0], [0], [1], [0, 0, 1, 1], [], []>} : vector<64x64xbf16>, vector<64x256xbf16>, vector<64x256xf32> -> vector<64x256xf32>
    %c0_80 = arith.constant 0 : index
    %c0_81 = arith.constant 0 : index
    %c0_82 = arith.constant 0 : index
    %174 = vector.load %arg17[%c0_80, %c0_81, %c0_82] : memref<2x1x256xf32, #tpu.memory_space<vmem>>, vector<1x1x256xf32>
    %175 = vector.shape_cast %174 : vector<1x1x256xf32> to vector<1x256xf32>
    %176 = vector.broadcast %175 : vector<1x256xf32> to vector<64x256xf32>
    %177 = arith.addf %173, %176 : vector<64x256xf32>
    %178 = arith.mulf %177, %177 : vector<64x256xf32>
    %179 = arith.mulf %177, %178 : vector<64x256xf32>
    %cst_83 = arith.constant 4.471500e-02 : f32
    %180 = vector.broadcast %cst_83 : f32 to vector<64x256xf32>
    %181 = arith.mulf %180, %179 : vector<64x256xf32>
    %182 = arith.addf %177, %181 : vector<64x256xf32>
    %cst_84 = arith.constant 0.797884583 : f32
    %183 = vector.broadcast %cst_84 : f32 to vector<64x256xf32>
    %184 = arith.mulf %183, %182 : vector<64x256xf32>
    %185 = math.tanh %184 : vector<64x256xf32>
    %cst_85 = arith.constant 1.000000e+00 : f32
    %186 = vector.broadcast %cst_85 : f32 to vector<64x256xf32>
    %187 = arith.addf %186, %185 : vector<64x256xf32>
    %cst_86 = arith.constant 5.000000e-01 : f32
    %188 = vector.broadcast %cst_86 : f32 to vector<64x256xf32>
    %189 = arith.mulf %188, %187 : vector<64x256xf32>
    %190 = arith.mulf %177, %189 : vector<64x256xf32>
    %191 = arith.truncf %190 : vector<64x256xf32> to vector<64x256xbf16>
    %c0_87 = arith.constant 0 : index
    %c0_88 = arith.constant 0 : index
    %c0_89 = arith.constant 0 : index
    %192 = vector.load %arg18[%c0_87, %c0_88, %c0_89] : memref<2x256x64xbf16, #tpu.memory_space<vmem>>, vector<1x256x64xbf16>
    %193 = vector.shape_cast %192 : vector<1x256x64xbf16> to vector<256x64xbf16>
    %cst_90 = arith.constant dense<0.000000e+00> : vector<64x64xf32>
    %194 = tpu.matmul %191, %193, %cst_90 {dimension_numbers = #tpu.dot_dimension_numbers<[1], [0], [0], [1], [0, 0, 1, 1], [], []>} : vector<64x256xbf16>, vector<256x64xbf16>, vector<64x64xf32> -> vector<64x64xf32>
    %c0_91 = arith.constant 0 : index
    %c0_92 = arith.constant 0 : index
    %c0_93 = arith.constant 0 : index
    %195 = vector.load %arg19[%c0_91, %c0_92, %c0_93] : memref<2x1x64xf32, #tpu.memory_space<vmem>>, vector<1x1x64xf32>
    %196 = vector.shape_cast %195 : vector<1x1x64xf32> to vector<1x64xf32>
    %197 = vector.broadcast %196 : vector<1x64xf32> to vector<64x64xf32>
    %198 = arith.addf %194, %197 : vector<64x64xf32>
    %199 = arith.addf %169, %198 : vector<64x64xf32>
    %c0_94 = arith.constant 0 : index
    %c0_95 = arith.constant 0 : index
    %c0_96 = arith.constant 0 : index
    %200 = vector.load %arg20[%c0_94, %c0_95, %c0_96] : memref<2x1x64xf32, #tpu.memory_space<vmem>>, vector<1x1x64xf32>
    %201 = vector.shape_cast %200 : vector<1x1x64xf32> to vector<1x64xf32>
    %c0_97 = arith.constant 0 : index
    %c0_98 = arith.constant 0 : index
    %c0_99 = arith.constant 0 : index
    %202 = vector.load %arg21[%c0_97, %c0_98, %c0_99] : memref<2x1x64xf32, #tpu.memory_space<vmem>>, vector<1x1x64xf32>
    %203 = vector.shape_cast %202 : vector<1x1x64xf32> to vector<1x64xf32>
    %cst_100 = arith.constant dense<0.000000e+00> : vector<64xf32>
    %204 = vector.multi_reduction <add>, %199, %cst_100 [1] : vector<64x64xf32> to vector<64xf32>
    %205 = vector.shape_cast %204 : vector<64xf32> to vector<64x1xf32>
    %cst_101 = arith.constant 6.400000e+01 : f32
    %206 = vector.broadcast %cst_101 : f32 to vector<64x1xf32>
    %207 = arith.divf %205, %206 : vector<64x1xf32>
    %208 = arith.mulf %199, %199 : vector<64x64xf32>
    %cst_102 = arith.constant dense<0.000000e+00> : vector<64xf32>
    %209 = vector.multi_reduction <add>, %208, %cst_102 [1] : vector<64x64xf32> to vector<64xf32>
    %210 = vector.shape_cast %209 : vector<64xf32> to vector<64x1xf32>
    %cst_103 = arith.constant 6.400000e+01 : f32
    %211 = vector.broadcast %cst_103 : f32 to vector<64x1xf32>
    %212 = arith.divf %210, %211 : vector<64x1xf32>
    %213 = arith.mulf %207, %207 : vector<64x1xf32>
    %214 = arith.subf %212, %213 : vector<64x1xf32>
    %cst_104 = arith.constant 0.000000e+00 : f32
    %215 = vector.broadcast %cst_104 : f32 to vector<64x1xf32>
    %216 = arith.maximumf %214, %215 : vector<64x1xf32>
    %217 = vector.broadcast %207 : vector<64x1xf32> to vector<64x64xf32>
    %218 = arith.subf %199, %217 : vector<64x64xf32>
    %cst_105 = arith.constant 9.99999974E-6 : f32
    %219 = vector.broadcast %cst_105 : f32 to vector<64x1xf32>
    %220 = arith.addf %216, %219 : vector<64x1xf32>
    %221 = math.rsqrt %220 : vector<64x1xf32>
    %222 = vector.broadcast %221 : vector<64x1xf32> to vector<64x64xf32>
    %223 = arith.mulf %218, %222 : vector<64x64xf32>
    %224 = vector.broadcast %201 : vector<1x64xf32> to vector<64x64xf32>
    %225 = arith.mulf %223, %224 : vector<64x64xf32>
    %226 = vector.broadcast %203 : vector<1x64xf32> to vector<64x64xf32>
    %227 = arith.addf %225, %226 : vector<64x64xf32>
    %228 = arith.truncf %227 : vector<64x64xf32> to vector<64x64xbf16>
    %c1 = arith.constant 1 : index
    %c0_106 = arith.constant 0 : index
    %c0_107 = arith.constant 0 : index
    %229 = vector.load %arg10[%c1, %c0_106, %c0_107] : memref<2x64x192xbf16, #tpu.memory_space<vmem>>, vector<1x64x192xbf16>
    %230 = vector.shape_cast %229 : vector<1x64x192xbf16> to vector<64x192xbf16>
    %cst_108 = arith.constant dense<0.000000e+00> : vector<64x192xf32>
    %231 = tpu.matmul %228, %230, %cst_108 {dimension_numbers = #tpu.dot_dimension_numbers<[1], [0], [0], [1], [0, 0, 1, 1], [], []>} : vector<64x64xbf16>, vector<64x192xbf16>, vector<64x192xf32> -> vector<64x192xf32>
    %c1_109 = arith.constant 1 : index
    %c0_110 = arith.constant 0 : index
    %c0_111 = arith.constant 0 : index
    %232 = vector.load %arg11[%c1_109, %c0_110, %c0_111] : memref<2x1x192xf32, #tpu.memory_space<vmem>>, vector<1x1x192xf32>
    %233 = vector.shape_cast %232 : vector<1x1x192xf32> to vector<1x192xf32>
    %234 = vector.broadcast %233 : vector<1x192xf32> to vector<64x192xf32>
    %235 = arith.addf %231, %234 : vector<64x192xf32>
    %236 = vector.extract_strided_slice %235 {offsets = [0, 0], sizes = [64, 64], strides = [1, 1]} : vector<64x192xf32> to vector<64x64xf32>
    %237 = arith.truncf %236 : vector<64x64xf32> to vector<64x64xbf16>
    %238 = vector.extract_strided_slice %235 {offsets = [0, 64], sizes = [64, 64], strides = [1, 1]} : vector<64x192xf32> to vector<64x64xf32>
    %239 = tpu.transpose %238, [1, 0] : vector<64x64xf32> -> vector<64x64xf32>
    %240 = arith.truncf %239 : vector<64x64xf32> to vector<64x64xbf16>
    %241 = vector.extract_strided_slice %235 {offsets = [0, 128], sizes = [64, 64], strides = [1, 1]} : vector<64x192xf32> to vector<64x64xf32>
    %242 = arith.truncf %241 : vector<64x64xf32> to vector<64x64xbf16>
    %243 = tpu.concatenate %240, %240, %240, %240 in 1 : vector<64x64xbf16>, vector<64x64xbf16>, vector<64x64xbf16>, vector<64x64xbf16> -> vector<64x256xbf16>
    %244 = arith.mulf %243, %0 : vector<64x256xbf16>
    %cst_112 = arith.constant dense<0.000000e+00> : vector<64x256xf32>
    %245 = tpu.matmul %237, %244, %cst_112 {dimension_numbers = #tpu.dot_dimension_numbers<[1], [0], [0], [1], [0, 0, 1, 1], [], []>} : vector<64x64xbf16>, vector<64x256xbf16>, vector<64x256xf32> -> vector<64x256xf32>
    %246 = arith.addf %245, %2 : vector<64x256xf32>
    %cst_113 = arith.constant dense<0xFF800000> : vector<64xf32>
    %247 = vector.multi_reduction <maximumf>, %246, %cst_113 [1] : vector<64x256xf32> to vector<64xf32>
    %248 = vector.shape_cast %247 : vector<64xf32> to vector<64x1xf32>
    %249 = vector.broadcast %248 : vector<64x1xf32> to vector<64x256xf32>
    %250 = arith.subf %246, %249 : vector<64x256xf32>
    %251 = math.exp %250 : vector<64x256xf32>
    %252 = arith.truncf %251 : vector<64x256xf32> to vector<64x256xbf16>
    %253 = tpu.concatenate %242, %242, %242, %242 in 0 : vector<64x64xbf16>, vector<64x64xbf16>, vector<64x64xbf16>, vector<64x64xbf16> -> vector<256x64xbf16>
    %254 = arith.mulf %253, %1 : vector<256x64xbf16>
    %255 = tpu.concatenate %254, %1 in 1 : vector<256x64xbf16>, vector<256x64xbf16> -> vector<256x128xbf16>
    %cst_114 = arith.constant dense<0.000000e+00> : vector<64x128xf32>
    %256 = tpu.matmul %252, %255, %cst_114 {dimension_numbers = #tpu.dot_dimension_numbers<[1], [0], [0], [1], [0, 0, 1, 1], [], []>} : vector<64x256xbf16>, vector<256x128xbf16>, vector<64x128xf32> -> vector<64x128xf32>
    %257 = vector.extract_strided_slice %256 {offsets = [0, 64], sizes = [64, 64], strides = [1, 1]} : vector<64x128xf32> to vector<64x64xf32>
    %cst_115 = arith.constant 9.99999968E-21 : f32
    %258 = vector.broadcast %cst_115 : f32 to vector<64x64xf32>
    %259 = arith.maximumf %257, %258 : vector<64x64xf32>
    %260 = vector.extract_strided_slice %256 {offsets = [0, 0], sizes = [64, 64], strides = [1, 1]} : vector<64x128xf32> to vector<64x64xf32>
    %261 = arith.divf %260, %259 : vector<64x64xf32>
    %262 = arith.truncf %261 : vector<64x64xf32> to vector<64x64xbf16>
    %c1_116 = arith.constant 1 : index
    %c0_117 = arith.constant 0 : index
    %c0_118 = arith.constant 0 : index
    %263 = vector.load %arg12[%c1_116, %c0_117, %c0_118] : memref<2x64x64xbf16, #tpu.memory_space<vmem>>, vector<1x64x64xbf16>
    %264 = vector.shape_cast %263 : vector<1x64x64xbf16> to vector<64x64xbf16>
    %cst_119 = arith.constant dense<0.000000e+00> : vector<64x64xf32>
    %265 = tpu.matmul %262, %264, %cst_119 {dimension_numbers = #tpu.dot_dimension_numbers<[1], [0], [0], [1], [0, 0, 1, 1], [], []>} : vector<64x64xbf16>, vector<64x64xbf16>, vector<64x64xf32> -> vector<64x64xf32>
    %c1_120 = arith.constant 1 : index
    %c0_121 = arith.constant 0 : index
    %c0_122 = arith.constant 0 : index
    %266 = vector.load %arg13[%c1_120, %c0_121, %c0_122] : memref<2x1x64xf32, #tpu.memory_space<vmem>>, vector<1x1x64xf32>
    %267 = vector.shape_cast %266 : vector<1x1x64xf32> to vector<1x64xf32>
    %268 = vector.broadcast %267 : vector<1x64xf32> to vector<64x64xf32>
    %269 = arith.addf %265, %268 : vector<64x64xf32>
    %270 = arith.addf %227, %269 : vector<64x64xf32>
    %c1_123 = arith.constant 1 : index
    %c0_124 = arith.constant 0 : index
    %c0_125 = arith.constant 0 : index
    %271 = vector.load %arg14[%c1_123, %c0_124, %c0_125] : memref<2x1x64xf32, #tpu.memory_space<vmem>>, vector<1x1x64xf32>
    %272 = vector.shape_cast %271 : vector<1x1x64xf32> to vector<1x64xf32>
    %c1_126 = arith.constant 1 : index
    %c0_127 = arith.constant 0 : index
    %c0_128 = arith.constant 0 : index
    %273 = vector.load %arg15[%c1_126, %c0_127, %c0_128] : memref<2x1x64xf32, #tpu.memory_space<vmem>>, vector<1x1x64xf32>
    %274 = vector.shape_cast %273 : vector<1x1x64xf32> to vector<1x64xf32>
    %cst_129 = arith.constant dense<0.000000e+00> : vector<64xf32>
    %275 = vector.multi_reduction <add>, %270, %cst_129 [1] : vector<64x64xf32> to vector<64xf32>
    %276 = vector.shape_cast %275 : vector<64xf32> to vector<64x1xf32>
    %cst_130 = arith.constant 6.400000e+01 : f32
    %277 = vector.broadcast %cst_130 : f32 to vector<64x1xf32>
    %278 = arith.divf %276, %277 : vector<64x1xf32>
    %279 = arith.mulf %270, %270 : vector<64x64xf32>
    %cst_131 = arith.constant dense<0.000000e+00> : vector<64xf32>
    %280 = vector.multi_reduction <add>, %279, %cst_131 [1] : vector<64x64xf32> to vector<64xf32>
    %281 = vector.shape_cast %280 : vector<64xf32> to vector<64x1xf32>
    %cst_132 = arith.constant 6.400000e+01 : f32
    %282 = vector.broadcast %cst_132 : f32 to vector<64x1xf32>
    %283 = arith.divf %281, %282 : vector<64x1xf32>
    %284 = arith.mulf %278, %278 : vector<64x1xf32>
    %285 = arith.subf %283, %284 : vector<64x1xf32>
    %cst_133 = arith.constant 0.000000e+00 : f32
    %286 = vector.broadcast %cst_133 : f32 to vector<64x1xf32>
    %287 = arith.maximumf %285, %286 : vector<64x1xf32>
    %288 = vector.broadcast %278 : vector<64x1xf32> to vector<64x64xf32>
    %289 = arith.subf %270, %288 : vector<64x64xf32>
    %cst_134 = arith.constant 9.99999974E-6 : f32
    %290 = vector.broadcast %cst_134 : f32 to vector<64x1xf32>
    %291 = arith.addf %287, %290 : vector<64x1xf32>
    %292 = math.rsqrt %291 : vector<64x1xf32>
    %293 = vector.broadcast %292 : vector<64x1xf32> to vector<64x64xf32>
    %294 = arith.mulf %289, %293 : vector<64x64xf32>
    %295 = vector.broadcast %272 : vector<1x64xf32> to vector<64x64xf32>
    %296 = arith.mulf %294, %295 : vector<64x64xf32>
    %297 = vector.broadcast %274 : vector<1x64xf32> to vector<64x64xf32>
    %298 = arith.addf %296, %297 : vector<64x64xf32>
    %299 = arith.truncf %298 : vector<64x64xf32> to vector<64x64xbf16>
    %c1_135 = arith.constant 1 : index
    %c0_136 = arith.constant 0 : index
    %c0_137 = arith.constant 0 : index
    %300 = vector.load %arg16[%c1_135, %c0_136, %c0_137] : memref<2x64x256xbf16, #tpu.memory_space<vmem>>, vector<1x64x256xbf16>
    %301 = vector.shape_cast %300 : vector<1x64x256xbf16> to vector<64x256xbf16>
    %cst_138 = arith.constant dense<0.000000e+00> : vector<64x256xf32>
    %302 = tpu.matmul %299, %301, %cst_138 {dimension_numbers = #tpu.dot_dimension_numbers<[1], [0], [0], [1], [0, 0, 1, 1], [], []>} : vector<64x64xbf16>, vector<64x256xbf16>, vector<64x256xf32> -> vector<64x256xf32>
    %c1_139 = arith.constant 1 : index
    %c0_140 = arith.constant 0 : index
    %c0_141 = arith.constant 0 : index
    %303 = vector.load %arg17[%c1_139, %c0_140, %c0_141] : memref<2x1x256xf32, #tpu.memory_space<vmem>>, vector<1x1x256xf32>
    %304 = vector.shape_cast %303 : vector<1x1x256xf32> to vector<1x256xf32>
    %305 = vector.broadcast %304 : vector<1x256xf32> to vector<64x256xf32>
    %306 = arith.addf %302, %305 : vector<64x256xf32>
    %307 = arith.mulf %306, %306 : vector<64x256xf32>
    %308 = arith.mulf %306, %307 : vector<64x256xf32>
    %cst_142 = arith.constant 4.471500e-02 : f32
    %309 = vector.broadcast %cst_142 : f32 to vector<64x256xf32>
    %310 = arith.mulf %309, %308 : vector<64x256xf32>
    %311 = arith.addf %306, %310 : vector<64x256xf32>
    %cst_143 = arith.constant 0.797884583 : f32
    %312 = vector.broadcast %cst_143 : f32 to vector<64x256xf32>
    %313 = arith.mulf %312, %311 : vector<64x256xf32>
    %314 = math.tanh %313 : vector<64x256xf32>
    %cst_144 = arith.constant 1.000000e+00 : f32
    %315 = vector.broadcast %cst_144 : f32 to vector<64x256xf32>
    %316 = arith.addf %315, %314 : vector<64x256xf32>
    %cst_145 = arith.constant 5.000000e-01 : f32
    %317 = vector.broadcast %cst_145 : f32 to vector<64x256xf32>
    %318 = arith.mulf %317, %316 : vector<64x256xf32>
    %319 = arith.mulf %306, %318 : vector<64x256xf32>
    %320 = arith.truncf %319 : vector<64x256xf32> to vector<64x256xbf16>
    %c1_146 = arith.constant 1 : index
    %c0_147 = arith.constant 0 : index
    %c0_148 = arith.constant 0 : index
    %321 = vector.load %arg18[%c1_146, %c0_147, %c0_148] : memref<2x256x64xbf16, #tpu.memory_space<vmem>>, vector<1x256x64xbf16>
    %322 = vector.shape_cast %321 : vector<1x256x64xbf16> to vector<256x64xbf16>
    %cst_149 = arith.constant dense<0.000000e+00> : vector<64x64xf32>
    %323 = tpu.matmul %320, %322, %cst_149 {dimension_numbers = #tpu.dot_dimension_numbers<[1], [0], [0], [1], [0, 0, 1, 1], [], []>} : vector<64x256xbf16>, vector<256x64xbf16>, vector<64x64xf32> -> vector<64x64xf32>
    %c1_150 = arith.constant 1 : index
    %c0_151 = arith.constant 0 : index
    %c0_152 = arith.constant 0 : index
    %324 = vector.load %arg19[%c1_150, %c0_151, %c0_152] : memref<2x1x64xf32, #tpu.memory_space<vmem>>, vector<1x1x64xf32>
    %325 = vector.shape_cast %324 : vector<1x1x64xf32> to vector<1x64xf32>
    %326 = vector.broadcast %325 : vector<1x64xf32> to vector<64x64xf32>
    %327 = arith.addf %323, %326 : vector<64x64xf32>
    %328 = arith.addf %298, %327 : vector<64x64xf32>
    %c1_153 = arith.constant 1 : index
    %c0_154 = arith.constant 0 : index
    %c0_155 = arith.constant 0 : index
    %329 = vector.load %arg20[%c1_153, %c0_154, %c0_155] : memref<2x1x64xf32, #tpu.memory_space<vmem>>, vector<1x1x64xf32>
    %330 = vector.shape_cast %329 : vector<1x1x64xf32> to vector<1x64xf32>
    %c1_156 = arith.constant 1 : index
    %c0_157 = arith.constant 0 : index
    %c0_158 = arith.constant 0 : index
    %331 = vector.load %arg21[%c1_156, %c0_157, %c0_158] : memref<2x1x64xf32, #tpu.memory_space<vmem>>, vector<1x1x64xf32>
    %332 = vector.shape_cast %331 : vector<1x1x64xf32> to vector<1x64xf32>
    %cst_159 = arith.constant dense<0.000000e+00> : vector<64xf32>
    %333 = vector.multi_reduction <add>, %328, %cst_159 [1] : vector<64x64xf32> to vector<64xf32>
    %334 = vector.shape_cast %333 : vector<64xf32> to vector<64x1xf32>
    %cst_160 = arith.constant 6.400000e+01 : f32
    %335 = vector.broadcast %cst_160 : f32 to vector<64x1xf32>
    %336 = arith.divf %334, %335 : vector<64x1xf32>
    %337 = arith.mulf %328, %328 : vector<64x64xf32>
    %cst_161 = arith.constant dense<0.000000e+00> : vector<64xf32>
    %338 = vector.multi_reduction <add>, %337, %cst_161 [1] : vector<64x64xf32> to vector<64xf32>
    %339 = vector.shape_cast %338 : vector<64xf32> to vector<64x1xf32>
    %cst_162 = arith.constant 6.400000e+01 : f32
    %340 = vector.broadcast %cst_162 : f32 to vector<64x1xf32>
    %341 = arith.divf %339, %340 : vector<64x1xf32>
    %342 = arith.mulf %336, %336 : vector<64x1xf32>
    %343 = arith.subf %341, %342 : vector<64x1xf32>
    %cst_163 = arith.constant 0.000000e+00 : f32
    %344 = vector.broadcast %cst_163 : f32 to vector<64x1xf32>
    %345 = arith.maximumf %343, %344 : vector<64x1xf32>
    %346 = vector.broadcast %336 : vector<64x1xf32> to vector<64x64xf32>
    %347 = arith.subf %328, %346 : vector<64x64xf32>
    %cst_164 = arith.constant 9.99999974E-6 : f32
    %348 = vector.broadcast %cst_164 : f32 to vector<64x1xf32>
    %349 = arith.addf %345, %348 : vector<64x1xf32>
    %350 = math.rsqrt %349 : vector<64x1xf32>
    %351 = vector.broadcast %350 : vector<64x1xf32> to vector<64x64xf32>
    %352 = arith.mulf %347, %351 : vector<64x64xf32>
    %353 = vector.broadcast %330 : vector<1x64xf32> to vector<64x64xf32>
    %354 = arith.mulf %352, %353 : vector<64x64xf32>
    %355 = vector.broadcast %332 : vector<1x64xf32> to vector<64x64xf32>
    %356 = arith.addf %354, %355 : vector<64x64xf32>
    %357 = arith.truncf %356 : vector<64x64xf32> to vector<64x64xbf16>
    %358 = vector.shape_cast %356 : vector<64x64xf32> to vector<2x32x64xf32>
    %cst_165 = arith.constant dense<0xFF800000> : vector<2x64xf32>
    %359 = vector.multi_reduction <maximumf>, %358, %cst_165 [1] : vector<2x32x64xf32> to vector<2x64xf32>
    %360 = arith.truncf %359 : vector<2x64xf32> to vector<2x64xbf16>
    %c0_166 = arith.constant 0 : index
    %c0_167 = arith.constant 0 : index
    %361 = vector.load %arg25[%c0_166, %c0_167] : memref<64x64xbf16, #tpu.memory_space<vmem>>, vector<64x64xbf16>
    %cst_168 = arith.constant dense<0.000000e+00> : vector<2x64xf32>
    %362 = tpu.matmul %360, %361, %cst_168 {dimension_numbers = #tpu.dot_dimension_numbers<[1], [0], [0], [1], [0, 0, 1, 1], [], []>} : vector<2x64xbf16>, vector<64x64xbf16>, vector<2x64xf32> -> vector<2x64xf32>
    %c0_169 = arith.constant 0 : index
    %c0_170 = arith.constant 0 : index
    %363 = vector.load %arg26[%c0_169, %c0_170] : memref<64x128xbf16, #tpu.memory_space<vmem>>, vector<64x128xbf16>
    %cst_171 = arith.constant dense<0.000000e+00> : vector<64x128xf32>
    %364 = tpu.matmul %357, %363, %cst_171 {dimension_numbers = #tpu.dot_dimension_numbers<[1], [0], [0], [1], [0, 0, 1, 1], [], []>} : vector<64x64xbf16>, vector<64x128xbf16>, vector<64x128xf32> -> vector<64x128xf32>
    %365 = vector.extract_strided_slice %364 {offsets = [0, 0], sizes = [64, 64], strides = [1, 1]} : vector<64x128xf32> to vector<64x64xf32>
    %366 = vector.shape_cast %365 : vector<64x64xf32> to vector<2x32x64xf32>
    %367 = vector.extract_strided_slice %364 {offsets = [0, 64], sizes = [64, 64], strides = [1, 1]} : vector<64x128xf32> to vector<64x64xf32>
    %368 = vector.shape_cast %367 : vector<64x64xf32> to vector<2x32x64xf32>
    %369 = vector.shape_cast %362 : vector<2x64xf32> to vector<2x1x64xf32>
    %370 = vector.broadcast %369 : vector<2x1x64xf32> to vector<2x32x64xf32>
    %371 = arith.mulf %366, %370 : vector<2x32x64xf32>
    %372 = vector.shape_cast %371 : vector<2x32x64xf32> to vector<64x64xf32>
    %373 = arith.truncf %372 : vector<64x64xf32> to vector<64x64xbf16>
    %c0_172 = arith.constant 0 : index
    %c0_173 = arith.constant 0 : index
    %374 = vector.load %arg28[%c0_172, %c0_173] : memref<64x64xbf16, #tpu.memory_space<vmem>>, vector<64x64xbf16>
    %cst_174 = arith.constant dense<0.000000e+00> : vector<64x64xf32>
    %375 = tpu.matmul %373, %374, %cst_174 {dimension_numbers = #tpu.dot_dimension_numbers<[1], [0], [0], [1], [0, 0, 1, 1], [], []>} : vector<64x64xbf16>, vector<64x64xbf16>, vector<64x64xf32> -> vector<64x64xf32>
    %376 = vector.shape_cast %375 : vector<64x64xf32> to vector<2x32x64xf32>
    %cst_175 = arith.constant dense<0xFF800000> : vector<2x64xf32>
    %377 = vector.multi_reduction <maximumf>, %376, %cst_175 [1] : vector<2x32x64xf32> to vector<2x64xf32>
    %378 = vector.shape_cast %377 : vector<2x64xf32> to vector<2x1x64xf32>
    %379 = vector.broadcast %378 : vector<2x1x64xf32> to vector<2x32x64xf32>
    %380 = arith.subf %376, %379 : vector<2x32x64xf32>
    %381 = math.exp %380 : vector<2x32x64xf32>
    %cst_176 = arith.constant dense<0.000000e+00> : vector<2x64xf32>
    %382 = vector.multi_reduction <add>, %381, %cst_176 [1] : vector<2x32x64xf32> to vector<2x64xf32>
    %383 = vector.shape_cast %382 : vector<2x64xf32> to vector<2x1x64xf32>
    %cst_177 = arith.constant 9.99999968E-21 : f32
    %384 = vector.broadcast %cst_177 : f32 to vector<2x1x64xf32>
    %385 = arith.maximumf %383, %384 : vector<2x1x64xf32>
    %386 = vector.broadcast %385 : vector<2x1x64xf32> to vector<2x32x64xf32>
    %387 = arith.divf %381, %386 : vector<2x32x64xf32>
    %388 = arith.mulf %387, %368 : vector<2x32x64xf32>
    %cst_178 = arith.constant dense<0.000000e+00> : vector<2x64xf32>
    %389 = vector.multi_reduction <add>, %388, %cst_178 [1] : vector<2x32x64xf32> to vector<2x64xf32>
    %390 = arith.truncf %389 : vector<2x64xf32> to vector<2x64xbf16>
    %c0_179 = arith.constant 0 : index
    %c0_180 = arith.constant 0 : index
    %391 = vector.load %arg27[%c0_179, %c0_180] : memref<64x64xbf16, #tpu.memory_space<vmem>>, vector<64x64xbf16>
    %cst_181 = arith.constant dense<0.000000e+00> : vector<2x64xf32>
    %392 = tpu.matmul %390, %391, %cst_181 {dimension_numbers = #tpu.dot_dimension_numbers<[1], [0], [0], [1], [0, 0, 1, 1], [], []>} : vector<2x64xbf16>, vector<64x64xbf16>, vector<2x64xf32> -> vector<2x64xf32>
    %c0_182 = arith.constant 0 : index
    %c0_183 = arith.constant 0 : index
    %393 = vector.load %arg29[%c0_182, %c0_183] : memref<64x128xbf16, #tpu.memory_space<vmem>>, vector<64x128xbf16>
    %cst_184 = arith.constant dense<0.000000e+00> : vector<2x128xf32>
    %394 = tpu.matmul %390, %393, %cst_184 {dimension_numbers = #tpu.dot_dimension_numbers<[1], [0], [0], [1], [0, 0, 1, 1], [], []>} : vector<2x64xbf16>, vector<64x128xbf16>, vector<2x128xf32> -> vector<2x128xf32>
    %c0_185 = arith.constant 0 : index
    %c0_186 = arith.constant 0 : index
    %395 = vector.load %arg30[%c0_185, %c0_186] : memref<1x128xf32, #tpu.memory_space<vmem>>, vector<1x128xf32>
    %396 = vector.broadcast %395 : vector<1x128xf32> to vector<2x128xf32>
    %397 = arith.addf %394, %396 : vector<2x128xf32>
    %cst_187 = arith.constant 0.000000e+00 : f32
    %398 = vector.broadcast %cst_187 : f32 to vector<2x64xf32>
    %399 = tpu.concatenate %392, %398 in 1 : vector<2x64xf32>, vector<2x64xf32> -> vector<2x128xf32>
    %cst_188 = arith.constant 0.000000e+00 : f32
    %400 = vector.broadcast %cst_188 : f32 to vector<2x6x128xf32>
    %401 = vector.shape_cast %397 : vector<2x128xf32> to vector<2x1x128xf32>
    %402 = vector.shape_cast %399 : vector<2x128xf32> to vector<2x1x128xf32>
    %403 = tpu.concatenate %401, %402, %400 in 1 : vector<2x1x128xf32>, vector<2x1x128xf32>, vector<2x6x128xf32> -> vector<2x8x128xf32>
    %c0_189 = arith.constant 0 : index
    %c0_190 = arith.constant 0 : index
    %c0_191 = arith.constant 0 : index
    %404 = vector.load %arg31[%c0_189, %c0_190, %c0_191] : memref<2x8x128xf32, #tpu.memory_space<vmem>>, vector<2x8x128xf32>
    tpu.vector_store %arg31[%c0_189, %c0_190, %c0_191], %403 {strides = array<i32>} : memref<2x8x128xf32, #tpu.memory_space<vmem>>, vector<2x8x128xf32>,
    return
  }
  func.func @transform_0(%arg0: i32) -> (i32, i32, i32) {
    %c0_i32 = arith.constant 0 : i32
    %c0_i32_0 = arith.constant 0 : i32
    %c0_i32_1 = arith.constant 0 : i32
    return %arg0, %c0_i32, %c0_i32_0 : i32, i32, i32
  }
  func.func @transform_1(%arg0: i32) -> (i32, i32) {
    %c0_i32 = arith.constant 0 : i32
    %c0_i32_0 = arith.constant 0 : i32
    %c0_i32_1 = arith.constant 0 : i32
    return %c0_i32, %c0_i32_0 : i32, i32
  }
  func.func @transform_2(%arg0: i32) -> (i32, i32) {
    %c0_i32 = arith.constant 0 : i32
    %c0_i32_0 = arith.constant 0 : i32
    %c0_i32_1 = arith.constant 0 : i32
    return %c0_i32, %c0_i32_0 : i32, i32
  }
  func.func @transform_3(%arg0: i32) -> (i32, i32) {
    %c0_i32 = arith.constant 0 : i32
    %c0_i32_0 = arith.constant 0 : i32
    %c0_i32_1 = arith.constant 0 : i32
    return %c0_i32, %c0_i32_0 : i32, i32
  }
  func.func @transform_4(%arg0: i32) -> (i32, i32) {
    %c0_i32 = arith.constant 0 : i32
    %c0_i32_0 = arith.constant 0 : i32
    %c0_i32_1 = arith.constant 0 : i32
    return %c0_i32, %c0_i32_0 : i32, i32
  }
  func.func @transform_5(%arg0: i32) -> (i32, i32) {
    %c0_i32 = arith.constant 0 : i32
    %c0_i32_0 = arith.constant 0 : i32
    %c0_i32_1 = arith.constant 0 : i32
    return %c0_i32, %c0_i32_0 : i32, i32
  }
  func.func @transform_6(%arg0: i32) -> (i32, i32) {
    %c0_i32 = arith.constant 0 : i32
    %c0_i32_0 = arith.constant 0 : i32
    %c0_i32_1 = arith.constant 0 : i32
    return %c0_i32, %c0_i32_0 : i32, i32
  }
  func.func @transform_7(%arg0: i32) -> (i32, i32) {
    %c0_i32 = arith.constant 0 : i32
    %c0_i32_0 = arith.constant 0 : i32
    %c0_i32_1 = arith.constant 0 : i32
    return %c0_i32, %c0_i32_0 : i32, i32
  }
  func.func @transform_8(%arg0: i32) -> (i32, i32) {
    %c0_i32 = arith.constant 0 : i32
    %c0_i32_0 = arith.constant 0 : i32
    %c0_i32_1 = arith.constant 0 : i32
    return %c0_i32, %c0_i32_0 : i32, i32
  }
  func.func @transform_9(%arg0: i32) -> (i32, i32, i32) {
    %c0_i32 = arith.constant 0 : i32
    %c0_i32_0 = arith.constant 0 : i32
    %c0_i32_1 = arith.constant 0 : i32
    %c0_i32_2 = arith.constant 0 : i32
    return %c0_i32, %c0_i32_0, %c0_i32_1 : i32, i32, i32
  }
  func.func @transform_10(%arg0: i32) -> (i32, i32, i32) {
    %c0_i32 = arith.constant 0 : i32
    %c0_i32_0 = arith.constant 0 : i32
    %c0_i32_1 = arith.constant 0 : i32
    %c0_i32_2 = arith.constant 0 : i32
    return %c0_i32, %c0_i32_0, %c0_i32_1 : i32, i32, i32
  }
  func.func @transform_11(%arg0: i32) -> (i32, i32, i32) {
    %c0_i32 = arith.constant 0 : i32
    %c0_i32_0 = arith.constant 0 : i32
    %c0_i32_1 = arith.constant 0 : i32
    %c0_i32_2 = arith.constant 0 : i32
    return %c0_i32, %c0_i32_0, %c0_i32_1 : i32, i32, i32
  }
  func.func @transform_12(%arg0: i32) -> (i32, i32, i32) {
    %c0_i32 = arith.constant 0 : i32
    %c0_i32_0 = arith.constant 0 : i32
    %c0_i32_1 = arith.constant 0 : i32
    %c0_i32_2 = arith.constant 0 : i32
    return %c0_i32, %c0_i32_0, %c0_i32_1 : i32, i32, i32
  }
  func.func @transform_13(%arg0: i32) -> (i32, i32, i32) {
    %c0_i32 = arith.constant 0 : i32
    %c0_i32_0 = arith.constant 0 : i32
    %c0_i32_1 = arith.constant 0 : i32
    %c0_i32_2 = arith.constant 0 : i32
    return %c0_i32, %c0_i32_0, %c0_i32_1 : i32, i32, i32
  }
  func.func @transform_14(%arg0: i32) -> (i32, i32, i32) {
    %c0_i32 = arith.constant 0 : i32
    %c0_i32_0 = arith.constant 0 : i32
    %c0_i32_1 = arith.constant 0 : i32
    %c0_i32_2 = arith.constant 0 : i32
    return %c0_i32, %c0_i32_0, %c0_i32_1 : i32, i32, i32
  }
  func.func @transform_15(%arg0: i32) -> (i32, i32, i32) {
    %c0_i32 = arith.constant 0 : i32
    %c0_i32_0 = arith.constant 0 : i32
    %c0_i32_1 = arith.constant 0 : i32
    %c0_i32_2 = arith.constant 0 : i32
    return %c0_i32, %c0_i32_0, %c0_i32_1 : i32, i32, i32
  }
  func.func @transform_16(%arg0: i32) -> (i32, i32, i32) {
    %c0_i32 = arith.constant 0 : i32
    %c0_i32_0 = arith.constant 0 : i32
    %c0_i32_1 = arith.constant 0 : i32
    %c0_i32_2 = arith.constant 0 : i32
    return %c0_i32, %c0_i32_0, %c0_i32_1 : i32, i32, i32
  }
  func.func @transform_17(%arg0: i32) -> (i32, i32, i32) {
    %c0_i32 = arith.constant 0 : i32
    %c0_i32_0 = arith.constant 0 : i32
    %c0_i32_1 = arith.constant 0 : i32
    %c0_i32_2 = arith.constant 0 : i32
    return %c0_i32, %c0_i32_0, %c0_i32_1 : i32, i32, i32
  }
  func.func @transform_18(%arg0: i32) -> (i32, i32, i32) {
    %c0_i32 = arith.constant 0 : i32
    %c0_i32_0 = arith.constant 0 : i32
    %c0_i32_1 = arith.constant 0 : i32
    %c0_i32_2 = arith.constant 0 : i32
    return %c0_i32, %c0_i32_0, %c0_i32_1 : i32, i32, i32
  }
  func.func @transform_19(%arg0: i32) -> (i32, i32, i32) {
    %c0_i32 = arith.constant 0 : i32
    %c0_i32_0 = arith.constant 0 : i32
    %c0_i32_1 = arith.constant 0 : i32
    %c0_i32_2 = arith.constant 0 : i32
    return %c0_i32, %c0_i32_0, %c0_i32_1 : i32, i32, i32
  }
  func.func @transform_20(%arg0: i32) -> (i32, i32, i32) {
    %c0_i32 = arith.constant 0 : i32
    %c0_i32_0 = arith.constant 0 : i32
    %c0_i32_1 = arith.constant 0 : i32
    %c0_i32_2 = arith.constant 0 : i32
    return %c0_i32, %c0_i32_0, %c0_i32_1 : i32, i32, i32
  }
  func.func @transform_21(%arg0: i32) -> (i32, i32) {
    %c0_i32 = arith.constant 0 : i32
    %c0_i32_0 = arith.constant 0 : i32
    %c0_i32_1 = arith.constant 0 : i32
    return %c0_i32, %c0_i32_0 : i32, i32
  }
  func.func @transform_22(%arg0: i32) -> (i32, i32) {
    %c0_i32 = arith.constant 0 : i32
    %c0_i32_0 = arith.constant 0 : i32
    %c0_i32_1 = arith.constant 0 : i32
    return %c0_i32, %c0_i32_0 : i32, i32
  }
  func.func @transform_23(%arg0: i32) -> (i32, i32) {
    %c0_i32 = arith.constant 0 : i32
    %c0_i32_0 = arith.constant 0 : i32
    %c0_i32_1 = arith.constant 0 : i32
    return %c0_i32, %c0_i32_0 : i32, i32
  }
  func.func @transform_24(%arg0: i32) -> (i32, i32) {
    %c0_i32 = arith.constant 0 : i32
    %c0_i32_0 = arith.constant 0 : i32
    %c0_i32_1 = arith.constant 0 : i32
    return %c0_i32, %c0_i32_0 : i32, i32
  }
  func.func @transform_25(%arg0: i32) -> (i32, i32) {
    %c0_i32 = arith.constant 0 : i32
    %c0_i32_0 = arith.constant 0 : i32
    %c0_i32_1 = arith.constant 0 : i32
    return %c0_i32, %c0_i32_0 : i32, i32
  }
  func.func @transform_26(%arg0: i32) -> (i32, i32) {
    %c0_i32 = arith.constant 0 : i32
    %c0_i32_0 = arith.constant 0 : i32
    %c0_i32_1 = arith.constant 0 : i32
    return %c0_i32, %c0_i32_0 : i32, i32
  }
  func.func @transform_27(%arg0: i32) -> (i32, i32) {
    %c0_i32 = arith.constant 0 : i32
    %c0_i32_0 = arith.constant 0 : i32
    %c0_i32_1 = arith.constant 0 : i32
    return %c0_i32, %c0_i32_0 : i32, i32
  }
  func.func @transform_28(%arg0: i32) -> (i32, i32) {
    %c0_i32 = arith.constant 0 : i32
    %c0_i32_0 = arith.constant 0 : i32
    %c0_i32_1 = arith.constant 0 : i32
    return %c0_i32, %c0_i32_0 : i32, i32
  }
  func.func @transform_29(%arg0: i32) -> (i32, i32) {
    %c0_i32 = arith.constant 0 : i32
    %c0_i32_0 = arith.constant 0 : i32
    %c0_i32_1 = arith.constant 0 : i32
    return %c0_i32, %c0_i32_0 : i32, i32
  }
  func.func @transform_30(%arg0: i32) -> (i32, i32, i32) {
    %c0_i32 = arith.constant 0 : i32
    %c0_i32_0 = arith.constant 0 : i32
    %c0_i32_1 = arith.constant 0 : i32
    return %arg0, %c0_i32, %c0_i32_0 : i32, i32, i32
  }
}

</mosaic_0001>

<llo_original>
// kernel: tpu_custom_call.1
$region0: #{tpu_custom_call.1}
  #allocation0 [shape = 'u32[]', space=smem, size = 0x4, offset = 0x4, fixed_abs, tag = 'smem constant byte address 0x4 - core index']
  #allocation1 [shape = 'u32[144,128]{1,0:T(1,128)}', space=vmem, size = 0x12000, scoped, tag = 'internal scratch']
  %s0 = inlined_call_operand.smem [shape: u32[31], index: -1, kind: input, shape index: {}]
  %s1 = sld [smem:[%s0]]
  %s2 = scalar_lea.smem %s0, 1
  %s3 = sld [smem:[%s2]]
  %s4 = scalar_lea.smem %s0, 2
  %s5 = sld [smem:[%s4]]
  %s6 = scalar_lea.smem %s0, 3
  %s7 = sld [smem:[%s6]]
  %s8 = scalar_lea.smem %s0, 4
  %s9 = sld [smem:[%s8]]
  %s10 = scalar_lea.smem %s0, 5
  %s11 = sld [smem:[%s10]]
  %s12 = scalar_lea.smem %s0, 6
  %s13 = sld [smem:[%s12]]
  %s14 = scalar_lea.smem %s0, 7
  %s15 = sld [smem:[%s14]]
  %s16 = scalar_lea.smem %s0, 8
  %s17 = sld [smem:[%s16]]
  %s18 = scalar_lea.smem %s0, 9
  %s19 = sld [smem:[%s18]]
  %s20 = scalar_lea.smem %s0, 10
  %s21 = sld [smem:[%s20]]
  %s22 = scalar_lea.smem %s0, 11
  %s23 = sld [smem:[%s22]]
  %s24 = scalar_lea.smem %s0, 12
  %s25 = sld [smem:[%s24]]
  %s26 = scalar_lea.smem %s0, 13
  %s27 = sld [smem:[%s26]]
  %s28 = scalar_lea.smem %s0, 14
  %s29 = sld [smem:[%s28]]
  %s30 = scalar_lea.smem %s0, 15
  %s31 = sld [smem:[%s30]]
  %s32 = scalar_lea.smem %s0, 16
  %s33 = sld [smem:[%s32]]
  %s34 = scalar_lea.smem %s0, 17
  %s35 = sld [smem:[%s34]]
  %s36 = scalar_lea.smem %s0, 18
  %s37 = sld [smem:[%s36]]
  %s38 = scalar_lea.smem %s0, 19
  %s39 = sld [smem:[%s38]]
  %s40 = scalar_lea.smem %s0, 20
  %s41 = sld [smem:[%s40]]
  %s42 = scalar_lea.smem %s0, 21
  %s43 = sld [smem:[%s42]]
  %s44 = scalar_lea.smem %s0, 22
  %s45 = sld [smem:[%s44]]
  %s46 = scalar_lea.smem %s0, 23
  %s47 = sld [smem:[%s46]]
  %s48 = scalar_lea.smem %s0, 24
  %s49 = sld [smem:[%s48]]
  %s50 = scalar_lea.smem %s0, 25
  %s51 = sld [smem:[%s50]]
  %s52 = scalar_lea.smem %s0, 26
  %s53 = sld [smem:[%s52]]
  %s54 = scalar_lea.smem %s0, 27
  %s55 = sld [smem:[%s54]]
  %s56 = scalar_lea.smem %s0, 28
  %s57 = sld [smem:[%s56]]
  %s58 = scalar_lea.smem %s0, 29
  %s59 = sld [smem:[%s58]]
  %s60 = scalar_lea.smem %s0, 30
  %s61 = sld [smem:[%s60]]
  %s62 = sld [smem:[#allocation0]]
  $region186: #{tpu_custom_call.1} parent=0
    _
  %s64 = ssub.s32 1, %s62
  %s65 = scalar_select 0, %s64, %s62
  $region1: #{tpu_custom_call.1} parent=0
    #allocation2 [shape = 'u8[512]{0}', space=vmem, size = 0x400, scoped, tag = 'input window, operand 3, single buffered']
    #allocation3 [shape = 's32[1]{0}', space=sflag, size = 0x4, scoped, tag = 'scoped memory for tpu_custom_call.1']
    #allocation4 [shape = 's32[1]{0}', space=sflag, size = 0x4, scoped, tag = 'scoped memory for tpu_custom_call.1']
    #allocation5 [shape = 'u8[512]{0}', space=vmem, size = 0x400, scoped, tag = 'input window, operand 4, single buffered']
    #allocation6 [shape = 's32[1]{0}', space=sflag, size = 0x4, scoped, tag = 'scoped memory for tpu_custom_call.1']
    #allocation7 [shape = 'u8[8192]{0}', space=vmem, size = 0x2000, scoped, tag = 'input window, operand 5, single buffered']
    #allocation8 [shape = 'u8[512]{0}', space=vmem, size = 0x400, scoped, tag = 'input window, operand 6, single buffered']
    #allocation9 [shape = 's32[1]{0}', space=sflag, size = 0x4, scoped, tag = 'scoped memory for tpu_custom_call.1']
    #allocation10 [shape = 'u8[512]{0}', space=vmem, size = 0x400, scoped, tag = 'input window, operand 7, single buffered']
    #allocation11 [shape = 'u8[512]{0}', space=vmem, size = 0x400, scoped, tag = 'input window, operand 8, single buffered']
    #allocation12 [shape = 's32[1]{0}', space=sflag, size = 0x4, scoped, tag = 'scoped memory for tpu_custom_call.1']
    #allocation13 [shape = 'u8[2048]{0}', space=vmem, size = 0x800, scoped, tag = 'input window, operand 10, single buffered']
    #allocation14 [shape = 'u8[1024]{0}', space=vmem, size = 0x400, scoped, tag = 'input window, operand 12, single buffered']
    #allocation15 [shape = 's32[1]{0}', space=sflag, size = 0x4, scoped, tag = 'scoped memory for tpu_custom_call.1']
    #allocation16 [shape = 'u8[1024]{0}', space=vmem, size = 0x400, scoped, tag = 'input window, operand 13, single buffered']
    #allocation17 [shape = 'u8[1024]{0}', space=vmem, size = 0x400, scoped, tag = 'input window, operand 14, single buffered']
    #allocation18 [shape = 's32[1]{0}', space=sflag, size = 0x4, scoped, tag = 'scoped memory for tpu_custom_call.1']
    #allocation19 [shape = 'u8[2048]{0}', space=vmem, size = 0x800, scoped, tag = 'input window, operand 16, single buffered']
    #allocation20 [shape = 'u8[1024]{0}', space=vmem, size = 0x400, scoped, tag = 'input window, operand 19, single buffered']
    #allocation21 [shape = 's32[1]{0}', space=sflag, size = 0x4, scoped, tag = 'scoped memory for tpu_custom_call.1']
    #allocation22 [shape = 'u8[1024]{0}', space=vmem, size = 0x400, scoped, tag = 'input window, operand 20, single buffered']
    #allocation23 [shape = 'u8[16384]{0}', space=vmem, size = 0x4000, scoped, tag = 'input window, operand 28, single buffered']
    #allocation24 [shape = 's32[1]{0}', space=sflag, size = 0x4, scoped, tag = 'scoped memory for tpu_custom_call.1']
    #allocation25 [shape = 'u8[8192]{0}', space=vmem, size = 0x2000, scoped, tag = 'output window, operand 0, single buffered']
    %66 = vsyncpa [#allocation3], 0
    %67 = vsyncpa [#allocation6], 0
    %68 = vsyncpa [#allocation9], 0
    %69 = vsyncpa [#allocation12], 0
    %70 = vsyncpa [#allocation15], 0
    %71 = vsyncpa [#allocation18], 0
    %72 = vsyncpa [#allocation21], 0
    %73 = vsyncpa [#allocation24], 0
    %74 = vsyncpa [#allocation4], 0
    // Predicated region
    $region2: #{tpu_custom_call.1} parent=1 // pred_check
      _
    $region3: #{tpu_custom_call.1} parent=1 // pred_check_branch
      %76 = sbr.rel (0) target = $region5
    $region4: #{tpu_custom_call.1} parent=1 // pred_region
      _
    $region5: #{tpu_custom_call.1} parent=1 // pred_fallthru
      _
    // Predicated region
    $region6: #{tpu_custom_call.1} parent=1 // pred_check
      _
    $region7: #{tpu_custom_call.1} parent=1 // pred_check_branch
      %78 = sbr.rel (0) target = $region9
    $region8: #{tpu_custom_call.1} parent=1 // pred_region
      _
    $region9: #{tpu_custom_call.1} parent=1 // pred_fallthru
      _
    // Predicated region
    $region10: #{tpu_custom_call.1} parent=1 // pred_check
      _
    $region11: #{tpu_custom_call.1} parent=1 // pred_check_branch
      %80 = sbr.rel (0) target = $region13
    $region12: #{tpu_custom_call.1} parent=1 // pred_region
      _
    $region13: #{tpu_custom_call.1} parent=1 // pred_fallthru
      _
    // Predicated region
    $region14: #{tpu_custom_call.1} parent=1 // pred_check
      _
    $region15: #{tpu_custom_call.1} parent=1 // pred_check_branch
      %82 = sbr.rel (0) target = $region17
    $region16: #{tpu_custom_call.1} parent=1 // pred_region
      %s84 = ssub.s32 16, 16
      %85 = vsyncadd [#allocation3], %s84
      %s87 = sshll.u32 [#allocation2], 4
      %s88 = int_to_ptr.vmem [resolvable:$true] %s87
      %90 = dma.hbm_to_vmem [thread:$0]  %s7, 16, %s88, [#allocation3]
    $region17: #{tpu_custom_call.1} parent=1 // pred_fallthru
      _
    // Predicated region
    $region18: #{tpu_custom_call.1} parent=1 // pred_check
      _
    $region19: #{tpu_custom_call.1} parent=1 // pred_check_branch
      %92 = sbr.rel (0) target = $region21
    $region20: #{tpu_custom_call.1} parent=1 // pred_region
      %s94 = ssub.s32 16, 16
      %95 = vsyncadd [#allocation6], %s94
      %s97 = sshll.u32 [#allocation5], 4
      %s98 = int_to_ptr.vmem [resolvable:$true] %s97
      %100 = dma.hbm_to_vmem [thread:$0]  %s9, 16, %s98, [#allocation6]
    $region21: #{tpu_custom_call.1} parent=1 // pred_fallthru
      _
    // Predicated region
    $region22: #{tpu_custom_call.1} parent=1 // pred_check
      _
    $region23: #{tpu_custom_call.1} parent=1 // pred_check_branch
      %102 = sbr.rel (0) target = $region25
    $region24: #{tpu_custom_call.1} parent=1 // pred_region
      %s104 = ssub.s32 256, 256
      %105 = vsyncadd [#allocation6], %s104
      %s106 = sshll.u32 [#allocation7], 4
      %s107 = int_to_ptr.vmem [resolvable:$true] %s106
      %112 = dma.hbm_to_vmem [thread:$0]  %s11, 256, %s107, [#allocation6], 64, 64, 4
    $region25: #{tpu_custom_call.1} parent=1 // pred_fallthru
      _
    // Predicated region
    $region26: #{tpu_custom_call.1} parent=1 // pred_check
      _
    $region27: #{tpu_custom_call.1} parent=1 // pred_check_branch
      %114 = sbr.rel (0) target = $region29
    $region28: #{tpu_custom_call.1} parent=1 // pred_region
      %s116 = ssub.s32 16, 16
      %117 = vsyncadd [#allocation9], %s116
      %s119 = sshll.u32 [#allocation8], 4
      %s120 = int_to_ptr.vmem [resolvable:$true] %s119
      %122 = dma.hbm_to_vmem [thread:$0]  %s13, 16, %s120, [#allocation9]
    $region29: #{tpu_custom_call.1} parent=1 // pred_fallthru
      _
    // Predicated region
    $region30: #{tpu_custom_call.1} parent=1 // pred_check
      _
    $region31: #{tpu_custom_call.1} parent=1 // pred_check_branch
      %124 = sbr.rel (0) target = $region33
    $region32: #{tpu_custom_call.1} parent=1 // pred_region
      %s126 = ssub.s32 16, 16
      %127 = vsyncadd [#allocation9], %s126
      %s129 = sshll.u32 [#allocation10], 4
      %s130 = int_to_ptr.vmem [resolvable:$true] %s129
      %132 = dma.hbm_to_vmem [thread:$0]  %s15, 16, %s130, [#allocation9]
    $region33: #{tpu_custom_call.1} parent=1 // pred_fallthru
      _
    // Predicated region
    $region34: #{tpu_custom_call.1} parent=1 // pred_check
      _
    $region35: #{tpu_custom_call.1} parent=1 // pred_check_branch
      %134 = sbr.rel (0) target = $region37
    $region36: #{tpu_custom_call.1} parent=1 // pred_region
      %s136 = ssub.s32 16, 16
      %137 = vsyncadd [#allocation12], %s136
      %s139 = sshll.u32 [#allocation11], 4
      %s140 = int_to_ptr.vmem [resolvable:$true] %s139
      %142 = dma.hbm_to_vmem [thread:$0]  %s17, 16, %s140, [#allocation12]
    $region37: #{tpu_custom_call.1} parent=1 // pred_fallthru
      _
    // Predicated region
    $region38: #{tpu_custom_call.1} parent=1 // pred_check
      _
    $region39: #{tpu_custom_call.1} parent=1 // pred_check_branch
      %144 = sbr.rel (0) target = $region41
    $region40: #{tpu_custom_call.1} parent=1 // pred_region
      _
    $region41: #{tpu_custom_call.1} parent=1 // pred_fallthru
      _
    // Predicated region
    $region42: #{tpu_custom_call.1} parent=1 // pred_check
      _
    $region43: #{tpu_custom_call.1} parent=1 // pred_check_branch
      %146 = sbr.rel (0) target = $region45
    $region44: #{tpu_custom_call.1} parent=1 // pred_region
      %s148 = ssub.s32 64, 64
      %149 = vsyncadd [#allocation12], %s148
      %s150 = sshll.u32 [#allocation13], 4
      %s151 = int_to_ptr.vmem [resolvable:$true] %s150
      %156 = dma.hbm_to_vmem [thread:$0]  %s21, 64, %s151, [#allocation12], 32, 32, 2
    $region45: #{tpu_custom_call.1} parent=1 // pred_fallthru
      _
    // Predicated region
    $region46: #{tpu_custom_call.1} parent=1 // pred_check
      _
    $region47: #{tpu_custom_call.1} parent=1 // pred_check_branch
      %158 = sbr.rel (0) target = $region49
    $region48: #{tpu_custom_call.1} parent=1 // pred_region
      _
    $region49: #{tpu_custom_call.1} parent=1 // pred_fallthru
      _
    // Predicated region
    $region50: #{tpu_custom_call.1} parent=1 // pred_check
      _
    $region51: #{tpu_custom_call.1} parent=1 // pred_check_branch
      %160 = sbr.rel (0) target = $region53
    $region52: #{tpu_custom_call.1} parent=1 // pred_region
      %s162 = ssub.s32 32, 32
      %163 = vsyncadd [#allocation15], %s162
      %s164 = sshll.u32 [#allocation14], 4
      %s165 = int_to_ptr.vmem [resolvable:$true] %s164
      %170 = dma.hbm_to_vmem [thread:$0]  %s25, 32, %s165, [#allocation15], 16, 16, 1
    $region53: #{tpu_custom_call.1} parent=1 // pred_fallthru
      _
    // Predicated region
    $region54: #{tpu_custom_call.1} parent=1 // pred_check
      _
    $region55: #{tpu_custom_call.1} parent=1 // pred_check_branch
      %172 = sbr.rel (0) target = $region57
    $region56: #{tpu_custom_call.1} parent=1 // pred_region
      %s174 = ssub.s32 32, 32
      %175 = vsyncadd [#allocation15], %s174
      %s176 = sshll.u32 [#allocation16], 4
      %s177 = int_to_ptr.vmem [resolvable:$true] %s176
      %182 = dma.hbm_to_vmem [thread:$0]  %s27, 32, %s177, [#allocation15], 16, 16, 1
    $region57: #{tpu_custom_call.1} parent=1 // pred_fallthru
      _
    // Predicated region
    $region58: #{tpu_custom_call.1} parent=1 // pred_check
      _
    $region59: #{tpu_custom_call.1} parent=1 // pred_check_branch
      %184 = sbr.rel (0) target = $region61
    $region60: #{tpu_custom_call.1} parent=1 // pred_region
      %s186 = ssub.s32 32, 32
      %187 = vsyncadd [#allocation18], %s186
      %s188 = sshll.u32 [#allocation17], 4
      %s189 = int_to_ptr.vmem [resolvable:$true] %s188
      %194 = dma.hbm_to_vmem [thread:$0]  %s29, 32, %s189, [#allocation18], 16, 16, 1
    $region61: #{tpu_custom_call.1} parent=1 // pred_fallthru
      _
    // Predicated region
    $region62: #{tpu_custom_call.1} parent=1 // pred_check
      _
    $region63: #{tpu_custom_call.1} parent=1 // pred_check_branch
      %196 = sbr.rel (0) target = $region65
    $region64: #{tpu_custom_call.1} parent=1 // pred_region
      _
    $region65: #{tpu_custom_call.1} parent=1 // pred_fallthru
      _
    // Predicated region
    $region66: #{tpu_custom_call.1} parent=1 // pred_check
      _
    $region67: #{tpu_custom_call.1} parent=1 // pred_check_branch
      %198 = sbr.rel (0) target = $region69
    $region68: #{tpu_custom_call.1} parent=1 // pred_region
      %s200 = ssub.s32 64, 64
      %201 = vsyncadd [#allocation18], %s200
      %s202 = sshll.u32 [#allocation19], 4
      %s203 = int_to_ptr.vmem [resolvable:$true] %s202
      %208 = dma.hbm_to_vmem [thread:$0]  %s33, 64, %s203, [#allocation18], 32, 32, 2
    $region69: #{tpu_custom_call.1} parent=1 // pred_fallthru
      _
    // Predicated region
    $region70: #{tpu_custom_call.1} parent=1 // pred_check
      _
    $region71: #{tpu_custom_call.1} parent=1 // pred_check_branch
      %210 = sbr.rel (0) target = $region73
    $region72: #{tpu_custom_call.1} parent=1 // pred_region
      _
    $region73: #{tpu_custom_call.1} parent=1 // pred_fallthru
      _
    // Predicated region
    $region74: #{tpu_custom_call.1} parent=1 // pred_check
      _
    $region75: #{tpu_custom_call.1} parent=1 // pred_check_branch
      %212 = sbr.rel (0) target = $region77
    $region76: #{tpu_custom_call.1} parent=1 // pred_region
      _
    $region77: #{tpu_custom_call.1} parent=1 // pred_fallthru
      _
    // Predicated region
    $region78: #{tpu_custom_call.1} parent=1 // pred_check
      _
    $region79: #{tpu_custom_call.1} parent=1 // pred_check_branch
      %214 = sbr.rel (0) target = $region81
    $region80: #{tpu_custom_call.1} parent=1 // pred_region
      %s216 = ssub.s32 32, 32
      %217 = vsyncadd [#allocation21], %s216
      %s218 = sshll.u32 [#allocation20], 4
      %s219 = int_to_ptr.vmem [resolvable:$true] %s218
      %224 = dma.hbm_to_vmem [thread:$0]  %s39, 32, %s219, [#allocation21], 16, 16, 1
    $region81: #{tpu_custom_call.1} parent=1 // pred_fallthru
      _
    // Predicated region
    $region82: #{tpu_custom_call.1} parent=1 // pred_check
      _
    $region83: #{tpu_custom_call.1} parent=1 // pred_check_branch
      %226 = sbr.rel (0) target = $region85
    $region84: #{tpu_custom_call.1} parent=1 // pred_region
      %s228 = ssub.s32 32, 32
      %229 = vsyncadd [#allocation21], %s228
      %s230 = sshll.u32 [#allocation22], 4
      %s231 = int_to_ptr.vmem [resolvable:$true] %s230
      %236 = dma.hbm_to_vmem [thread:$0]  %s41, 32, %s231, [#allocation21], 16, 16, 1
    $region85: #{tpu_custom_call.1} parent=1 // pred_fallthru
      _
    // Predicated region
    $region86: #{tpu_custom_call.1} parent=1 // pred_check
      _
    $region87: #{tpu_custom_call.1} parent=1 // pred_check_branch
      %238 = sbr.rel (0) target = $region89
    $region88: #{tpu_custom_call.1} parent=1 // pred_region
      _
    $region89: #{tpu_custom_call.1} parent=1 // pred_fallthru
      _
    // Predicated region
    $region90: #{tpu_custom_call.1} parent=1 // pred_check
      _
    $region91: #{tpu_custom_call.1} parent=1 // pred_check_branch
      %240 = sbr.rel (0) target = $region93
    $region92: #{tpu_custom_call.1} parent=1 // pred_region
      _
    $region93: #{tpu_custom_call.1} parent=1 // pred_fallthru
      _
    // Predicated region
    $region94: #{tpu_custom_call.1} parent=1 // pred_check
      _
    $region95: #{tpu_custom_call.1} parent=1 // pred_check_branch
      %242 = sbr.rel (0) target = $region97
    $region96: #{tpu_custom_call.1} parent=1 // pred_region
      _
    $region97: #{tpu_custom_call.1} parent=1 // pred_fallthru
      _
    // Predicated region
    $region98: #{tpu_custom_call.1} parent=1 // pred_check
      _
    $region99: #{tpu_custom_call.1} parent=1 // pred_check_branch
      %244 = sbr.rel (0) target = $region101
    $region100: #{tpu_custom_call.1} parent=1 // pred_region
      _
    $region101: #{tpu_custom_call.1} parent=1 // pred_fallthru
      _
    // Predicated region
    $region102: #{tpu_custom_call.1} parent=1 // pred_check
      _
    $region103: #{tpu_custom_call.1} parent=1 // pred_check_branch
      %246 = sbr.rel (0) target = $region105
    $region104: #{tpu_custom_call.1} parent=1 // pred_region
      _
    $region105: #{tpu_custom_call.1} parent=1 // pred_fallthru
      _
    // Predicated region
    $region106: #{tpu_custom_call.1} parent=1 // pred_check
      _
    $region107: #{tpu_custom_call.1} parent=1 // pred_check_branch
      %248 = sbr.rel (0) target = $region109
    $region108: #{tpu_custom_call.1} parent=1 // pred_region
      _
    $region109: #{tpu_custom_call.1} parent=1 // pred_fallthru
      _
    // Predicated region
    $region110: #{tpu_custom_call.1} parent=1 // pred_check
      _
    $region111: #{tpu_custom_call.1} parent=1 // pred_check_branch
      %250 = sbr.rel (0) target = $region113
    $region112: #{tpu_custom_call.1} parent=1 // pred_region
      _
    $region113: #{tpu_custom_call.1} parent=1 // pred_fallthru
      _
    // Predicated region
    $region114: #{tpu_custom_call.1} parent=1 // pred_check
      _
    $region115: #{tpu_custom_call.1} parent=1 // pred_check_branch
      %252 = sbr.rel (0) target = $region117
    $region116: #{tpu_custom_call.1} parent=1 // pred_region
      %s254 = ssub.s32 512, 512
      %255 = vsyncadd [#allocation24], %s254
      %s256 = sshll.u32 [#allocation23], 4
      %s257 = int_to_ptr.vmem [resolvable:$true] %s256
      %262 = dma.hbm_to_vmem [thread:$0]  %s57, 512, %s257, [#allocation24], 64, 64, 4
    $region117: #{tpu_custom_call.1} parent=1 // pred_fallthru
      _
    // Predicated region
    $region118: #{tpu_custom_call.1} parent=1 // pred_check
      _
    $region119: #{tpu_custom_call.1} parent=1 // pred_check_branch
      %264 = sbr.rel (0) target = $region121
    $region120: #{tpu_custom_call.1} parent=1 // pred_region
      _
    $region121: #{tpu_custom_call.1} parent=1 // pred_fallthru
      _
    // Predicated region
    $region122: #{tpu_custom_call.1} parent=1 // pred_check
      _
    $region123: #{tpu_custom_call.1} parent=1 // pred_check_branch
      %266 = sbr.rel (0) target = $region125
    $region124: #{tpu_custom_call.1} parent=1 // pred_region
      %267 = dma.done [#allocation3], 16
    $region125: #{tpu_custom_call.1} parent=1 // pred_fallthru
      _
    // Predicated region
    $region126: #{tpu_custom_call.1} parent=1 // pred_check
      _
    $region127: #{tpu_custom_call.1} parent=1 // pred_check_branch
      %269 = sbr.rel (0) target = $region129
    $region128: #{tpu_custom_call.1} parent=1 // pred_region
      %270 = dma.done [#allocation6], 16
    $region129: #{tpu_custom_call.1} parent=1 // pred_fallthru
      _
    // Predicated region
    $region130: #{tpu_custom_call.1} parent=1 // pred_check
      _
    $region131: #{tpu_custom_call.1} parent=1 // pred_check_branch
      %272 = sbr.rel (0) target = $region133
    $region132: #{tpu_custom_call.1} parent=1 // pred_region
      %273 = dma.done [#allocation6], 256
    $region133: #{tpu_custom_call.1} parent=1 // pred_fallthru
      _
    // Predicated region
    $region134: #{tpu_custom_call.1} parent=1 // pred_check
      _
    $region135: #{tpu_custom_call.1} parent=1 // pred_check_branch
      %275 = sbr.rel (0) target = $region137
    $region136: #{tpu_custom_call.1} parent=1 // pred_region
      %276 = dma.done [#allocation9], 16
    $region137: #{tpu_custom_call.1} parent=1 // pred_fallthru
      _
    // Predicated region
    $region138: #{tpu_custom_call.1} parent=1 // pred_check
      _
    $region139: #{tpu_custom_call.1} parent=1 // pred_check_branch
      %278 = sbr.rel (0) target = $region141
    $region140: #{tpu_custom_call.1} parent=1 // pred_region
      %279 = dma.done [#allocation9], 16
    $region141: #{tpu_custom_call.1} parent=1 // pred_fallthru
      _
    // Predicated region
    $region142: #{tpu_custom_call.1} parent=1 // pred_check
      _
    $region143: #{tpu_custom_call.1} parent=1 // pred_check_branch
      %281 = sbr.rel (0) target = $region145
    $region144: #{tpu_custom_call.1} parent=1 // pred_region
      %282 = dma.done [#allocation12], 16
    $region145: #{tpu_custom_call.1} parent=1 // pred_fallthru
      _
    // Predicated region
    $region146: #{tpu_custom_call.1} parent=1 // pred_check
      _
    $region147: #{tpu_custom_call.1} parent=1 // pred_check_branch
      %284 = sbr.rel (0) target = $region149
    $region148: #{tpu_custom_call.1} parent=1 // pred_region
      %285 = dma.done [#allocation12], 64
    $region149: #{tpu_custom_call.1} parent=1 // pred_fallthru
      _
    // Predicated region
    $region150: #{tpu_custom_call.1} parent=1 // pred_check
      _
    $region151: #{tpu_custom_call.1} parent=1 // pred_check_branch
      %287 = sbr.rel (0) target = $region153
    $region152: #{tpu_custom_call.1} parent=1 // pred_region
      %288 = dma.done [#allocation15], 32
    $region153: #{tpu_custom_call.1} parent=1 // pred_fallthru
      _
    // Predicated region
    $region154: #{tpu_custom_call.1} parent=1 // pred_check
      _
    $region155: #{tpu_custom_call.1} parent=1 // pred_check_branch
      %290 = sbr.rel (0) target = $region157
    $region156: #{tpu_custom_call.1} parent=1 // pred_region
      %291 = dma.done [#allocation15], 32
    $region157: #{tpu_custom_call.1} parent=1 // pred_fallthru
      _
    // Predicated region
    $region158: #{tpu_custom_call.1} parent=1 // pred_check
      _
    $region159: #{tpu_custom_call.1} parent=1 // pred_check_branch
      %293 = sbr.rel (0) target = $region161
    $region160: #{tpu_custom_call.1} parent=1 // pred_region
      %294 = dma.done [#allocation18], 32
    $region161: #{tpu_custom_call.1} parent=1 // pred_fallthru
      _
    // Predicated region
    $region162: #{tpu_custom_call.1} parent=1 // pred_check
      _
    $region163: #{tpu_custom_call.1} parent=1 // pred_check_branch
      %296 = sbr.rel (0) target = $region165
    $region164: #{tpu_custom_call.1} parent=1 // pred_region
      %297 = dma.done [#allocation18], 64
    $region165: #{tpu_custom_call.1} parent=1 // pred_fallthru
      _
    // Predicated region
    $region166: #{tpu_custom_call.1} parent=1 // pred_check
      _
    $region167: #{tpu_custom_call.1} parent=1 // pred_check_branch
      %299 = sbr.rel (0) target = $region169
    $region168: #{tpu_custom_call.1} parent=1 // pred_region
      %300 = dma.done [#allocation21], 32
    $region169: #{tpu_custom_call.1} parent=1 // pred_fallthru
      _
    // Predicated region
    $region170: #{tpu_custom_call.1} parent=1 // pred_check
      _
    $region171: #{tpu_custom_call.1} parent=1 // pred_check_branch
      %302 = sbr.rel (0) target = $region173
    $region172: #{tpu_custom_call.1} parent=1 // pred_region
      %303 = dma.done [#allocation21], 32
    $region173: #{tpu_custom_call.1} parent=1 // pred_fallthru
      _
    // Predicated region
    $region174: #{tpu_custom_call.1} parent=1 // pred_check
      _
    $region175: #{tpu_custom_call.1} parent=1 // pred_check_branch
      %305 = sbr.rel (0) target = $region177
    $region176: #{tpu_custom_call.1} parent=1 // pred_region
      %306 = dma.done [#allocation24], 512
    $region177: #{tpu_custom_call.1} parent=1 // pred_fallthru
      _
    %v308 = vld [vmem:[%s43] sm:$0xff]
    %v309 = vld [vmem:[%s43 + $0x8] sm:$0xff]
    %v310 = vld [vmem:[%s43 + $0x10] sm:$0xff]
    %v311 = vld [vmem:[%s43 + $0x18] sm:$0xff]
    %v312 = vld [vmem:[%s43 + $0x20] sm:$0xff]
    %v313 = vld [vmem:[%s43 + $0x28] sm:$0xff]
    %v314 = vld [vmem:[%s43 + $0x30] sm:$0xff]
    %v315 = vld [vmem:[%s43 + $0x38] sm:$0xff]
    %v316 = vld [vmem:[%s45] sm:$0xf]
    %v317 = vld [vmem:[%s45 + $0x4] sm:$0xf]
    %v318 = vld [vmem:[%s45 + $0x8] sm:$0xf]
    %v319 = vld [vmem:[%s45 + $0xc] sm:$0xf]
    %v320 = vld [vmem:[%s45 + $0x10] sm:$0xf]
    %v321 = vld [vmem:[%s45 + $0x14] sm:$0xf]
    %v322 = vld [vmem:[%s45 + $0x18] sm:$0xf]
    %v323 = vld [vmem:[%s45 + $0x1c] sm:$0xf]
    %v324 = vld [vmem:[%s45 + $0x20] sm:$0xf]
    %v325 = vld [vmem:[%s45 + $0x24] sm:$0xf]
    %v326 = vld [vmem:[%s45 + $0x28] sm:$0xf]
    %v327 = vld [vmem:[%s45 + $0x2c] sm:$0xf]
    %v328 = vld [vmem:[%s45 + $0x30] sm:$0xf]
    %v329 = vld [vmem:[%s45 + $0x34] sm:$0xf]
    %v330 = vld [vmem:[%s45 + $0x38] sm:$0xf]
    %v331 = vld [vmem:[%s45 + $0x3c] sm:$0xf]
    %v332 = vld [vmem:[%s45 + $0x40] sm:$0xf]
    %v333 = vld [vmem:[%s45 + $0x44] sm:$0xf]
    %v334 = vld [vmem:[%s45 + $0x48] sm:$0xf]
    %v335 = vld [vmem:[%s45 + $0x4c] sm:$0xf]
    %v336 = vld [vmem:[%s45 + $0x50] sm:$0xf]
    %v337 = vld [vmem:[%s45 + $0x54] sm:$0xf]
    %v338 = vld [vmem:[%s45 + $0x58] sm:$0xf]
    %v339 = vld [vmem:[%s45 + $0x5c] sm:$0xf]
    %v340 = vld [vmem:[%s45 + $0x60] sm:$0xf]
    %v341 = vld [vmem:[%s45 + $0x64] sm:$0xf]
    %v342 = vld [vmem:[%s45 + $0x68] sm:$0xf]
    %v343 = vld [vmem:[%s45 + $0x6c] sm:$0xf]
    %v344 = vld [vmem:[%s45 + $0x70] sm:$0xf]
    %v345 = vld [vmem:[%s45 + $0x74] sm:$0xf]
    %v346 = vld [vmem:[%s45 + $0x78] sm:$0xf]
    %v347 = vld [vmem:[%s45 + $0x7c] sm:$0xf]
    %v348 = vld [vmem:[%s47] sm:$0xff]
    %v349 = vld [vmem:[%s47 + $0x8] sm:$0xff]
    %v350 = vld [vmem:[%s47 + $0x10] sm:$0xff]
    %v351 = vld [vmem:[%s47 + $0x18] sm:$0xff]
    %v352 = vld [vmem:[%s47 + $0x20] sm:$0xff]
    %v353 = vld [vmem:[%s47 + $0x28] sm:$0xff]
    %v354 = vld [vmem:[%s47 + $0x30] sm:$0xff]
    %v355 = vld [vmem:[%s47 + $0x38] sm:$0xff]
    %v356 = vld [vmem:[%s47 + $0x40] sm:$0xff]
    %v357 = vld [vmem:[%s47 + $0x48] sm:$0xff]
    %v358 = vld [vmem:[%s47 + $0x50] sm:$0xff]
    %v359 = vld [vmem:[%s47 + $0x58] sm:$0xff]
    %v360 = vld [vmem:[%s47 + $0x60] sm:$0xff]
    %v361 = vld [vmem:[%s47 + $0x68] sm:$0xff]
    %v362 = vld [vmem:[%s47 + $0x70] sm:$0xff]
    %v363 = vld [vmem:[%s47 + $0x78] sm:$0xff]
    %v364 = vld [vmem:[%s1] sm:$0xf]
    %v365 = vld [vmem:[%s1 + $0x4] sm:$0xf]
    %v366 = vld [vmem:[%s1 + $0x8] sm:$0xf]
    %v367 = vld [vmem:[%s1 + $0xc] sm:$0xf]
    %v368 = vld [vmem:[%s1 + $0x10] sm:$0xf]
    %v369 = vld [vmem:[%s1 + $0x14] sm:$0xf]
    %v370 = vld [vmem:[%s1 + $0x18] sm:$0xf]
    %v371 = vld [vmem:[%s1 + $0x1c] sm:$0xf]
    %v372 = vld [vmem:[%s1 + $0x20] sm:$0xf]
    %v373 = vld [vmem:[%s1 + $0x24] sm:$0xf]
    %v374 = vld [vmem:[%s3] sm:$0xf]
    %v375 = vld [vmem:[%s3 + $0x4] sm:$0xf]
    %v376 = vld [vmem:[%s3 + $0x8] sm:$0xf]
    %v377 = vld [vmem:[%s3 + $0xc] sm:$0xf]
    %v378 = vld [vmem:[%s3 + $0x10] sm:$0xf]
    %v379 = vld [vmem:[%s3 + $0x14] sm:$0xf]
    %v380 = vld [vmem:[%s3 + $0x18] sm:$0xf]
    %v381 = vld [vmem:[%s3 + $0x1c] sm:$0xf]
    %v392 = vunpack.c.l.b16 %v364
    %v393 = vunpack.c.l.b16 %v365
    %v394 = vunpack.c.l.b16 %v366
    %v395 = vunpack.c.l.b16 %v367
    %v396 = vunpack.c.l.b16 %v368
    %v397 = vunpack.c.l.b16 %v369
    %v398 = vunpack.c.l.b16 %v370
    %v399 = vunpack.c.l.b16 %v371
    %v400 = vunpack.c.l.b16 %v372
    %v401 = vunpack.c.l.b16 %v373
    %v402 = vpack.c.b16 %v393, %v392
    %v403 = vpack.c.b16 %v395, %v394
    %v404 = vpack.c.b16 %v397, %v396
    %v405 = vpack.c.b16 %v399, %v398
    %v406 = vpack.c.b16 %v401, %v400
    %v415 = vunpack.c.l.b16 %v374
    %v416 = vunpack.c.l.b16 %v375
    %v417 = vunpack.c.l.b16 %v376
    %v418 = vunpack.c.l.b16 %v377
    %v419 = vunpack.c.l.b16 %v378
    %v420 = vunpack.c.l.b16 %v379
    %v421 = vunpack.c.l.b16 %v380
    %v422 = vunpack.c.l.b16 %v381
    %v423 = vpack.c.b16 %v416, %v415
    %v424 = vpack.c.b16 %v418, %v417
    %v425 = vpack.c.b16 %v420, %v419
    %v426 = vpack.c.b16 %v422, %v421
    %vm431 = vcmask 523264
    %v433 = vsel %vm431, %v402, 0
    %v436 = vsel %vm431, %v403, 0
    %v439 = vsel %vm431, %v404, 0
    %v442 = vsel %vm431, %v405, 0
    %v445 = vsel %vm431, %v406, 0
    %447 = vmatprep.subr.bf16.mxu0 0
    %448 = vmatpush1.bf16.msra.mxu0 %v423
    %449 = vmatprep.subr.bf16.mxu0 0
    %450 = vmatpush1.bf16.msra.mxu0 %v424
    %451 = vmatprep.subr.bf16.mxu0 0
    %452 = vmatpush1.bf16.msra.mxu0 %v425
    %453 = vmatprep.subr.bf16.mxu0 0
    %454 = vmatpush1.bf16.msra.mxu0 %v426
    %455 = vmatprep.subr.bf16.mxu0 0
    %456 = vmatpush1.bf16.msra.mxu0 0
    %457 = vmatprep.subr.bf16.mxu0 0
    %458 = vmatpush1.bf16.msra.mxu0 0
    %459 = vmatprep.subr.bf16.mxu0 0
    %460 = vmatpush1.bf16.msra.mxu0 0
    %461 = vmatprep.subr.bf16.mxu0 0
    %462 = vmatpush1.bf16.msra.mxu0 0
    %463 = vmatprep.subr.bf16.mxu0 0
    %464 = vmatpush1.bf16.msra.mxu0 0
    %465 = vmatprep.subr.bf16.mxu0 0
    %466 = vmatpush1.bf16.msra.mxu0 0
    %467 = vmatprep.subr.bf16.mxu0 0
    %468 = vmatpush1.bf16.msra.mxu0 0
    %469 = vmatprep.subr.bf16.mxu0 0
    %470 = vmatpush1.bf16.msra.mxu0 0
    %471 = vmatprep.subr.bf16.mxu0 0
    %472 = vmatpush1.bf16.msra.mxu0 0
    %473 = vmatprep.subr.bf16.mxu0 0
    %474 = vmatpush1.bf16.msra.mxu0 0
    %475 = vmatprep.subr.bf16.mxu0 0
    %476 = vmatpush1.bf16.msra.mxu0 0
    %477 = vmatprep.subr.bf16.mxu0 0
    %478 = vmatpush1.bf16.msra.mxu0 0
    %479 = vmatprep.mubr.bf16.mxu0 0
    %480 = vmatmul.mubr.bf16.gmra.mrb[0].mxu0 %v433
    %v481 = vpop.f32.mrb[0].mxu0
    %v482 = vadd.f32 0.0, %v481
    %v483 = vpop.f32.mrb[0].mxu0
    %v484 = vpop.f32.mrb[0].mxu0
    %v485 = vadd.f32 0.0, %v484
    %v486 = vpop.f32.mrb[0].mxu0
    %487 = vmatprep.mubr.bf16.mxu0 0
    %488 = vmatmul.mubr.bf16.gmra.mrb[0].mxu0 %v436
    %v489 = vpop.f32.mrb[0].mxu0
    %v490 = vadd.f32 0.0, %v489
    %v491 = vpop.f32.mrb[0].mxu0
    %v492 = vpop.f32.mrb[0].mxu0
    %v493 = vadd.f32 0.0, %v492
    %v494 = vpop.f32.mrb[0].mxu0
    %495 = vmatprep.mubr.bf16.mxu0 0
    %496 = vmatmul.mubr.bf16.gmra.mrb[0].mxu0 %v439
    %v497 = vpop.f32.mrb[0].mxu0
    %v498 = vadd.f32 0.0, %v497
    %v499 = vpop.f32.mrb[0].mxu0
    %v500 = vpop.f32.mrb[0].mxu0
    %v501 = vadd.f32 0.0, %v500
    %v502 = vpop.f32.mrb[0].mxu0
    %503 = vmatprep.mubr.bf16.mxu0 0
    %504 = vmatmul.mubr.bf16.gmra.mrb[0].mxu0 %v442
    %v505 = vpop.f32.mrb[0].mxu0
    %v506 = vadd.f32 0.0, %v505
    %v507 = vpop.f32.mrb[0].mxu0
    %v508 = vpop.f32.mrb[0].mxu0
    %v509 = vadd.f32 0.0, %v508
    %v510 = vpop.f32.mrb[0].mxu0
    %511 = vmatprep.mubr.bf16.mxu0 0
    %512 = vmatmul.mubr.bf16.gmra.mrb[0].mxu0 %v445
    %v513 = vpop.f32.mrb[0].mxu0
    %v514 = vadd.f32 0.0, %v513
    %v515 = vpop.f32.mrb[0].mxu0
    %v516 = vpop.f32.mrb[0].mxu0
    %v517 = vadd.f32 0.0, %v516
    %v518 = vpop.f32.mrb[0].mxu0
    %519 = vdwg.mxu0
    %v520 = vmul.f32 %v482, %v482
    %v521 = vmul.f32 %v485, %v485
    %v522 = vmul.f32 %v490, %v490
    %v523 = vmul.f32 %v493, %v493
    %v524 = vmul.f32 %v498, %v498
    %v525 = vmul.f32 %v501, %v501
    %v526 = vmul.f32 %v506, %v506
    %v527 = vmul.f32 %v509, %v509
    %v528 = vmul.f32 %v514, %v514
    %v529 = vmul.f32 %v517, %v517
    %v530 = vmul.f32 %v482, %v520
    %v531 = vmul.f32 %v485, %v521
    %v532 = vmul.f32 %v490, %v522
    %v533 = vmul.f32 %v493, %v523
    %v534 = vmul.f32 %v498, %v524
    %v535 = vmul.f32 %v501, %v525
    %v536 = vmul.f32 %v506, %v526
    %v537 = vmul.f32 %v509, %v527
    %v538 = vmul.f32 %v514, %v528
    %v539 = vmul.f32 %v517, %v529
    %v540 = vmul.f32 %v530, 0.044715
    %v541 = vmul.f32 %v531, 0.044715
    %v542 = vmul.f32 %v532, 0.044715
    %v543 = vmul.f32 %v533, 0.044715
    %v544 = vmul.f32 %v534, 0.044715
    %v545 = vmul.f32 %v535, 0.044715
    %v546 = vmul.f32 %v536, 0.044715
    %v547 = vmul.f32 %v537, 0.044715
    %v548 = vmul.f32 %v538, 0.044715
    %v549 = vmul.f32 %v539, 0.044715
    %v550 = vadd.f32 %v482, %v540
    %v551 = vadd.f32 %v485, %v541
    %v552 = vadd.f32 %v490, %v542
    %v553 = vadd.f32 %v493, %v543
    %v554 = vadd.f32 %v498, %v544
    %v555 = vadd.f32 %v501, %v545
    %v556 = vadd.f32 %v506, %v546
    %v557 = vadd.f32 %v509, %v547
    %v558 = vadd.f32 %v514, %v548
    %v559 = vadd.f32 %v517, %v549
    %v560 = vmul.f32 %v550, 0.7978846
    %v561 = vmul.f32 %v551, 0.7978846
    %v562 = vmul.f32 %v552, 0.7978846
    %v563 = vmul.f32 %v553, 0.7978846
    %v564 = vmul.f32 %v554, 0.7978846
    %v565 = vmul.f32 %v555, 0.7978846
    %v566 = vmul.f32 %v556, 0.7978846
    %v567 = vmul.f32 %v557, 0.7978846
    %v568 = vmul.f32 %v558, 0.7978846
    %v569 = vmul.f32 %v559, 0.7978846
    %v570 = vtanh.pop %v560
    %v571 = vtanh.pop %v561
    %v572 = vtanh.pop %v562
    %v573 = vtanh.pop %v563
    %v574 = vtanh.pop %v564
    %v575 = vtanh.pop %v565
    %v576 = vtanh.pop %v566
    %v577 = vtanh.pop %v567
    %v578 = vtanh.pop %v568
    %v579 = vtanh.pop %v569
    %v580 = vadd.f32 %v570, 1.0
    %v581 = vadd.f32 %v571, 1.0
    %v582 = vadd.f32 %v572, 1.0
    %v583 = vadd.f32 %v573, 1.0
    %v584 = vadd.f32 %v574, 1.0
    %v585 = vadd.f32 %v575, 1.0
    %v586 = vadd.f32 %v576, 1.0
    %v587 = vadd.f32 %v577, 1.0
    %v588 = vadd.f32 %v578, 1.0
    %v589 = vadd.f32 %v579, 1.0
    %v590 = vmul.f32 %v580, 0.5
    %v591 = vmul.f32 %v581, 0.5
    %v592 = vmul.f32 %v582, 0.5
    %v593 = vmul.f32 %v583, 0.5
    %v594 = vmul.f32 %v584, 0.5
    %v595 = vmul.f32 %v585, 0.5
    %v596 = vmul.f32 %v586, 0.5
    %v597 = vmul.f32 %v587, 0.5
    %v598 = vmul.f32 %v588, 0.5
    %v599 = vmul.f32 %v589, 0.5
    %v600 = vmul.f32 %v482, %v590
    %v601 = vmul.f32 %v485, %v591
    %v602 = vmul.f32 %v490, %v592
    %v603 = vmul.f32 %v493, %v593
    %v604 = vmul.f32 %v498, %v594
    %v605 = vmul.f32 %v501, %v595
    %v606 = vmul.f32 %v506, %v596
    %v607 = vmul.f32 %v509, %v597
    %v608 = vmul.f32 %v514, %v598
    %v609 = vmul.f32 %v517, %v599
    %v610 = vpack.c.bf16 %v601, %v600
    %v611 = vpack.c.bf16 %v603, %v602
    %v612 = vpack.c.bf16 %v604, %v604
    %v613 = vpack.c.bf16 %v606, %v605
    %v614 = vpack.c.bf16 %v608, %v607
    %v615 = vpack.c.bf16 %v609, %v609
    %vm616 = vsmask.f32 7424
    %v618 = vshrl.u32 %v610, 16
    %v620 = vshll.u32 %v610, 16
    %v622 = vrot.slane %v620, 1
    %v623 = vor.u32 %v618, %v622
    %v625 = vshll.u32 %v611, 16
    %v627 = vrot.slane %v625, 1
    %v628 = vsel %vm616, %v623, %v627
    %v629 = vshrl.u32 %v611, 16
    %v631 = vor.u32 %v629, %v627
    %v633 = vshll.u32 %v612, 16
    %v635 = vrot.slane %v633, 1
    %v636 = vsel %vm616, %v631, %v635
    %v638 = vshrl.u32 %v613, 16
    %v640 = vshll.u32 %v613, 16
    %v642 = vrot.slane %v640, 1
    %v643 = vor.u32 %v638, %v642
    %v645 = vshll.u32 %v614, 16
    %v647 = vrot.slane %v645, 1
    %v648 = vsel %vm616, %v643, %v647
    %v649 = vshrl.u32 %v614, 16
    %v651 = vor.u32 %v649, %v647
    %v653 = vshll.u32 %v615, 16
    %v655 = vrot.slane %v653, 1
    %v656 = vsel %vm616, %v651, %v655
    %v661 = vld [vmem:[%s5] sm:$0xf]
    %v662 = vld [vmem:[%s5 + $0x4] sm:$0xf]
    %v663 = vld [vmem:[%s5 + $0x8] sm:$0xf]
    %v664 = vld [vmem:[%s5 + $0xc] sm:$0xf]
    %v665 = vld [vmem:[%s5 + $0x10] sm:$0xf]
    %v666 = vld [vmem:[%s5 + $0x14] sm:$0xf]
    %v667 = vld [vmem:[%s5 + $0x18] sm:$0xf]
    %v668 = vld [vmem:[%s5 + $0x1c] sm:$0xf]
    %v669 = vld [vmem:[%s5 + $0x20] sm:$0xf]
    %v670 = vld [vmem:[%s5 + $0x24] sm:$0xf]
    %v671 = vld [vmem:[%s5 + $0x28] sm:$0xf]
    %v672 = vld [vmem:[%s5 + $0x2c] sm:$0xf]
    %v673 = vld [vmem:[%s5 + $0x30] sm:$0xf]
    %v674 = vld [vmem:[%s5 + $0x34] sm:$0xf]
    %v675 = vld [vmem:[%s5 + $0x38] sm:$0xf]
    %v676 = vld [vmem:[%s5 + $0x3c] sm:$0xf]
    %v677 = vld [vmem:[%s5 + $0x40] sm:$0xf]
    %v678 = vld [vmem:[%s5 + $0x44] sm:$0xf]
    %v679 = vld [vmem:[%s5 + $0x48] sm:$0xf]
    %v680 = vld [vmem:[%s5 + $0x4c] sm:$0xf]
    %v681 = vld [vmem:[%s5 + $0x50] sm:$0xf]
    %v682 = vld [vmem:[%s5 + $0x54] sm:$0xf]
    %v683 = vld [vmem:[%s5 + $0x58] sm:$0xf]
    %v684 = vld [vmem:[%s5 + $0x5c] sm:$0xf]
    %v685 = vld [vmem:[%s5 + $0x60] sm:$0xf]
    %v686 = vld [vmem:[%s5 + $0x64] sm:$0xf]
    %v687 = vld [vmem:[%s5 + $0x68] sm:$0xf]
    %v688 = vld [vmem:[%s5 + $0x6c] sm:$0xf]
    %v689 = vld [vmem:[%s5 + $0x70] sm:$0xf]
    %v690 = vld [vmem:[%s5 + $0x74] sm:$0xf]
    %v691 = vld [vmem:[%s5 + $0x78] sm:$0xf]
    %v692 = vld [vmem:[%s5 + $0x7c] sm:$0xf]
    %v725 = vunpack.c.l.b16 %v661
    %v726 = vunpack.c.l.b16 %v662
    %v727 = vunpack.c.l.b16 %v663
    %v728 = vunpack.c.l.b16 %v664
    %v729 = vunpack.c.l.b16 %v665
    %v730 = vunpack.c.l.b16 %v666
    %v731 = vunpack.c.l.b16 %v667
    %v732 = vunpack.c.l.b16 %v668
    %v733 = vunpack.c.l.b16 %v669
    %v734 = vunpack.c.l.b16 %v670
    %v735 = vunpack.c.l.b16 %v671
    %v736 = vunpack.c.l.b16 %v672
    %v737 = vunpack.c.l.b16 %v673
    %v738 = vunpack.c.l.b16 %v674
    %v739 = vunpack.c.l.b16 %v675
    %v740 = vunpack.c.l.b16 %v676
    %v741 = vunpack.c.l.b16 %v677
    %v742 = vunpack.c.l.b16 %v678
    %v743 = vunpack.c.l.b16 %v679
    %v744 = vunpack.c.l.b16 %v680
    %v745 = vunpack.c.l.b16 %v681
    %v746 = vunpack.c.l.b16 %v682
    %v747 = vunpack.c.l.b16 %v683
    %v748 = vunpack.c.l.b16 %v684
    %v749 = vunpack.c.l.b16 %v685
    %v750 = vunpack.c.l.b16 %v686
    %v751 = vunpack.c.l.b16 %v687
    %v752 = vunpack.c.l.b16 %v688
    %v753 = vunpack.c.l.b16 %v689
    %v754 = vunpack.c.l.b16 %v690
    %v755 = vunpack.c.l.b16 %v691
    %v756 = vunpack.c.l.b16 %v692
    %v757 = vpack.c.b16 %v726, %v725
    %v758 = vpack.c.b16 %v728, %v727
    %v759 = vpack.c.b16 %v730, %v729
    %v760 = vpack.c.b16 %v732, %v731
    %v761 = vpack.c.b16 %v734, %v733
    %v762 = vpack.c.b16 %v736, %v735
    %v763 = vpack.c.b16 %v738, %v737
    %v764 = vpack.c.b16 %v740, %v739
    %v765 = vpack.c.b16 %v742, %v741
    %v766 = vpack.c.b16 %v744, %v743
    %v767 = vpack.c.b16 %v746, %v745
    %v768 = vpack.c.b16 %v748, %v747
    %v769 = vpack.c.b16 %v750, %v749
    %v770 = vpack.c.b16 %v752, %v751
    %v771 = vpack.c.b16 %v754, %v753
    %v772 = vpack.c.b16 %v756, %v755
    %789 = vmatprep.subr.bf16.mxu0 0
    %790 = vmatpush1.bf16.msra.mxu0 %v757
    %791 = vmatprep.subr.bf16.mxu0 0
    %792 = vmatpush1.bf16.msra.mxu0 %v758
    %793 = vmatprep.subr.bf16.mxu0 0
    %794 = vmatpush1.bf16.msra.mxu0 %v759
    %795 = vmatprep.subr.bf16.mxu0 0
    %796 = vmatpush1.bf16.msra.mxu0 %v760
    %797 = vmatprep.subr.bf16.mxu0 0
    %798 = vmatpush1.bf16.msra.mxu0 %v761
    %799 = vmatprep.subr.bf16.mxu0 0
    %800 = vmatpush1.bf16.msra.mxu0 %v762
    %801 = vmatprep.subr.bf16.mxu0 0
    %802 = vmatpush1.bf16.msra.mxu0 %v763
    %803 = vmatprep.subr.bf16.mxu0 0
    %804 = vmatpush1.bf16.msra.mxu0 %v764
    %805 = vmatprep.subr.bf16.mxu0 0
    %806 = vmatpush1.bf16.msra.mxu0 %v765
    %807 = vmatprep.subr.bf16.mxu0 0
    %808 = vmatpush1.bf16.msra.mxu0 %v766
    %809 = vmatprep.subr.bf16.mxu0 0
    %810 = vmatpush1.bf16.msra.mxu0 %v767
    %811 = vmatprep.subr.bf16.mxu0 0
    %812 = vmatpush1.bf16.msra.mxu0 %v768
    %813 = vmatprep.subr.bf16.mxu0 0
    %814 = vmatpush1.bf16.msra.mxu0 %v769
    %815 = vmatprep.subr.bf16.mxu0 0
    %816 = vmatpush1.bf16.msra.mxu0 %v770
    %817 = vmatprep.subr.bf16.mxu0 0
    %818 = vmatpush1.bf16.msra.mxu0 %v771
    %819 = vmatprep.subr.bf16.mxu0 0
    %820 = vmatpush1.bf16.msra.mxu0 %v772
    %821 = vmatprep.mubr.bf16.mxu0 %v628
    %822 = vmatmul.mubr.bf16.gmra.mrb[0].mxu0 %v610
    %v823 = vpop.f32.mrb[0].mxu0
    %v824 = vadd.f32 0.0, %v823
    %v825 = vpop.f32.mrb[0].mxu0
    %v826 = vpop.f32.mrb[0].mxu0
    %v827 = vadd.f32 0.0, %v826
    %v828 = vpop.f32.mrb[0].mxu0
    %829 = vmatprep.mubr.bf16.mxu0 %v636
    %830 = vmatmul.mubr.bf16.gmra.mrb[0].mxu0 %v611
    %v831 = vpop.f32.mrb[0].mxu0
    %v832 = vadd.f32 0.0, %v831
    %v833 = vpop.f32.mrb[0].mxu0
    %v834 = vpop.f32.mrb[0].mxu0
    %v835 = vadd.f32 0.0, %v834
    %v836 = vpop.f32.mrb[0].mxu0
    %837 = vmatprep.mubr.bf16.mxu0 %v648
    %838 = vmatmul.mubr.bf16.gmra.mrb[0].mxu0 %v613
    %v839 = vpop.f32.mrb[0].mxu0
    %v840 = vadd.f32 0.0, %v839
    %v841 = vpop.f32.mrb[0].mxu0
    %v842 = vpop.f32.mrb[0].mxu0
    %v843 = vadd.f32 0.0, %v842
    %v844 = vpop.f32.mrb[0].mxu0
    %845 = vmatprep.mubr.bf16.mxu0 %v656
    %846 = vmatmul.mubr.bf16.gmra.mrb[0].mxu0 %v614
    %v847 = vpop.f32.mrb[0].mxu0
    %v848 = vadd.f32 0.0, %v847
    %v849 = vpop.f32.mrb[0].mxu0
    %v850 = vpop.f32.mrb[0].mxu0
    %v851 = vadd.f32 0.0, %v850
    %v852 = vpop.f32.mrb[0].mxu0
    %853 = vdwg.mxu0
    %v854 = vmul.f32 %v824, %v824
    %v855 = vmul.f32 %v827, %v827
    %v856 = vmul.f32 %v832, %v832
    %v857 = vmul.f32 %v835, %v835
    %v858 = vmul.f32 %v840, %v840
    %v859 = vmul.f32 %v843, %v843
    %v860 = vmul.f32 %v848, %v848
    %v861 = vmul.f32 %v851, %v851
    %v862 = vmul.f32 %v824, %v854
    %v863 = vmul.f32 %v827, %v855
    %v864 = vmul.f32 %v832, %v856
    %v865 = vmul.f32 %v835, %v857
    %v866 = vmul.f32 %v840, %v858
    %v867 = vmul.f32 %v843, %v859
    %v868 = vmul.f32 %v848, %v860
    %v869 = vmul.f32 %v851, %v861
    %v870 = vmul.f32 %v862, 0.044715
    %v871 = vmul.f32 %v863, 0.044715
    %v872 = vmul.f32 %v864, 0.044715
    %v873 = vmul.f32 %v865, 0.044715
    %v874 = vmul.f32 %v866, 0.044715
    %v875 = vmul.f32 %v867, 0.044715
    %v876 = vmul.f32 %v868, 0.044715
    %v877 = vmul.f32 %v869, 0.044715
    %v878 = vadd.f32 %v824, %v870
    %v879 = vadd.f32 %v827, %v871
    %v880 = vadd.f32 %v832, %v872
    %v881 = vadd.f32 %v835, %v873
    %v882 = vadd.f32 %v840, %v874
    %v883 = vadd.f32 %v843, %v875
    %v884 = vadd.f32 %v848, %v876
    %v885 = vadd.f32 %v851, %v877
    %v886 = vmul.f32 %v878, 0.7978846
    %v887 = vmul.f32 %v879, 0.7978846
    %v888 = vmul.f32 %v880, 0.7978846
    %v889 = vmul.f32 %v881, 0.7978846
    %v890 = vmul.f32 %v882, 0.7978846
    %v891 = vmul.f32 %v883, 0.7978846
    %v892 = vmul.f32 %v884, 0.7978846
    %v893 = vmul.f32 %v885, 0.7978846
    %v894 = vtanh.pop %v886
    %v895 = vtanh.pop %v887
    %v896 = vtanh.pop %v888
    %v897 = vtanh.pop %v889
    %v898 = vtanh.pop %v890
    %v899 = vtanh.pop %v891
    %v900 = vtanh.pop %v892
    %v901 = vtanh.pop %v893
    %v902 = vadd.f32 %v894, 1.0
    %v903 = vadd.f32 %v895, 1.0
    %v904 = vadd.f32 %v896, 1.0
    %v905 = vadd.f32 %v897, 1.0
    %v906 = vadd.f32 %v898, 1.0
    %v907 = vadd.f32 %v899, 1.0
    %v908 = vadd.f32 %v900, 1.0
    %v909 = vadd.f32 %v901, 1.0
    %v910 = vmul.f32 %v902, 0.5
    %v911 = vmul.f32 %v903, 0.5
    %v912 = vmul.f32 %v904, 0.5
    %v913 = vmul.f32 %v905, 0.5
    %v914 = vmul.f32 %v906, 0.5
    %v915 = vmul.f32 %v907, 0.5
    %v916 = vmul.f32 %v908, 0.5
    %v917 = vmul.f32 %v909, 0.5
    %v918 = vmul.f32 %v824, %v910
    %v919 = vmul.f32 %v827, %v911
    %v920 = vmul.f32 %v832, %v912
    %v921 = vmul.f32 %v835, %v913
    %v922 = vmul.f32 %v840, %v914
    %v923 = vmul.f32 %v843, %v915
    %v924 = vmul.f32 %v848, %v916
    %v925 = vmul.f32 %v851, %v917
    %v926 = vld [vmem:[#allocation2] sm:$0x1]
    %v927 = vld [vmem:[#allocation5] sm:$0x1]
    %vm928 = vcmask 261120
    %v929 = vsel %vm928, %v918, 0.0
    %930 = vadd.xlane.f32.xlu0 %v929
    %v931 = vpop.xlane.xlu0 %930
    %v932 = vsel %vm928, %v919, 0.0
    %933 = vadd.xlane.f32.xlu0 %v932
    %v934 = vpop.xlane.xlu0 %933
    %v935 = vsel %vm928, %v920, 0.0
    %936 = vadd.xlane.f32.xlu0 %v935
    %v937 = vpop.xlane.xlu0 %936
    %v938 = vsel %vm928, %v921, 0.0
    %939 = vadd.xlane.f32.xlu0 %v938
    %v940 = vpop.xlane.xlu0 %939
    %v941 = vsel %vm928, %v922, 0.0
    %942 = vadd.xlane.f32.xlu0 %v941
    %v943 = vpop.xlane.xlu0 %942
    %v944 = vsel %vm928, %v923, 0.0
    %945 = vadd.xlane.f32.xlu0 %v944
    %v946 = vpop.xlane.xlu0 %945
    %v947 = vsel %vm928, %v924, 0.0
    %948 = vadd.xlane.f32.xlu0 %v947
    %v949 = vpop.xlane.xlu0 %948
    %v950 = vsel %vm928, %v925, 0.0
    %951 = vadd.xlane.f32.xlu0 %v950
    %v952 = vpop.xlane.xlu0 %951
    %v953 = vrcp.pop 32.0
    %v954 = vmul.f32 %v931, %v953
    %v955 = vmul.f32 %v934, %v953
    %v956 = vmul.f32 %v937, %v953
    %v957 = vmul.f32 %v940, %v953
    %v958 = vmul.f32 %v943, %v953
    %v959 = vmul.f32 %v946, %v953
    %v960 = vmul.f32 %v949, %v953
    %v961 = vmul.f32 %v952, %v953
    %v962 = vmul.f32 %v918, %v918
    %v963 = vmul.f32 %v919, %v919
    %v964 = vmul.f32 %v920, %v920
    %v965 = vmul.f32 %v921, %v921
    %v966 = vmul.f32 %v922, %v922
    %v967 = vmul.f32 %v923, %v923
    %v968 = vmul.f32 %v924, %v924
    %v969 = vmul.f32 %v925, %v925
    %v970 = vsel %vm928, %v962, 0.0
    %971 = vadd.xlane.f32.xlu0 %v970
    %v972 = vpop.xlane.xlu0 %971
    %v973 = vsel %vm928, %v963, 0.0
    %974 = vadd.xlane.f32.xlu0 %v973
    %v975 = vpop.xlane.xlu0 %974
    %v976 = vsel %vm928, %v964, 0.0
    %977 = vadd.xlane.f32.xlu0 %v976
    %v978 = vpop.xlane.xlu0 %977
    %v979 = vsel %vm928, %v965, 0.0
    %980 = vadd.xlane.f32.xlu0 %v979
    %v981 = vpop.xlane.xlu0 %980
    %v982 = vsel %vm928, %v966, 0.0
    %983 = vadd.xlane.f32.xlu0 %v982
    %v984 = vpop.xlane.xlu0 %983
    %v985 = vsel %vm928, %v967, 0.0
    %986 = vadd.xlane.f32.xlu0 %v985
    %v987 = vpop.xlane.xlu0 %986
    %v988 = vsel %vm928, %v968, 0.0
    %989 = vadd.xlane.f32.xlu0 %v988
    %v990 = vpop.xlane.xlu0 %989
    %v991 = vsel %vm928, %v969, 0.0
    %992 = vadd.xlane.f32.xlu0 %v991
    %v993 = vpop.xlane.xlu0 %992
    %v994 = vmul.f32 %v972, %v953
    %v995 = vmul.f32 %v975, %v953
    %v996 = vmul.f32 %v978, %v953
    %v997 = vmul.f32 %v981, %v953
    %v998 = vmul.f32 %v984, %v953
    %v999 = vmul.f32 %v987, %v953
    %v1000 = vmul.f32 %v990, %v953
    %v1001 = vmul.f32 %v993, %v953
    %v1002 = vmul.f32 %v954, %v954
    %v1003 = vmul.f32 %v955, %v955
    %v1004 = vmul.f32 %v956, %v956
    %v1005 = vmul.f32 %v957, %v957
    %v1006 = vmul.f32 %v958, %v958
    %v1007 = vmul.f32 %v959, %v959
    %v1008 = vmul.f32 %v960, %v960
    %v1009 = vmul.f32 %v961, %v961
    %v1010 = vsub.f32 %v994, %v1002
    %v1011 = vsub.f32 %v995, %v1003
    %v1012 = vsub.f32 %v996, %v1004
    %v1013 = vsub.f32 %v997, %v1005
    %v1014 = vsub.f32 %v998, %v1006
    %v1015 = vsub.f32 %v999, %v1007
    %v1016 = vsub.f32 %v1000, %v1008
    %v1017 = vsub.f32 %v1001, %v1009
    %v1018 = vmax.f32 %v1010, 0.0
    %v1019 = vmax.f32 %v1011, 0.0
    %v1020 = vmax.f32 %v1012, 0.0
    %v1021 = vmax.f32 %v1013, 0.0
    %v1022 = vmax.f32 %v1014, 0.0
    %v1023 = vmax.f32 %v1015, 0.0
    %v1024 = vmax.f32 %v1016, 0.0
    %v1025 = vmax.f32 %v1017, 0.0
    %v1026 = vsub.f32 %v918, %v954
    %v1027 = vsub.f32 %v919, %v955
    %v1028 = vsub.f32 %v920, %v956
    %v1029 = vsub.f32 %v921, %v957
    %v1030 = vsub.f32 %v922, %v958
    %v1031 = vsub.f32 %v923, %v959
    %v1032 = vsub.f32 %v924, %v960
    %v1033 = vsub.f32 %v925, %v961
    %v1034 = vadd.f32 %v1018, 1e-05
    %v1035 = vadd.f32 %v1019, 1e-05
    %v1036 = vadd.f32 %v1020, 1e-05
    %v1037 = vadd.f32 %v1021, 1e-05
    %v1038 = vadd.f32 %v1022, 1e-05
    %v1039 = vadd.f32 %v1023, 1e-05
    %v1040 = vadd.f32 %v1024, 1e-05
    %v1041 = vadd.f32 %v1025, 1e-05
    %v1042 = vrsqrt.pop %v1034
    %v1043 = vrsqrt.pop %v1035
    %v1044 = vrsqrt.pop %v1036
    %v1045 = vrsqrt.pop %v1037
    %v1046 = vrsqrt.pop %v1038
    %v1047 = vrsqrt.pop %v1039
    %v1048 = vrsqrt.pop %v1040
    %v1049 = vrsqrt.pop %v1041
    %v1050 = vmul.f32 %v1026, %v1042
    %v1051 = vmul.f32 %v1027, %v1043
    %v1052 = vmul.f32 %v1028, %v1044
    %v1053 = vmul.f32 %v1029, %v1045
    %v1054 = vmul.f32 %v1030, %v1046
    %v1055 = vmul.f32 %v1031, %v1047
    %v1056 = vmul.f32 %v1032, %v1048
    %v1057 = vmul.f32 %v1033, %v1049
    %v1059 = vlaneseq
    %v1060 = vshrl.u32 %v1059, 7
    %v1061 = vsub.s32 0, %v1060
    %v1062 = vrot.slane %v926, %v1061
    %v1064 = vmul.f32 %v1050, %v1062
    %v1065 = vmul.f32 %v1051, %v1062
    %v1066 = vmul.f32 %v1052, %v1062
    %v1067 = vmul.f32 %v1053, %v1062
    %v1068 = vmul.f32 %v1054, %v1062
    %v1069 = vmul.f32 %v1055, %v1062
    %v1070 = vmul.f32 %v1056, %v1062
    %v1071 = vmul.f32 %v1057, %v1062
    %v1073 = vlaneseq
    %v1074 = vshrl.u32 %v1073, 7
    %v1075 = vsub.s32 0, %v1074
    %v1076 = vrot.slane %v927, %v1075
    %v1078 = vadd.f32 %v1064, %v1076
    %v1079 = vadd.f32 %v1065, %v1076
    %v1080 = vadd.f32 %v1066, %v1076
    %v1081 = vadd.f32 %v1067, %v1076
    %v1082 = vadd.f32 %v1068, %v1076
    %v1083 = vadd.f32 %v1069, %v1076
    %v1084 = vadd.f32 %v1070, %v1076
    %v1085 = vadd.f32 %v1071, %v1076
    %v1086 = vpack.c.bf16 %v1079, %v1078
    %v1087 = vpack.c.bf16 %v1081, %v1080
    %v1088 = vpack.c.bf16 %v1083, %v1082
    %v1089 = vpack.c.bf16 %v1085, %v1084
    %v1090 = vld [vmem:[#allocation7] sm:$0xf]
    %v1091 = vld [vmem:[#allocation7 + $0x4] sm:$0xf]
    %v1092 = vld [vmem:[#allocation7 + $0x8] sm:$0xf]
    %v1093 = vld [vmem:[#allocation7 + $0xc] sm:$0xf]
    %v1094 = vld [vmem:[#allocation8] sm:$0x1]
    %v1096 = vlaneseq
    %v1097 = vshrl.u32 %v1096, 7
    %v1098 = vsub.s32 0, %v1097
    %v1099 = vrot.slane %v1094, %v1098
    %v1105 = vunpack.c.l.b16 %v1090
    %v1106 = vunpack.c.l.b16 %v1091
    %v1107 = vunpack.c.l.b16 %v1092
    %v1108 = vunpack.c.l.b16 %v1093
    %v1109 = vpack.c.b16 %v1106, %v1105
    %v1110 = vpack.c.b16 %v1108, %v1107
    %v1114 = vsel %vm928, %v1086, 0
    %v1117 = vsel %vm928, %v1087, 0
    %v1120 = vsel %vm928, %v1088, 0
    %v1123 = vsel %vm928, %v1089, 0
    %1125 = vmatprep.subr.bf16.mxu0 0
    %1126 = vmatpush1.bf16.msra.mxu0 %v1109
    %1127 = vmatprep.subr.bf16.mxu0 0
    %1128 = vmatpush1.bf16.msra.mxu0 %v1110
    %1129 = vmatprep.subr.bf16.mxu0 0
    %1130 = vmatpush1.bf16.msra.mxu0 0
    %1131 = vmatprep.subr.bf16.mxu0 0
    %1132 = vmatpush1.bf16.msra.mxu0 0
    %1133 = vmatprep.subr.bf16.mxu0 0
    %1134 = vmatpush1.bf16.msra.mxu0 0
    %1135 = vmatprep.subr.bf16.mxu0 0
    %1136 = vmatpush1.bf16.msra.mxu0 0
    %1137 = vmatprep.subr.bf16.mxu0 0
    %1138 = vmatpush1.bf16.msra.mxu0 0
    %1139 = vmatprep.subr.bf16.mxu0 0
    %1140 = vmatpush1.bf16.msra.mxu0 0
    %1141 = vmatprep.subr.bf16.mxu0 0
    %1142 = vmatpush1.bf16.msra.mxu0 0
    %1143 = vmatprep.subr.bf16.mxu0 0
    %1144 = vmatpush1.bf16.msra.mxu0 0
    %1145 = vmatprep.subr.bf16.mxu0 0
    %1146 = vmatpush1.bf16.msra.mxu0 0
    %1147 = vmatprep.subr.bf16.mxu0 0
    %1148 = vmatpush1.bf16.msra.mxu0 0
    %1149 = vmatprep.subr.bf16.mxu0 0
    %1150 = vmatpush1.bf16.msra.mxu0 0
    %1151 = vmatprep.subr.bf16.mxu0 0
    %1152 = vmatpush1.bf16.msra.mxu0 0
    %1153 = vmatprep.subr.bf16.mxu0 0
    %1154 = vmatpush1.bf16.msra.mxu0 0
    %1155 = vmatprep.subr.bf16.mxu0 0
    %1156 = vmatpush1.bf16.msra.mxu0 0
    %1157 = vmatprep.mubr.bf16.mxu0 0
    %1158 = vmatmul.mubr.bf16.gmra.mrb[0].mxu0 %v1114
    %v1159 = vpop.f32.mrb[0].mxu0
    %v1160 = vadd.f32 %v1099, %v1159
    %v1161 = vpop.f32.mrb[0].mxu0
    %v1162 = vpop.f32.mrb[0].mxu0
    %v1163 = vadd.f32 %v1099, %v1162
    %v1164 = vpop.f32.mrb[0].mxu0
    %1165 = vmatprep.mubr.bf16.mxu0 0
    %1166 = vmatmul.mubr.bf16.gmra.mrb[0].mxu0 %v1117
    %v1167 = vpop.f32.mrb[0].mxu0
    %v1168 = vadd.f32 %v1099, %v1167
    %v1169 = vpop.f32.mrb[0].mxu0
    %v1170 = vpop.f32.mrb[0].mxu0
    %v1171 = vadd.f32 %v1099, %v1170
    %v1172 = vpop.f32.mrb[0].mxu0
    %1173 = vmatprep.mubr.bf16.mxu0 0
    %1174 = vmatmul.mubr.bf16.gmra.mrb[0].mxu0 %v1120
    %v1175 = vpop.f32.mrb[0].mxu0
    %v1176 = vadd.f32 %v1099, %v1175
    %v1177 = vpop.f32.mrb[0].mxu0
    %v1178 = vpop.f32.mrb[0].mxu0
    %v1179 = vadd.f32 %v1099, %v1178
    %v1180 = vpop.f32.mrb[0].mxu0
    %1181 = vmatprep.mubr.bf16.mxu0 0
    %1182 = vmatmul.mubr.bf16.gmra.mrb[0].mxu0 %v1123
    %v1183 = vpop.f32.mrb[0].mxu0
    %v1184 = vadd.f32 %v1099, %v1183
    %v1185 = vpop.f32.mrb[0].mxu0
    %v1186 = vpop.f32.mrb[0].mxu0
    %v1187 = vadd.f32 %v1099, %v1186
    %v1188 = vpop.f32.mrb[0].mxu0
    %1189 = vdwg.mxu0
    %v1190 = vld [vmem:[#allocation10] sm:$0x1]
    %v1191 = vld [vmem:[#allocation11] sm:$0x1]
    %v1192 = vsel %vm431, %v1160, 0.0
    %1193 = vadd.xlane.f32.xlu0 %v1192
    %v1194 = vpop.xlane.xlu0 %1193
    %v1195 = vsel %vm431, %v1163, 0.0
    %1196 = vadd.xlane.f32.xlu0 %v1195
    %v1197 = vpop.xlane.xlu0 %1196
    %v1198 = vsel %vm431, %v1168, 0.0
    %1199 = vadd.xlane.f32.xlu0 %v1198
    %v1200 = vpop.xlane.xlu0 %1199
    %v1201 = vsel %vm431, %v1171, 0.0
    %1202 = vadd.xlane.f32.xlu0 %v1201
    %v1203 = vpop.xlane.xlu0 %1202
    %v1204 = vsel %vm431, %v1176, 0.0
    %1205 = vadd.xlane.f32.xlu0 %v1204
    %v1206 = vpop.xlane.xlu0 %1205
    %v1207 = vsel %vm431, %v1179, 0.0
    %1208 = vadd.xlane.f32.xlu0 %v1207
    %v1209 = vpop.xlane.xlu0 %1208
    %v1210 = vsel %vm431, %v1184, 0.0
    %1211 = vadd.xlane.f32.xlu0 %v1210
    %v1212 = vpop.xlane.xlu0 %1211
    %v1213 = vsel %vm431, %v1187, 0.0
    %1214 = vadd.xlane.f32.xlu0 %v1213
    %v1215 = vpop.xlane.xlu0 %1214
    %v1216 = vrcp.pop 64.0
    %v1217 = vmul.f32 %v1194, %v1216
    %v1218 = vmul.f32 %v1197, %v1216
    %v1219 = vmul.f32 %v1200, %v1216
    %v1220 = vmul.f32 %v1203, %v1216
    %v1221 = vmul.f32 %v1206, %v1216
    %v1222 = vmul.f32 %v1209, %v1216
    %v1223 = vmul.f32 %v1212, %v1216
    %v1224 = vmul.f32 %v1215, %v1216
    %v1225 = vmul.f32 %v1160, %v1160
    %v1226 = vmul.f32 %v1163, %v1163
    %v1227 = vmul.f32 %v1168, %v1168
    %v1228 = vmul.f32 %v1171, %v1171
    %v1229 = vmul.f32 %v1176, %v1176
    %v1230 = vmul.f32 %v1179, %v1179
    %v1231 = vmul.f32 %v1184, %v1184
    %v1232 = vmul.f32 %v1187, %v1187
    %v1233 = vsel %vm431, %v1225, 0.0
    %1234 = vadd.xlane.f32.xlu0 %v1233
    %v1235 = vpop.xlane.xlu0 %1234
    %v1236 = vsel %vm431, %v1226, 0.0
    %1237 = vadd.xlane.f32.xlu0 %v1236
    %v1238 = vpop.xlane.xlu0 %1237
    %v1239 = vsel %vm431, %v1227, 0.0
    %1240 = vadd.xlane.f32.xlu0 %v1239
    %v1241 = vpop.xlane.xlu0 %1240
    %v1242 = vsel %vm431, %v1228, 0.0
    %1243 = vadd.xlane.f32.xlu0 %v1242
    %v1244 = vpop.xlane.xlu0 %1243
    %v1245 = vsel %vm431, %v1229, 0.0
    %1246 = vadd.xlane.f32.xlu0 %v1245
    %v1247 = vpop.xlane.xlu0 %1246
    %v1248 = vsel %vm431, %v1230, 0.0
    %1249 = vadd.xlane.f32.xlu0 %v1248
    %v1250 = vpop.xlane.xlu0 %1249
    %v1251 = vsel %vm431, %v1231, 0.0
    %1252 = vadd.xlane.f32.xlu0 %v1251
    %v1253 = vpop.xlane.xlu0 %1252
    %v1254 = vsel %vm431, %v1232, 0.0
    %1255 = vadd.xlane.f32.xlu0 %v1254
    %v1256 = vpop.xlane.xlu0 %1255
    %v1257 = vmul.f32 %v1235, %v1216
    %v1258 = vmul.f32 %v1238, %v1216
    %v1259 = vmul.f32 %v1241, %v1216
    %v1260 = vmul.f32 %v1244, %v1216
    %v1261 = vmul.f32 %v1247, %v1216
    %v1262 = vmul.f32 %v1250, %v1216
    %v1263 = vmul.f32 %v1253, %v1216
    %v1264 = vmul.f32 %v1256, %v1216
    %v1265 = vmul.f32 %v1217, %v1217
    %v1266 = vmul.f32 %v1218, %v1218
    %v1267 = vmul.f32 %v1219, %v1219
    %v1268 = vmul.f32 %v1220, %v1220
    %v1269 = vmul.f32 %v1221, %v1221
    %v1270 = vmul.f32 %v1222, %v1222
    %v1271 = vmul.f32 %v1223, %v1223
    %v1272 = vmul.f32 %v1224, %v1224
    %v1273 = vsub.f32 %v1257, %v1265
    %v1274 = vsub.f32 %v1258, %v1266
    %v1275 = vsub.f32 %v1259, %v1267
    %v1276 = vsub.f32 %v1260, %v1268
    %v1277 = vsub.f32 %v1261, %v1269
    %v1278 = vsub.f32 %v1262, %v1270
    %v1279 = vsub.f32 %v1263, %v1271
    %v1280 = vsub.f32 %v1264, %v1272
    %v1281 = vmax.f32 %v1273, 0.0
    %v1282 = vmax.f32 %v1274, 0.0
    %v1283 = vmax.f32 %v1275, 0.0
    %v1284 = vmax.f32 %v1276, 0.0
    %v1285 = vmax.f32 %v1277, 0.0
    %v1286 = vmax.f32 %v1278, 0.0
    %v1287 = vmax.f32 %v1279, 0.0
    %v1288 = vmax.f32 %v1280, 0.0
    %v1289 = vsub.f32 %v1160, %v1217
    %v1290 = vsub.f32 %v1163, %v1218
    %v1291 = vsub.f32 %v1168, %v1219
    %v1292 = vsub.f32 %v1171, %v1220
    %v1293 = vsub.f32 %v1176, %v1221
    %v1294 = vsub.f32 %v1179, %v1222
    %v1295 = vsub.f32 %v1184, %v1223
    %v1296 = vsub.f32 %v1187, %v1224
    %v1297 = vadd.f32 %v1281, 1e-05
    %v1298 = vadd.f32 %v1282, 1e-05
    %v1299 = vadd.f32 %v1283, 1e-05
    %v1300 = vadd.f32 %v1284, 1e-05
    %v1301 = vadd.f32 %v1285, 1e-05
    %v1302 = vadd.f32 %v1286, 1e-05
    %v1303 = vadd.f32 %v1287, 1e-05
    %v1304 = vadd.f32 %v1288, 1e-05
    %v1305 = vrsqrt.pop %v1297
    %v1306 = vrsqrt.pop %v1298
    %v1307 = vrsqrt.pop %v1299
    %v1308 = vrsqrt.pop %v1300
    %v1309 = vrsqrt.pop %v1301
    %v1310 = vrsqrt.pop %v1302
    %v1311 = vrsqrt.pop %v1303
    %v1312 = vrsqrt.pop %v1304
    %v1313 = vmul.f32 %v1289, %v1305
    %v1314 = vmul.f32 %v1290, %v1306
    %v1315 = vmul.f32 %v1291, %v1307
    %v1316 = vmul.f32 %v1292, %v1308
    %v1317 = vmul.f32 %v1293, %v1309
    %v1318 = vmul.f32 %v1294, %v1310
    %v1319 = vmul.f32 %v1295, %v1311
    %v1320 = vmul.f32 %v1296, %v1312
    %v1322 = vlaneseq
    %v1323 = vshrl.u32 %v1322, 7
    %v1324 = vsub.s32 0, %v1323
    %v1325 = vrot.slane %v1190, %v1324
    %v1327 = vmul.f32 %v1313, %v1325
    %v1328 = vmul.f32 %v1314, %v1325
    %v1329 = vmul.f32 %v1315, %v1325
    %v1330 = vmul.f32 %v1316, %v1325
    %v1331 = vmul.f32 %v1317, %v1325
    %v1332 = vmul.f32 %v1318, %v1325
    %v1333 = vmul.f32 %v1319, %v1325
    %v1334 = vmul.f32 %v1320, %v1325
    %v1336 = vlaneseq
    %v1337 = vshrl.u32 %v1336, 7
    %v1338 = vsub.s32 0, %v1337
    %v1339 = vrot.slane %v1191, %v1338
    %v1341 = vadd.f32 %v1327, %v1339
    %v1342 = vadd.f32 %v1328, %v1339
    %v1343 = vadd.f32 %v1329, %v1339
    %v1344 = vadd.f32 %v1330, %v1339
    %v1345 = vadd.f32 %v1331, %v1339
    %v1346 = vadd.f32 %v1332, %v1339
    %v1347 = vadd.f32 %v1333, %v1339
    %v1348 = vadd.f32 %v1334, %v1339
    %v1349 = vpack.c.bf16 %v1342, %v1341
    %v1350 = vpack.c.bf16 %v1344, %v1343
    %v1351 = vpack.c.bf16 %v1346, %v1345
    %v1352 = vpack.c.bf16 %v1348, %v1347
    %v1353 = vld [vmem:[%s19] sm:$0xff]
    %v1354 = vld [vmem:[%s19 + $0x8] sm:$0xff]
    %v1355 = vld [vmem:[%s19 + $0x10] sm:$0xff]
    %v1356 = vld [vmem:[%s19 + $0x18] sm:$0xff]
    %v1357 = vld [vmem:[%s19 + $0x20] sm:$0xff]
    %v1358 = vld [vmem:[%s19 + $0x28] sm:$0xff]
    %v1359 = vld [vmem:[%s19 + $0x30] sm:$0xff]
    %v1360 = vld [vmem:[%s19 + $0x38] sm:$0xff]
    %v1361 = vld [vmem:[#allocation13] sm:$0x3]
    %v1363 = vlaneseq
    %v1364 = vshrl.u32 %v1363, 7
    %v1365 = vsub.s32 0, %v1364
    %v1366 = vrot.slane %v1361, %v1365
    %v1367 = vlaneseq
    %v1368 = vshrl.u32 %v1367, 7
    %v1369 = vsub.s32 1, %v1368
    %v1370 = vrot.slane %v1361, %v1369
    %v1381 = vunpack.c.l.b16 %v1353
    %v1382 = vunpack.c.h.b16 %v1353
    %v1383 = vunpack.c.l.b16 %v1354
    %v1384 = vunpack.c.h.b16 %v1354
    %v1385 = vunpack.c.l.b16 %v1355
    %v1386 = vunpack.c.h.b16 %v1355
    %v1387 = vunpack.c.l.b16 %v1356
    %v1388 = vunpack.c.h.b16 %v1356
    %v1389 = vunpack.c.l.b16 %v1357
    %v1390 = vunpack.c.h.b16 %v1357
    %v1391 = vunpack.c.l.b16 %v1358
    %v1392 = vunpack.c.h.b16 %v1358
    %v1393 = vunpack.c.l.b16 %v1359
    %v1394 = vunpack.c.h.b16 %v1359
    %v1395 = vunpack.c.l.b16 %v1360
    %v1396 = vunpack.c.h.b16 %v1360
    %v1397 = vpack.c.b16 %v1383, %v1381
    %v1398 = vpack.c.b16 %v1384, %v1382
    %v1399 = vpack.c.b16 %v1387, %v1385
    %v1400 = vpack.c.b16 %v1388, %v1386
    %v1401 = vpack.c.b16 %v1391, %v1389
    %v1402 = vpack.c.b16 %v1392, %v1390
    %v1403 = vpack.c.b16 %v1395, %v1393
    %v1404 = vpack.c.b16 %v1396, %v1394
    %v1414 = vsel %vm431, %v1349, 0
    %v1417 = vsel %vm431, %v1350, 0
    %v1420 = vsel %vm431, %v1351, 0
    %v1423 = vsel %vm431, %v1352, 0
    %1425 = vmatprep.subr.bf16.mxu0 %v1398
    %1426 = vmatpush1.bf16.msra.mxu0 %v1397
    %1427 = vmatprep.subr.bf16.mxu0 %v1400
    %1428 = vmatpush1.bf16.msra.mxu0 %v1399
    %1429 = vmatprep.subr.bf16.mxu0 %v1402
    %1430 = vmatpush1.bf16.msra.mxu0 %v1401
    %1431 = vmatprep.subr.bf16.mxu0 %v1404
    %1432 = vmatpush1.bf16.msra.mxu0 %v1403
    %1433 = vmatprep.subr.bf16.mxu0 0
    %1434 = vmatpush1.bf16.msra.mxu0 0
    %1435 = vmatprep.subr.bf16.mxu0 0
    %1436 = vmatpush1.bf16.msra.mxu0 0
    %1437 = vmatprep.subr.bf16.mxu0 0
    %1438 = vmatpush1.bf16.msra.mxu0 0
    %1439 = vmatprep.subr.bf16.mxu0 0
    %1440 = vmatpush1.bf16.msra.mxu0 0
    %1441 = vmatprep.subr.bf16.mxu0 0
    %1442 = vmatpush1.bf16.msra.mxu0 0
    %1443 = vmatprep.subr.bf16.mxu0 0
    %1444 = vmatpush1.bf16.msra.mxu0 0
    %1445 = vmatprep.subr.bf16.mxu0 0
    %1446 = vmatpush1.bf16.msra.mxu0 0
    %1447 = vmatprep.subr.bf16.mxu0 0
    %1448 = vmatpush1.bf16.msra.mxu0 0
    %1449 = vmatprep.subr.bf16.mxu0 0
    %1450 = vmatpush1.bf16.msra.mxu0 0
    %1451 = vmatprep.subr.bf16.mxu0 0
    %1452 = vmatpush1.bf16.msra.mxu0 0
    %1453 = vmatprep.subr.bf16.mxu0 0
    %1454 = vmatpush1.bf16.msra.mxu0 0
    %1455 = vmatprep.subr.bf16.mxu0 0
    %1456 = vmatpush1.bf16.msra.mxu0 0
    %1457 = vmatprep.mubr.bf16.mxu0 0
    %1458 = vmatmul.mubr.bf16.gmra.mrb[0].mxu0 %v1414
    %v1459 = vpop.f32.mrb[0].mxu0
    %v1460 = vadd.f32 %v1366, %v1459
    %v1461 = vpop.f32.mrb[0].mxu0
    %v1462 = vadd.f32 %v1370, %v1461
    %v1463 = vpop.f32.mrb[0].mxu0
    %v1464 = vadd.f32 %v1366, %v1463
    %v1465 = vpop.f32.mrb[0].mxu0
    %v1466 = vadd.f32 %v1370, %v1465
    %1467 = vmatprep.mubr.bf16.mxu0 0
    %1468 = vmatmul.mubr.bf16.gmra.mrb[0].mxu0 %v1417
    %v1469 = vpop.f32.mrb[0].mxu0
    %v1470 = vadd.f32 %v1366, %v1469
    %v1471 = vpop.f32.mrb[0].mxu0
    %v1472 = vadd.f32 %v1370, %v1471
    %v1473 = vpop.f32.mrb[0].mxu0
    %v1474 = vadd.f32 %v1366, %v1473
    %v1475 = vpop.f32.mrb[0].mxu0
    %v1476 = vadd.f32 %v1370, %v1475
    %1477 = vmatprep.mubr.bf16.mxu0 0
    %1478 = vmatmul.mubr.bf16.gmra.mrb[0].mxu0 %v1420
    %v1479 = vpop.f32.mrb[0].mxu0
    %v1480 = vadd.f32 %v1366, %v1479
    %v1481 = vpop.f32.mrb[0].mxu0
    %v1482 = vadd.f32 %v1370, %v1481
    %v1483 = vpop.f32.mrb[0].mxu0
    %v1484 = vadd.f32 %v1366, %v1483
    %v1485 = vpop.f32.mrb[0].mxu0
    %v1486 = vadd.f32 %v1370, %v1485
    %1487 = vmatprep.mubr.bf16.mxu0 0
    %1488 = vmatmul.mubr.bf16.gmra.mrb[0].mxu0 %v1423
    %v1489 = vpop.f32.mrb[0].mxu0
    %v1490 = vadd.f32 %v1366, %v1489
    %v1491 = vpop.f32.mrb[0].mxu0
    %v1492 = vadd.f32 %v1370, %v1491
    %v1493 = vpop.f32.mrb[0].mxu0
    %v1494 = vadd.f32 %v1366, %v1493
    %v1495 = vpop.f32.mrb[0].mxu0
    %v1496 = vadd.f32 %v1370, %v1495
    %1497 = vdwg.mxu0
    %v1498 = vpack.c.bf16 %v1464, %v1460
    %v1499 = vpack.c.bf16 %v1474, %v1470
    %v1500 = vpack.c.bf16 %v1484, %v1480
    %v1501 = vpack.c.bf16 %v1494, %v1490
    %1510 = vrot.lane.b32.xlu0 %v1460, 64
    %v1511 = vpop.permute.xlu0 %1510
    %1512 = vrot.lane.b32.xlu0 %v1464, 64
    %v1513 = vpop.permute.xlu0 %1512
    %1514 = vrot.lane.b32.xlu0 %v1470, 64
    %v1515 = vpop.permute.xlu0 %1514
    %1516 = vrot.lane.b32.xlu0 %v1474, 64
    %v1517 = vpop.permute.xlu0 %1516
    %1518 = vrot.lane.b32.xlu0 %v1480, 64
    %v1519 = vpop.permute.xlu0 %1518
    %1520 = vrot.lane.b32.xlu0 %v1484, 64
    %v1521 = vpop.permute.xlu0 %1520
    %1522 = vrot.lane.b32.xlu0 %v1490, 64
    %v1523 = vpop.permute.xlu0 %1522
    %1524 = vrot.lane.b32.xlu0 %v1494, 64
    %v1525 = vpop.permute.xlu0 %1524
    %1534 = vxpose.xlu0.b32.start [1/16] %v1511, 128
    %1535 = vxpose.xlu0.b32.cont [2/16] %v1513, 128
    %1536 = vxpose.xlu0.b32.cont [3/16] %v1515, 128
    %1537 = vxpose.xlu0.b32.cont [4/16] %v1517, 128
    %1538 = vxpose.xlu0.b32.cont [5/16] %v1519, 128
    %1539 = vxpose.xlu0.b32.cont [6/16] %v1521, 128
    %1540 = vxpose.xlu0.b32.cont [7/16] %v1523, 128
    %1541 = vxpose.xlu0.b32.cont [8/16] %v1525, 128
    %1542 = vxpose.xlu0.b32.cont [9/16] 0.0, 128
    %1543 = vxpose.xlu0.b32.cont [10/16] 0.0, 128
    %1544 = vxpose.xlu0.b32.cont [11/16] 0.0, 128
    %1545 = vxpose.xlu0.b32.cont [12/16] 0.0, 128
    %1546 = vxpose.xlu0.b32.cont [13/16] 0.0, 128
    %1547 = vxpose.xlu0.b32.cont [14/16] 0.0, 128
    %1548 = vxpose.xlu0.b32.cont [15/16] 0.0, 128
    %1549 = vxpose.xlu0.b32.end [16/16] 0.0, 128
    %v1550 = vpop.trf.xlu0
    %v1551 = vpop.trf.xlu0
    %v1552 = vpop.trf.xlu0
    %v1553 = vpop.trf.xlu0
    %v1554 = vpop.trf.xlu0
    %v1555 = vpop.trf.xlu0
    %v1556 = vpop.trf.xlu0
    %v1557 = vpop.trf.xlu0
    %v1558 = vpop.trf.xlu0
    %v1559 = vpop.trf.xlu0
    %v1560 = vpop.trf.xlu0
    %v1561 = vpop.trf.xlu0
    %v1562 = vpop.trf.xlu0
    %v1563 = vpop.trf.xlu0
    %v1564 = vpop.trf.xlu0
    %v1565 = vpop.trf.xlu0
    %v1566 = vpack.c.bf16 %v1551, %v1550
    %v1567 = vpack.c.bf16 %v1553, %v1552
    %v1568 = vpack.c.bf16 %v1555, %v1554
    %v1569 = vpack.c.bf16 %v1557, %v1556
    %v1570 = vpack.c.bf16 %v1466, %v1462
    %v1571 = vpack.c.bf16 %v1476, %v1472
    %v1572 = vpack.c.bf16 %v1486, %v1482
    %v1573 = vpack.c.bf16 %v1496, %v1492
    %1578 = vrot.lane.b32.xlu0 %v1566, 64
    %v1579 = vpop.permute.xlu0 %1578
    %1580 = vrot.lane.b32.xlu0 %v1567, 64
    %v1581 = vpop.permute.xlu0 %1580
    %1582 = vrot.lane.b32.xlu0 %v1568, 64
    %v1583 = vpop.permute.xlu0 %1582
    %1584 = vrot.lane.b32.xlu0 %v1569, 64
    %v1585 = vpop.permute.xlu0 %1584
    %v1588 = vsel %vm431, %v1566, %v1579
    %v1592 = vsel %vm431, %v1567, %v1581
    %v1596 = vsel %vm431, %v1568, %v1583
    %v1600 = vsel %vm431, %v1569, %v1585
    %v1610 = vunpack.c.l.b16 %v308
    %v1611 = vunpack.c.h.b16 %v308
    %v1612 = vunpack.c.l.b16 %v309
    %v1613 = vunpack.c.h.b16 %v309
    %v1614 = vunpack.c.l.b16 %v310
    %v1615 = vunpack.c.h.b16 %v310
    %v1616 = vunpack.c.l.b16 %v311
    %v1617 = vunpack.c.h.b16 %v311
    %v1618 = vunpack.c.l.b16 %v312
    %v1619 = vunpack.c.h.b16 %v312
    %v1620 = vunpack.c.l.b16 %v313
    %v1621 = vunpack.c.h.b16 %v313
    %v1622 = vunpack.c.l.b16 %v314
    %v1623 = vunpack.c.h.b16 %v314
    %v1624 = vunpack.c.l.b16 %v315
    %v1625 = vunpack.c.h.b16 %v315
    %v1626 = vpack.c.b16 %v1612, %v1610
    %v1627 = vpack.c.b16 %v1613, %v1611
    %v1628 = vpack.c.b16 %v1616, %v1614
    %v1629 = vpack.c.b16 %v1617, %v1615
    %v1630 = vpack.c.b16 %v1620, %v1618
    %v1631 = vpack.c.b16 %v1621, %v1619
    %v1632 = vpack.c.b16 %v1624, %v1622
    %v1633 = vpack.c.b16 %v1625, %v1623
    %v1642 = vmul.bf16 %v1588, %v1626
    %v1643 = vmul.bf16 %v1588, %v1627
    %v1644 = vmul.bf16 %v1592, %v1628
    %v1645 = vmul.bf16 %v1592, %v1629
    %v1646 = vmul.bf16 %v1596, %v1630
    %v1647 = vmul.bf16 %v1596, %v1631
    %v1648 = vmul.bf16 %v1600, %v1632
    %v1649 = vmul.bf16 %v1600, %v1633
    %v1651 = vsel %vm431, %v1498, 0
    %v1654 = vsel %vm431, %v1499, 0
    %v1657 = vsel %vm431, %v1500, 0
    %v1660 = vsel %vm431, %v1501, 0
    %1662 = vmatprep.subr.bf16.mxu0 %v1643
    %1663 = vmatpush1.bf16.msra.mxu0 %v1642
    %1664 = vmatprep.subr.bf16.mxu0 %v1645
    %1665 = vmatpush1.bf16.msra.mxu0 %v1644
    %1666 = vmatprep.subr.bf16.mxu0 %v1647
    %1667 = vmatpush1.bf16.msra.mxu0 %v1646
    %1668 = vmatprep.subr.bf16.mxu0 %v1649
    %1669 = vmatpush1.bf16.msra.mxu0 %v1648
    %1670 = vmatprep.subr.bf16.mxu0 0
    %1671 = vmatpush1.bf16.msra.mxu0 0
    %1672 = vmatprep.subr.bf16.mxu0 0
    %1673 = vmatpush1.bf16.msra.mxu0 0
    %1674 = vmatprep.subr.bf16.mxu0 0
    %1675 = vmatpush1.bf16.msra.mxu0 0
    %1676 = vmatprep.subr.bf16.mxu0 0
    %1677 = vmatpush1.bf16.msra.mxu0 0
    %1678 = vmatprep.subr.bf16.mxu0 0
    %1679 = vmatpush1.bf16.msra.mxu0 0
    %1680 = vmatprep.subr.bf16.mxu0 0
    %1681 = vmatpush1.bf16.msra.mxu0 0
    %1682 = vmatprep.subr.bf16.mxu0 0
    %1683 = vmatpush1.bf16.msra.mxu0 0
    %1684 = vmatprep.subr.bf16.mxu0 0
    %1685 = vmatpush1.bf16.msra.mxu0 0
    %1686 = vmatprep.subr.bf16.mxu0 0
    %1687 = vmatpush1.bf16.msra.mxu0 0
    %1688 = vmatprep.subr.bf16.mxu0 0
    %1689 = vmatpush1.bf16.msra.mxu0 0
    %1690 = vmatprep.subr.bf16.mxu0 0
    %1691 = vmatpush1.bf16.msra.mxu0 0
    %1692 = vmatprep.subr.bf16.mxu0 0
    %1693 = vmatpush1.bf16.msra.mxu0 0
    %1694 = vmatprep.mubr.bf16.mxu0 0
    %1695 = vmatmul.mubr.bf16.gmra.mrb[0].mxu0 %v1651
    %v1696 = vpop.f32.mrb[0].mxu0
    %v1697 = vadd.f32 %v348, %v1696
    %v1698 = vpop.f32.mrb[0].mxu0
    %v1699 = vadd.f32 %v349, %v1698
    %v1700 = vpop.f32.mrb[0].mxu0
    %v1701 = vadd.f32 %v350, %v1700
    %v1702 = vpop.f32.mrb[0].mxu0
    %v1703 = vadd.f32 %v351, %v1702
    %1704 = vmatprep.mubr.bf16.mxu0 0
    %1705 = vmatmul.mubr.bf16.gmra.mrb[0].mxu0 %v1654
    %v1706 = vpop.f32.mrb[0].mxu0
    %v1707 = vadd.f32 %v352, %v1706
    %v1708 = vpop.f32.mrb[0].mxu0
    %v1709 = vadd.f32 %v353, %v1708
    %v1710 = vpop.f32.mrb[0].mxu0
    %v1711 = vadd.f32 %v354, %v1710
    %v1712 = vpop.f32.mrb[0].mxu0
    %v1713 = vadd.f32 %v355, %v1712
    %1714 = vmatprep.mubr.bf16.mxu0 0
    %1715 = vmatmul.mubr.bf16.gmra.mrb[0].mxu0 %v1657
    %v1716 = vpop.f32.mrb[0].mxu0
    %v1717 = vadd.f32 %v356, %v1716
    %v1718 = vpop.f32.mrb[0].mxu0
    %v1719 = vadd.f32 %v357, %v1718
    %v1720 = vpop.f32.mrb[0].mxu0
    %v1721 = vadd.f32 %v358, %v1720
    %v1722 = vpop.f32.mrb[0].mxu0
    %v1723 = vadd.f32 %v359, %v1722
    %1724 = vmatprep.mubr.bf16.mxu0 0
    %1725 = vmatmul.mubr.bf16.gmra.mrb[0].mxu0 %v1660
    %v1726 = vpop.f32.mrb[0].mxu0
    %v1727 = vadd.f32 %v360, %v1726
    %v1728 = vpop.f32.mrb[0].mxu0
    %v1729 = vadd.f32 %v361, %v1728
    %v1730 = vpop.f32.mrb[0].mxu0
    %v1731 = vadd.f32 %v362, %v1730
    %v1732 = vpop.f32.mrb[0].mxu0
    %v1733 = vadd.f32 %v363, %v1732
    %1734 = vdwg.mxu0
    %v1735 = vmax.f32 %v1697, %v1699
    %1736 = vmax.xlane.f32.xlu0 %v1735
    %v1737 = vpop.xlane.xlu0 %1736
    %v1738 = vmax.f32 %v1701, %v1703
    %1739 = vmax.xlane.f32.xlu0 %v1738
    %v1740 = vpop.xlane.xlu0 %1739
    %v1741 = vmax.f32 %v1707, %v1709
    %1742 = vmax.xlane.f32.xlu0 %v1741
    %v1743 = vpop.xlane.xlu0 %1742
    %v1744 = vmax.f32 %v1711, %v1713
    %1745 = vmax.xlane.f32.xlu0 %v1744
    %v1746 = vpop.xlane.xlu0 %1745
    %v1747 = vmax.f32 %v1717, %v1719
    %1748 = vmax.xlane.f32.xlu0 %v1747
    %v1749 = vpop.xlane.xlu0 %1748
    %v1750 = vmax.f32 %v1721, %v1723
    %1751 = vmax.xlane.f32.xlu0 %v1750
    %v1752 = vpop.xlane.xlu0 %1751
    %v1753 = vmax.f32 %v1727, %v1729
    %1754 = vmax.xlane.f32.xlu0 %v1753
    %v1755 = vpop.xlane.xlu0 %1754
    %v1756 = vmax.f32 %v1731, %v1733
    %1757 = vmax.xlane.f32.xlu0 %v1756
    %v1758 = vpop.xlane.xlu0 %1757
    %v1759 = vsub.f32 %v1697, %v1737
    %v1760 = vsub.f32 %v1699, %v1737
    %v1761 = vsub.f32 %v1701, %v1740
    %v1762 = vsub.f32 %v1703, %v1740
    %v1763 = vsub.f32 %v1707, %v1743
    %v1764 = vsub.f32 %v1709, %v1743
    %v1765 = vsub.f32 %v1711, %v1746
    %v1766 = vsub.f32 %v1713, %v1746
    %v1767 = vsub.f32 %v1717, %v1749
    %v1768 = vsub.f32 %v1719, %v1749
    %v1769 = vsub.f32 %v1721, %v1752
    %v1770 = vsub.f32 %v1723, %v1752
    %v1771 = vsub.f32 %v1727, %v1755
    %v1772 = vsub.f32 %v1729, %v1755
    %v1773 = vsub.f32 %v1731, %v1758
    %v1774 = vsub.f32 %v1733, %v1758
    %v1775 = vmul.f32 %v1759, 1.442695
    %v1776 = vpow.pop %v1775
    %v1777 = vmul.f32 %v1760, 1.442695
    %v1778 = vpow.pop %v1777
    %v1779 = vmul.f32 %v1761, 1.442695
    %v1780 = vpow.pop %v1779
    %v1781 = vmul.f32 %v1762, 1.442695
    %v1782 = vpow.pop %v1781
    %v1783 = vmul.f32 %v1763, 1.442695
    %v1784 = vpow.pop %v1783
    %v1785 = vmul.f32 %v1764, 1.442695
    %v1786 = vpow.pop %v1785
    %v1787 = vmul.f32 %v1765, 1.442695
    %v1788 = vpow.pop %v1787
    %v1789 = vmul.f32 %v1766, 1.442695
    %v1790 = vpow.pop %v1789
    %v1791 = vmul.f32 %v1767, 1.442695
    %v1792 = vpow.pop %v1791
    %v1793 = vmul.f32 %v1768, 1.442695
    %v1794 = vpow.pop %v1793
    %v1795 = vmul.f32 %v1769, 1.442695
    %v1796 = vpow.pop %v1795
    %v1797 = vmul.f32 %v1770, 1.442695
    %v1798 = vpow.pop %v1797
    %v1799 = vmul.f32 %v1771, 1.442695
    %v1800 = vpow.pop %v1799
    %v1801 = vmul.f32 %v1772, 1.442695
    %v1802 = vpow.pop %v1801
    %v1803 = vmul.f32 %v1773, 1.442695
    %v1804 = vpow.pop %v1803
    %v1805 = vmul.f32 %v1774, 1.442695
    %v1806 = vpow.pop %v1805
    %v1807 = vpack.c.bf16 %v1780, %v1776
    %v1808 = vpack.c.bf16 %v1782, %v1778
    %v1809 = vpack.c.bf16 %v1788, %v1784
    %v1810 = vpack.c.bf16 %v1790, %v1786
    %v1811 = vpack.c.bf16 %v1796, %v1792
    %v1812 = vpack.c.bf16 %v1798, %v1794
    %v1813 = vpack.c.bf16 %v1804, %v1800
    %v1814 = vpack.c.bf16 %v1806, %v1802
    %v1847 = vunpack.c.l.b16 %v316
    %v1848 = vunpack.c.l.b16 %v317
    %v1849 = vunpack.c.l.b16 %v318
    %v1850 = vunpack.c.l.b16 %v319
    %v1851 = vunpack.c.l.b16 %v320
    %v1852 = vunpack.c.l.b16 %v321
    %v1853 = vunpack.c.l.b16 %v322
    %v1854 = vunpack.c.l.b16 %v323
    %v1855 = vunpack.c.l.b16 %v324
    %v1856 = vunpack.c.l.b16 %v325
    %v1857 = vunpack.c.l.b16 %v326
    %v1858 = vunpack.c.l.b16 %v327
    %v1859 = vunpack.c.l.b16 %v328
    %v1860 = vunpack.c.l.b16 %v329
    %v1861 = vunpack.c.l.b16 %v330
    %v1862 = vunpack.c.l.b16 %v331
    %v1863 = vunpack.c.l.b16 %v332
    %v1864 = vunpack.c.l.b16 %v333
    %v1865 = vunpack.c.l.b16 %v334
    %v1866 = vunpack.c.l.b16 %v335
    %v1867 = vunpack.c.l.b16 %v336
    %v1868 = vunpack.c.l.b16 %v337
    %v1869 = vunpack.c.l.b16 %v338
    %v1870 = vunpack.c.l.b16 %v339
    %v1871 = vunpack.c.l.b16 %v340
    %v1872 = vunpack.c.l.b16 %v341
    %v1873 = vunpack.c.l.b16 %v342
    %v1874 = vunpack.c.l.b16 %v343
    %v1875 = vunpack.c.l.b16 %v344
    %v1876 = vunpack.c.l.b16 %v345
    %v1877 = vunpack.c.l.b16 %v346
    %v1878 = vunpack.c.l.b16 %v347
    %v1879 = vpack.c.b16 %v1848, %v1847
    %v1880 = vpack.c.b16 %v1850, %v1849
    %v1881 = vpack.c.b16 %v1852, %v1851
    %v1882 = vpack.c.b16 %v1854, %v1853
    %v1883 = vpack.c.b16 %v1856, %v1855
    %v1884 = vpack.c.b16 %v1858, %v1857
    %v1885 = vpack.c.b16 %v1860, %v1859
    %v1886 = vpack.c.b16 %v1862, %v1861
    %v1887 = vpack.c.b16 %v1864, %v1863
    %v1888 = vpack.c.b16 %v1866, %v1865
    %v1889 = vpack.c.b16 %v1868, %v1867
    %v1890 = vpack.c.b16 %v1870, %v1869
    %v1891 = vpack.c.b16 %v1872, %v1871
    %v1892 = vpack.c.b16 %v1874, %v1873
    %v1893 = vpack.c.b16 %v1876, %v1875
    %v1894 = vpack.c.b16 %v1878, %v1877
    %v1911 = vmul.bf16 %v1570, %v1879
    %v1912 = vmul.bf16 %v1571, %v1880
    %v1913 = vmul.bf16 %v1572, %v1881
    %v1914 = vmul.bf16 %v1573, %v1882
    %v1915 = vmul.bf16 %v1570, %v1883
    %v1916 = vmul.bf16 %v1571, %v1884
    %v1917 = vmul.bf16 %v1572, %v1885
    %v1918 = vmul.bf16 %v1573, %v1886
    %v1919 = vmul.bf16 %v1570, %v1887
    %v1920 = vmul.bf16 %v1571, %v1888
    %v1921 = vmul.bf16 %v1572, %v1889
    %v1922 = vmul.bf16 %v1573, %v1890
    %v1923 = vmul.bf16 %v1570, %v1891
    %v1924 = vmul.bf16 %v1571, %v1892
    %v1925 = vmul.bf16 %v1572, %v1893
    %v1926 = vmul.bf16 %v1573, %v1894
    %1927 = vrot.lane.b32.xlu0 %v1879, 64
    %v1928 = vpop.permute.xlu0 %1927
    %1929 = vrot.lane.b32.xlu0 %v1880, 64
    %v1930 = vpop.permute.xlu0 %1929
    %1931 = vrot.lane.b32.xlu0 %v1881, 64
    %v1932 = vpop.permute.xlu0 %1931
    %1933 = vrot.lane.b32.xlu0 %v1882, 64
    %v1934 = vpop.permute.xlu0 %1933
    %1935 = vrot.lane.b32.xlu0 %v1883, 64
    %v1936 = vpop.permute.xlu0 %1935
    %1937 = vrot.lane.b32.xlu0 %v1884, 64
    %v1938 = vpop.permute.xlu0 %1937
    %1939 = vrot.lane.b32.xlu0 %v1885, 64
    %v1940 = vpop.permute.xlu0 %1939
    %1941 = vrot.lane.b32.xlu0 %v1886, 64
    %v1942 = vpop.permute.xlu0 %1941
    %1943 = vrot.lane.b32.xlu0 %v1887, 64
    %v1944 = vpop.permute.xlu0 %1943
    %1945 = vrot.lane.b32.xlu0 %v1888, 64
    %v1946 = vpop.permute.xlu0 %1945
    %1947 = vrot.lane.b32.xlu0 %v1889, 64
    %v1948 = vpop.permute.xlu0 %1947
    %1949 = vrot.lane.b32.xlu0 %v1890, 64
    %v1950 = vpop.permute.xlu0 %1949
    %1951 = vrot.lane.b32.xlu0 %v1891, 64
    %v1952 = vpop.permute.xlu0 %1951
    %1953 = vrot.lane.b32.xlu0 %v1892, 64
    %v1954 = vpop.permute.xlu0 %1953
    %1955 = vrot.lane.b32.xlu0 %v1893, 64
    %v1956 = vpop.permute.xlu0 %1955
    %1957 = vrot.lane.b32.xlu0 %v1894, 64
    %v1958 = vpop.permute.xlu0 %1957
    %v1961 = vsel %vm431, %v1911, %v1928
    %v1965 = vsel %vm431, %v1912, %v1930
    %v1969 = vsel %vm431, %v1913, %v1932
    %v1973 = vsel %vm431, %v1914, %v1934
    %v1977 = vsel %vm431, %v1915, %v1936
    %v1981 = vsel %vm431, %v1916, %v1938
    %v1985 = vsel %vm431, %v1917, %v1940
    %v1989 = vsel %vm431, %v1918, %v1942
    %v1993 = vsel %vm431, %v1919, %v1944
    %v1997 = vsel %vm431, %v1920, %v1946
    %v2001 = vsel %vm431, %v1921, %v1948
    %v2005 = vsel %vm431, %v1922, %v1950
    %v2009 = vsel %vm431, %v1923, %v1952
    %v2013 = vsel %vm431, %v1924, %v1954
    %v2017 = vsel %vm431, %v1925, %v1956
    %v2021 = vsel %vm431, %v1926, %v1958
    %2023 = vmatprep.subr.bf16.mxu0 0
    %2024 = vmatpush1.bf16.msra.mxu0 %v1961
    %2025 = vmatprep.subr.bf16.mxu0 0
    %2026 = vmatpush1.bf16.msra.mxu0 %v1965
    %2027 = vmatprep.subr.bf16.mxu0 0
    %2028 = vmatpush1.bf16.msra.mxu0 %v1969
    %2029 = vmatprep.subr.bf16.mxu0 0
    %2030 = vmatpush1.bf16.msra.mxu0 %v1973
    %2031 = vmatprep.subr.bf16.mxu0 0
    %2032 = vmatpush1.bf16.msra.mxu0 %v1977
    %2033 = vmatprep.subr.bf16.mxu0 0
    %2034 = vmatpush1.bf16.msra.mxu0 %v1981
    %2035 = vmatprep.subr.bf16.mxu0 0
    %2036 = vmatpush1.bf16.msra.mxu0 %v1985
    %2037 = vmatprep.subr.bf16.mxu0 0
    %2038 = vmatpush1.bf16.msra.mxu0 %v1989
    %2039 = vmatprep.subr.bf16.mxu0 0
    %2040 = vmatpush1.bf16.msra.mxu0 %v1993
    %2041 = vmatprep.subr.bf16.mxu0 0
    %2042 = vmatpush1.bf16.msra.mxu0 %v1997
    %2043 = vmatprep.subr.bf16.mxu0 0
    %2044 = vmatpush1.bf16.msra.mxu0 %v2001
    %2045 = vmatprep.subr.bf16.mxu0 0
    %2046 = vmatpush1.bf16.msra.mxu0 %v2005
    %2047 = vmatprep.subr.bf16.mxu0 0
    %2048 = vmatpush1.bf16.msra.mxu0 %v2009
    %2049 = vmatprep.subr.bf16.mxu0 0
    %2050 = vmatpush1.bf16.msra.mxu0 %v2013
    %2051 = vmatprep.subr.bf16.mxu0 0
    %2052 = vmatpush1.bf16.msra.mxu0 %v2017
    %2053 = vmatprep.subr.bf16.mxu0 0
    %2054 = vmatpush1.bf16.msra.mxu0 %v2021
    %2055 = vmatprep.mubr.bf16.mxu0 %v1808
    %2056 = vmatmul.mubr.bf16.gmra.mrb[0].mxu0 %v1807
    %v2057 = vpop.f32.mrb[0].mxu0
    %v2058 = vadd.f32 0.0, %v2057
    %v2059 = vpop.f32.mrb[0].mxu0
    %v2060 = vpop.f32.mrb[0].mxu0
    %v2061 = vadd.f32 0.0, %v2060
    %v2062 = vpop.f32.mrb[0].mxu0
    %2063 = vmatprep.mubr.bf16.mxu0 %v1810
    %2064 = vmatmul.mubr.bf16.gmra.mrb[0].mxu0 %v1809
    %v2065 = vpop.f32.mrb[0].mxu0
    %v2066 = vadd.f32 0.0, %v2065
    %v2067 = vpop.f32.mrb[0].mxu0
    %v2068 = vpop.f32.mrb[0].mxu0
    %v2069 = vadd.f32 0.0, %v2068
    %v2070 = vpop.f32.mrb[0].mxu0
    %2071 = vmatprep.mubr.bf16.mxu0 %v1812
    %2072 = vmatmul.mubr.bf16.gmra.mrb[0].mxu0 %v1811
    %v2073 = vpop.f32.mrb[0].mxu0
    %v2074 = vadd.f32 0.0, %v2073
    %v2075 = vpop.f32.mrb[0].mxu0
    %v2076 = vpop.f32.mrb[0].mxu0
    %v2077 = vadd.f32 0.0, %v2076
    %v2078 = vpop.f32.mrb[0].mxu0
    %2079 = vmatprep.mubr.bf16.mxu0 %v1814
    %2080 = vmatmul.mubr.bf16.gmra.mrb[0].mxu0 %v1813
    %v2081 = vpop.f32.mrb[0].mxu0
    %v2082 = vadd.f32 0.0, %v2081
    %v2083 = vpop.f32.mrb[0].mxu0
    %v2084 = vpop.f32.mrb[0].mxu0
    %v2085 = vadd.f32 0.0, %v2084
    %v2086 = vpop.f32.mrb[0].mxu0
    %2087 = vdwg.mxu0
    %v2088 = vmax.f32 %v2058, 1e-20
    %v2089 = vmax.f32 %v2061, 1e-20
    %v2090 = vmax.f32 %v2066, 1e-20
    %v2091 = vmax.f32 %v2069, 1e-20
    %v2092 = vmax.f32 %v2074, 1e-20
    %v2093 = vmax.f32 %v2077, 1e-20
    %v2094 = vmax.f32 %v2082, 1e-20
    %v2095 = vmax.f32 %v2085, 1e-20
    %2104 = vrot.lane.b32.xlu0 %v2088, 64
    %v2105 = vpop.permute.xlu0 %2104
    %2106 = vrot.lane.b32.xlu0 %v2089, 64
    %v2107 = vpop.permute.xlu0 %2106
    %2108 = vrot.lane.b32.xlu0 %v2090, 64
    %v2109 = vpop.permute.xlu0 %2108
    %2110 = vrot.lane.b32.xlu0 %v2091, 64
    %v2111 = vpop.permute.xlu0 %2110
    %2112 = vrot.lane.b32.xlu0 %v2092, 64
    %v2113 = vpop.permute.xlu0 %2112
    %2114 = vrot.lane.b32.xlu0 %v2093, 64
    %v2115 = vpop.permute.xlu0 %2114
    %2116 = vrot.lane.b32.xlu0 %v2094, 64
    %v2117 = vpop.permute.xlu0 %2116
    %2118 = vrot.lane.b32.xlu0 %v2095, 64
    %v2119 = vpop.permute.xlu0 %2118
    %v2128 = vrcp.pop %v2105
    %v2129 = vmul.f32 %v2058, %v2128
    %v2130 = vrcp.pop %v2107
    %v2131 = vmul.f32 %v2061, %v2130
    %v2132 = vrcp.pop %v2109
    %v2133 = vmul.f32 %v2066, %v2132
    %v2134 = vrcp.pop %v2111
    %v2135 = vmul.f32 %v2069, %v2134
    %v2136 = vrcp.pop %v2113
    %v2137 = vmul.f32 %v2074, %v2136
    %v2138 = vrcp.pop %v2115
    %v2139 = vmul.f32 %v2077, %v2138
    %v2140 = vrcp.pop %v2117
    %v2141 = vmul.f32 %v2082, %v2140
    %v2142 = vrcp.pop %v2119
    %v2143 = vmul.f32 %v2085, %v2142
    %v2144 = vpack.c.bf16 %v2131, %v2129
    %v2145 = vpack.c.bf16 %v2135, %v2133
    %v2146 = vpack.c.bf16 %v2139, %v2137
    %v2147 = vpack.c.bf16 %v2143, %v2141
    %v2148 = vld [vmem:[%s23] sm:$0xf]
    %v2149 = vld [vmem:[%s23 + $0x4] sm:$0xf]
    %v2150 = vld [vmem:[%s23 + $0x8] sm:$0xf]
    %v2151 = vld [vmem:[%s23 + $0xc] sm:$0xf]
    %v2152 = vld [vmem:[%s23 + $0x10] sm:$0xf]
    %v2153 = vld [vmem:[%s23 + $0x14] sm:$0xf]
    %v2154 = vld [vmem:[%s23 + $0x18] sm:$0xf]
    %v2155 = vld [vmem:[%s23 + $0x1c] sm:$0xf]
    %v2156 = vld [vmem:[#allocation14] sm:$0x1]
    %v2158 = vlaneseq
    %v2159 = vshrl.u32 %v2158, 7
    %v2160 = vsub.s32 0, %v2159
    %v2161 = vrot.slane %v2156, %v2160
    %v2171 = vunpack.c.l.b16 %v2148
    %v2172 = vunpack.c.l.b16 %v2149
    %v2173 = vunpack.c.l.b16 %v2150
    %v2174 = vunpack.c.l.b16 %v2151
    %v2175 = vunpack.c.l.b16 %v2152
    %v2176 = vunpack.c.l.b16 %v2153
    %v2177 = vunpack.c.l.b16 %v2154
    %v2178 = vunpack.c.l.b16 %v2155
    %v2179 = vpack.c.b16 %v2172, %v2171
    %v2180 = vpack.c.b16 %v2174, %v2173
    %v2181 = vpack.c.b16 %v2176, %v2175
    %v2182 = vpack.c.b16 %v2178, %v2177
    %v2188 = vsel %vm431, %v2144, 0
    %v2191 = vsel %vm431, %v2145, 0
    %v2194 = vsel %vm431, %v2146, 0
    %v2197 = vsel %vm431, %v2147, 0
    %2199 = vmatprep.subr.bf16.mxu0 0
    %2200 = vmatpush1.bf16.msra.mxu0 %v2179
    %2201 = vmatprep.subr.bf16.mxu0 0
    %2202 = vmatpush1.bf16.msra.mxu0 %v2180
    %2203 = vmatprep.subr.bf16.mxu0 0
    %2204 = vmatpush1.bf16.msra.mxu0 %v2181
    %2205 = vmatprep.subr.bf16.mxu0 0
    %2206 = vmatpush1.bf16.msra.mxu0 %v2182
    %2207 = vmatprep.subr.bf16.mxu0 0
    %2208 = vmatpush1.bf16.msra.mxu0 0
    %2209 = vmatprep.subr.bf16.mxu0 0
    %2210 = vmatpush1.bf16.msra.mxu0 0
    %2211 = vmatprep.subr.bf16.mxu0 0
    %2212 = vmatpush1.bf16.msra.mxu0 0
    %2213 = vmatprep.subr.bf16.mxu0 0
    %2214 = vmatpush1.bf16.msra.mxu0 0
    %2215 = vmatprep.subr.bf16.mxu0 0
    %2216 = vmatpush1.bf16.msra.mxu0 0
    %2217 = vmatprep.subr.bf16.mxu0 0
    %2218 = vmatpush1.bf16.msra.mxu0 0
    %2219 = vmatprep.subr.bf16.mxu0 0
    %2220 = vmatpush1.bf16.msra.mxu0 0
    %2221 = vmatprep.subr.bf16.mxu0 0
    %2222 = vmatpush1.bf16.msra.mxu0 0
    %2223 = vmatprep.subr.bf16.mxu0 0
    %2224 = vmatpush1.bf16.msra.mxu0 0
    %2225 = vmatprep.subr.bf16.mxu0 0
    %2226 = vmatpush1.bf16.msra.mxu0 0
    %2227 = vmatprep.subr.bf16.mxu0 0
    %2228 = vmatpush1.bf16.msra.mxu0 0
    %2229 = vmatprep.subr.bf16.mxu0 0
    %2230 = vmatpush1.bf16.msra.mxu0 0
    %2231 = vmatprep.mubr.bf16.mxu0 0
    %2232 = vmatmul.mubr.bf16.gmra.mrb[0].mxu0 %v2188
    %v2233 = vpop.f32.mrb[0].mxu0
    %v2234 = vadd.f32 %v2161, %v2233
    %v2235 = vpop.f32.mrb[0].mxu0
    %v2236 = vpop.f32.mrb[0].mxu0
    %v2237 = vadd.f32 %v2161, %v2236
    %v2238 = vpop.f32.mrb[0].mxu0
    %2239 = vmatprep.mubr.bf16.mxu0 0
    %2240 = vmatmul.mubr.bf16.gmra.mrb[0].mxu0 %v2191
    %v2241 = vpop.f32.mrb[0].mxu0
    %v2242 = vadd.f32 %v2161, %v2241
    %v2243 = vpop.f32.mrb[0].mxu0
    %v2244 = vpop.f32.mrb[0].mxu0
    %v2245 = vadd.f32 %v2161, %v2244
    %v2246 = vpop.f32.mrb[0].mxu0
    %2247 = vmatprep.mubr.bf16.mxu0 0
    %2248 = vmatmul.mubr.bf16.gmra.mrb[0].mxu0 %v2194
    %v2249 = vpop.f32.mrb[0].mxu0
    %v2250 = vadd.f32 %v2161, %v2249
    %v2251 = vpop.f32.mrb[0].mxu0
    %v2252 = vpop.f32.mrb[0].mxu0
    %v2253 = vadd.f32 %v2161, %v2252
    %v2254 = vpop.f32.mrb[0].mxu0
    %2255 = vmatprep.mubr.bf16.mxu0 0
    %2256 = vmatmul.mubr.bf16.gmra.mrb[0].mxu0 %v2197
    %v2257 = vpop.f32.mrb[0].mxu0
    %v2258 = vadd.f32 %v2161, %v2257
    %v2259 = vpop.f32.mrb[0].mxu0
    %v2260 = vpop.f32.mrb[0].mxu0
    %v2261 = vadd.f32 %v2161, %v2260
    %v2262 = vpop.f32.mrb[0].mxu0
    %2263 = vdwg.mxu0
    %v2264 = vadd.f32 %v1341, %v2234
    %v2265 = vadd.f32 %v1342, %v2237
    %v2266 = vadd.f32 %v1343, %v2242
    %v2267 = vadd.f32 %v1344, %v2245
    %v2268 = vadd.f32 %v1345, %v2250
    %v2269 = vadd.f32 %v1346, %v2253
    %v2270 = vadd.f32 %v1347, %v2258
    %v2271 = vadd.f32 %v1348, %v2261
    %v2272 = vld [vmem:[#allocation16] sm:$0x1]
    %v2273 = vld [vmem:[#allocation17] sm:$0x1]
    %v2274 = vsel %vm431, %v2264, 0.0
    %2275 = vadd.xlane.f32.xlu0 %v2274
    %v2276 = vpop.xlane.xlu0 %2275
    %v2277 = vsel %vm431, %v2265, 0.0
    %2278 = vadd.xlane.f32.xlu0 %v2277
    %v2279 = vpop.xlane.xlu0 %2278
    %v2280 = vsel %vm431, %v2266, 0.0
    %2281 = vadd.xlane.f32.xlu0 %v2280
    %v2282 = vpop.xlane.xlu0 %2281
    %v2283 = vsel %vm431, %v2267, 0.0
    %2284 = vadd.xlane.f32.xlu0 %v2283
    %v2285 = vpop.xlane.xlu0 %2284
    %v2286 = vsel %vm431, %v2268, 0.0
    %2287 = vadd.xlane.f32.xlu0 %v2286
    %v2288 = vpop.xlane.xlu0 %2287
    %v2289 = vsel %vm431, %v2269, 0.0
    %2290 = vadd.xlane.f32.xlu0 %v2289
    %v2291 = vpop.xlane.xlu0 %2290
    %v2292 = vsel %vm431, %v2270, 0.0
    %2293 = vadd.xlane.f32.xlu0 %v2292
    %v2294 = vpop.xlane.xlu0 %2293
    %v2295 = vsel %vm431, %v2271, 0.0
    %2296 = vadd.xlane.f32.xlu0 %v2295
    %v2297 = vpop.xlane.xlu0 %2296
    %v2298 = vmul.f32 %v2276, %v1216
    %v2299 = vmul.f32 %v2279, %v1216
    %v2300 = vmul.f32 %v2282, %v1216
    %v2301 = vmul.f32 %v2285, %v1216
    %v2302 = vmul.f32 %v2288, %v1216
    %v2303 = vmul.f32 %v2291, %v1216
    %v2304 = vmul.f32 %v2294, %v1216
    %v2305 = vmul.f32 %v2297, %v1216
    %v2306 = vmul.f32 %v2264, %v2264
    %v2307 = vmul.f32 %v2265, %v2265
    %v2308 = vmul.f32 %v2266, %v2266
    %v2309 = vmul.f32 %v2267, %v2267
    %v2310 = vmul.f32 %v2268, %v2268
    %v2311 = vmul.f32 %v2269, %v2269
    %v2312 = vmul.f32 %v2270, %v2270
    %v2313 = vmul.f32 %v2271, %v2271
    %v2314 = vsel %vm431, %v2306, 0.0
    %2315 = vadd.xlane.f32.xlu0 %v2314
    %v2316 = vpop.xlane.xlu0 %2315
    %v2317 = vsel %vm431, %v2307, 0.0
    %2318 = vadd.xlane.f32.xlu0 %v2317
    %v2319 = vpop.xlane.xlu0 %2318
    %v2320 = vsel %vm431, %v2308, 0.0
    %2321 = vadd.xlane.f32.xlu0 %v2320
    %v2322 = vpop.xlane.xlu0 %2321
    %v2323 = vsel %vm431, %v2309, 0.0
    %2324 = vadd.xlane.f32.xlu0 %v2323
    %v2325 = vpop.xlane.xlu0 %2324
    %v2326 = vsel %vm431, %v2310, 0.0
    %2327 = vadd.xlane.f32.xlu0 %v2326
    %v2328 = vpop.xlane.xlu0 %2327
    %v2329 = vsel %vm431, %v2311, 0.0
    %2330 = vadd.xlane.f32.xlu0 %v2329
    %v2331 = vpop.xlane.xlu0 %2330
    %v2332 = vsel %vm431, %v2312, 0.0
    %2333 = vadd.xlane.f32.xlu0 %v2332
    %v2334 = vpop.xlane.xlu0 %2333
    %v2335 = vsel %vm431, %v2313, 0.0
    %2336 = vadd.xlane.f32.xlu0 %v2335
    %v2337 = vpop.xlane.xlu0 %2336
    %v2338 = vmul.f32 %v2316, %v1216
    %v2339 = vmul.f32 %v2319, %v1216
    %v2340 = vmul.f32 %v2322, %v1216
    %v2341 = vmul.f32 %v2325, %v1216
    %v2342 = vmul.f32 %v2328, %v1216
    %v2343 = vmul.f32 %v2331, %v1216
    %v2344 = vmul.f32 %v2334, %v1216
    %v2345 = vmul.f32 %v2337, %v1216
    %v2346 = vmul.f32 %v2298, %v2298
    %v2347 = vmul.f32 %v2299, %v2299
    %v2348 = vmul.f32 %v2300, %v2300
    %v2349 = vmul.f32 %v2301, %v2301
    %v2350 = vmul.f32 %v2302, %v2302
    %v2351 = vmul.f32 %v2303, %v2303
    %v2352 = vmul.f32 %v2304, %v2304
    %v2353 = vmul.f32 %v2305, %v2305
    %v2354 = vsub.f32 %v2338, %v2346
    %v2355 = vsub.f32 %v2339, %v2347
    %v2356 = vsub.f32 %v2340, %v2348
    %v2357 = vsub.f32 %v2341, %v2349
    %v2358 = vsub.f32 %v2342, %v2350
    %v2359 = vsub.f32 %v2343, %v2351
    %v2360 = vsub.f32 %v2344, %v2352
    %v2361 = vsub.f32 %v2345, %v2353
    %v2362 = vmax.f32 %v2354, 0.0
    %v2363 = vmax.f32 %v2355, 0.0
    %v2364 = vmax.f32 %v2356, 0.0
    %v2365 = vmax.f32 %v2357, 0.0
    %v2366 = vmax.f32 %v2358, 0.0
    %v2367 = vmax.f32 %v2359, 0.0
    %v2368 = vmax.f32 %v2360, 0.0
    %v2369 = vmax.f32 %v2361, 0.0
    %v2370 = vsub.f32 %v2264, %v2298
    %v2371 = vsub.f32 %v2265, %v2299
    %v2372 = vsub.f32 %v2266, %v2300
    %v2373 = vsub.f32 %v2267, %v2301
    %v2374 = vsub.f32 %v2268, %v2302
    %v2375 = vsub.f32 %v2269, %v2303
    %v2376 = vsub.f32 %v2270, %v2304
    %v2377 = vsub.f32 %v2271, %v2305
    %v2378 = vadd.f32 %v2362, 1e-05
    %v2379 = vadd.f32 %v2363, 1e-05
    %v2380 = vadd.f32 %v2364, 1e-05
    %v2381 = vadd.f32 %v2365, 1e-05
    %v2382 = vadd.f32 %v2366, 1e-05
    %v2383 = vadd.f32 %v2367, 1e-05
    %v2384 = vadd.f32 %v2368, 1e-05
    %v2385 = vadd.f32 %v2369, 1e-05
    %v2386 = vrsqrt.pop %v2378
    %v2387 = vrsqrt.pop %v2379
    %v2388 = vrsqrt.pop %v2380
    %v2389 = vrsqrt.pop %v2381
    %v2390 = vrsqrt.pop %v2382
    %v2391 = vrsqrt.pop %v2383
    %v2392 = vrsqrt.pop %v2384
    %v2393 = vrsqrt.pop %v2385
    %v2394 = vmul.f32 %v2370, %v2386
    %v2395 = vmul.f32 %v2371, %v2387
    %v2396 = vmul.f32 %v2372, %v2388
    %v2397 = vmul.f32 %v2373, %v2389
    %v2398 = vmul.f32 %v2374, %v2390
    %v2399 = vmul.f32 %v2375, %v2391
    %v2400 = vmul.f32 %v2376, %v2392
    %v2401 = vmul.f32 %v2377, %v2393
    %v2403 = vlaneseq
    %v2404 = vshrl.u32 %v2403, 7
    %v2405 = vsub.s32 0, %v2404
    %v2406 = vrot.slane %v2272, %v2405
    %v2408 = vmul.f32 %v2394, %v2406
    %v2409 = vmul.f32 %v2395, %v2406
    %v2410 = vmul.f32 %v2396, %v2406
    %v2411 = vmul.f32 %v2397, %v2406
    %v2412 = vmul.f32 %v2398, %v2406
    %v2413 = vmul.f32 %v2399, %v2406
    %v2414 = vmul.f32 %v2400, %v2406
    %v2415 = vmul.f32 %v2401, %v2406
    %v2417 = vlaneseq
    %v2418 = vshrl.u32 %v2417, 7
    %v2419 = vsub.s32 0, %v2418
    %v2420 = vrot.slane %v2273, %v2419
    %v2422 = vadd.f32 %v2408, %v2420
    %v2423 = vadd.f32 %v2409, %v2420
    %v2424 = vadd.f32 %v2410, %v2420
    %v2425 = vadd.f32 %v2411, %v2420
    %v2426 = vadd.f32 %v2412, %v2420
    %v2427 = vadd.f32 %v2413, %v2420
    %v2428 = vadd.f32 %v2414, %v2420
    %v2429 = vadd.f32 %v2415, %v2420
    %v2430 = vpack.c.bf16 %v2423, %v2422
    %v2431 = vpack.c.bf16 %v2425, %v2424
    %v2432 = vpack.c.bf16 %v2427, %v2426
    %v2433 = vpack.c.bf16 %v2429, %v2428
    %v2434 = vld [vmem:[%s31] sm:$0xff]
    %v2435 = vld [vmem:[%s31 + $0x8] sm:$0xff]
    %v2436 = vld [vmem:[%s31 + $0x10] sm:$0xff]
    %v2437 = vld [vmem:[%s31 + $0x18] sm:$0xff]
    %v2438 = vld [vmem:[%s31 + $0x20] sm:$0xff]
    %v2439 = vld [vmem:[%s31 + $0x28] sm:$0xff]
    %v2440 = vld [vmem:[%s31 + $0x30] sm:$0xff]
    %v2441 = vld [vmem:[%s31 + $0x38] sm:$0xff]
    %v2442 = vld [vmem:[#allocation19] sm:$0x3]
    %v2444 = vlaneseq
    %v2445 = vshrl.u32 %v2444, 7
    %v2446 = vsub.s32 0, %v2445
    %v2447 = vrot.slane %v2442, %v2446
    %v2448 = vlaneseq
    %v2449 = vshrl.u32 %v2448, 7
    %v2450 = vsub.s32 1, %v2449
    %v2451 = vrot.slane %v2442, %v2450
    %v2462 = vunpack.c.l.b16 %v2434
    %v2463 = vunpack.c.h.b16 %v2434
    %v2464 = vunpack.c.l.b16 %v2435
    %v2465 = vunpack.c.h.b16 %v2435
    %v2466 = vunpack.c.l.b16 %v2436
    %v2467 = vunpack.c.h.b16 %v2436
    %v2468 = vunpack.c.l.b16 %v2437
    %v2469 = vunpack.c.h.b16 %v2437
    %v2470 = vunpack.c.l.b16 %v2438
    %v2471 = vunpack.c.h.b16 %v2438
    %v2472 = vunpack.c.l.b16 %v2439
    %v2473 = vunpack.c.h.b16 %v2439
    %v2474 = vunpack.c.l.b16 %v2440
    %v2475 = vunpack.c.h.b16 %v2440
    %v2476 = vunpack.c.l.b16 %v2441
    %v2477 = vunpack.c.h.b16 %v2441
    %v2478 = vpack.c.b16 %v2464, %v2462
    %v2479 = vpack.c.b16 %v2465, %v2463
    %v2480 = vpack.c.b16 %v2468, %v2466
    %v2481 = vpack.c.b16 %v2469, %v2467
    %v2482 = vpack.c.b16 %v2472, %v2470
    %v2483 = vpack.c.b16 %v2473, %v2471
    %v2484 = vpack.c.b16 %v2476, %v2474
    %v2485 = vpack.c.b16 %v2477, %v2475
    %v2495 = vsel %vm431, %v2430, 0
    %v2498 = vsel %vm431, %v2431, 0
    %v2501 = vsel %vm431, %v2432, 0
    %v2504 = vsel %vm431, %v2433, 0
    %2506 = vmatprep.subr.bf16.mxu0 %v2479
    %2507 = vmatpush1.bf16.msra.mxu0 %v2478
    %2508 = vmatprep.subr.bf16.mxu0 %v2481
    %2509 = vmatpush1.bf16.msra.mxu0 %v2480
    %2510 = vmatprep.subr.bf16.mxu0 %v2483
    %2511 = vmatpush1.bf16.msra.mxu0 %v2482
    %2512 = vmatprep.subr.bf16.mxu0 %v2485
    %2513 = vmatpush1.bf16.msra.mxu0 %v2484
    %2514 = vmatprep.subr.bf16.mxu0 0
    %2515 = vmatpush1.bf16.msra.mxu0 0
    %2516 = vmatprep.subr.bf16.mxu0 0
    %2517 = vmatpush1.bf16.msra.mxu0 0
    %2518 = vmatprep.subr.bf16.mxu0 0
    %2519 = vmatpush1.bf16.msra.mxu0 0
    %2520 = vmatprep.subr.bf16.mxu0 0
    %2521 = vmatpush1.bf16.msra.mxu0 0
    %2522 = vmatprep.subr.bf16.mxu0 0
    %2523 = vmatpush1.bf16.msra.mxu0 0
    %2524 = vmatprep.subr.bf16.mxu0 0
    %2525 = vmatpush1.bf16.msra.mxu0 0
    %2526 = vmatprep.subr.bf16.mxu0 0
    %2527 = vmatpush1.bf16.msra.mxu0 0
    %2528 = vmatprep.subr.bf16.mxu0 0
    %2529 = vmatpush1.bf16.msra.mxu0 0
    %2530 = vmatprep.subr.bf16.mxu0 0
    %2531 = vmatpush1.bf16.msra.mxu0 0
    %2532 = vmatprep.subr.bf16.mxu0 0
    %2533 = vmatpush1.bf16.msra.mxu0 0
    %2534 = vmatprep.subr.bf16.mxu0 0
    %2535 = vmatpush1.bf16.msra.mxu0 0
    %2536 = vmatprep.subr.bf16.mxu0 0
    %2537 = vmatpush1.bf16.msra.mxu0 0
    %2538 = vmatprep.mubr.bf16.mxu0 0
    %2539 = vmatmul.mubr.bf16.gmra.mrb[0].mxu0 %v2495
    %v2540 = vpop.f32.mrb[0].mxu0
    %v2541 = vadd.f32 %v2447, %v2540
    %v2542 = vpop.f32.mrb[0].mxu0
    %v2543 = vadd.f32 %v2451, %v2542
    %v2544 = vpop.f32.mrb[0].mxu0
    %v2545 = vadd.f32 %v2447, %v2544
    %v2546 = vpop.f32.mrb[0].mxu0
    %v2547 = vadd.f32 %v2451, %v2546
    %2548 = vmatprep.mubr.bf16.mxu0 0
    %2549 = vmatmul.mubr.bf16.gmra.mrb[0].mxu0 %v2498
    %v2550 = vpop.f32.mrb[0].mxu0
    %v2551 = vadd.f32 %v2447, %v2550
    %v2552 = vpop.f32.mrb[0].mxu0
    %v2553 = vadd.f32 %v2451, %v2552
    %v2554 = vpop.f32.mrb[0].mxu0
    %v2555 = vadd.f32 %v2447, %v2554
    %v2556 = vpop.f32.mrb[0].mxu0
    %v2557 = vadd.f32 %v2451, %v2556
    %2558 = vmatprep.mubr.bf16.mxu0 0
    %2559 = vmatmul.mubr.bf16.gmra.mrb[0].mxu0 %v2501
    %v2560 = vpop.f32.mrb[0].mxu0
    %v2561 = vadd.f32 %v2447, %v2560
    %v2562 = vpop.f32.mrb[0].mxu0
    %v2563 = vadd.f32 %v2451, %v2562
    %v2564 = vpop.f32.mrb[0].mxu0
    %v2565 = vadd.f32 %v2447, %v2564
    %v2566 = vpop.f32.mrb[0].mxu0
    %v2567 = vadd.f32 %v2451, %v2566
    %2568 = vmatprep.mubr.bf16.mxu0 0
    %2569 = vmatmul.mubr.bf16.gmra.mrb[0].mxu0 %v2504
    %v2570 = vpop.f32.mrb[0].mxu0
    %v2571 = vadd.f32 %v2447, %v2570
    %v2572 = vpop.f32.mrb[0].mxu0
    %v2573 = vadd.f32 %v2451, %v2572
    %v2574 = vpop.f32.mrb[0].mxu0
    %v2575 = vadd.f32 %v2447, %v2574
    %v2576 = vpop.f32.mrb[0].mxu0
    %v2577 = vadd.f32 %v2451, %v2576
    %2578 = vdwg.mxu0
    %v2579 = vmul.f32 %v2541, %v2541
    %v2580 = vmul.f32 %v2543, %v2543
    %v2581 = vmul.f32 %v2545, %v2545
    %v2582 = vmul.f32 %v2547, %v2547
    %v2583 = vmul.f32 %v2551, %v2551
    %v2584 = vmul.f32 %v2553, %v2553
    %v2585 = vmul.f32 %v2555, %v2555
    %v2586 = vmul.f32 %v2557, %v2557
    %v2587 = vmul.f32 %v2561, %v2561
    %v2588 = vmul.f32 %v2563, %v2563
    %v2589 = vmul.f32 %v2565, %v2565
    %v2590 = vmul.f32 %v2567, %v2567
    %v2591 = vmul.f32 %v2571, %v2571
    %v2592 = vmul.f32 %v2573, %v2573
    %v2593 = vmul.f32 %v2575, %v2575
    %v2594 = vmul.f32 %v2577, %v2577
    %v2595 = vmul.f32 %v2541, %v2579
    %v2596 = vmul.f32 %v2543, %v2580
    %v2597 = vmul.f32 %v2545, %v2581
    %v2598 = vmul.f32 %v2547, %v2582
    %v2599 = vmul.f32 %v2551, %v2583
    %v2600 = vmul.f32 %v2553, %v2584
    %v2601 = vmul.f32 %v2555, %v2585
    %v2602 = vmul.f32 %v2557, %v2586
    %v2603 = vmul.f32 %v2561, %v2587
    %v2604 = vmul.f32 %v2563, %v2588
    %v2605 = vmul.f32 %v2565, %v2589
    %v2606 = vmul.f32 %v2567, %v2590
    %v2607 = vmul.f32 %v2571, %v2591
    %v2608 = vmul.f32 %v2573, %v2592
    %v2609 = vmul.f32 %v2575, %v2593
    %v2610 = vmul.f32 %v2577, %v2594
    %v2611 = vmul.f32 %v2595, 0.044715
    %v2612 = vmul.f32 %v2596, 0.044715
    %v2613 = vmul.f32 %v2597, 0.044715
    %v2614 = vmul.f32 %v2598, 0.044715
    %v2615 = vmul.f32 %v2599, 0.044715
    %v2616 = vmul.f32 %v2600, 0.044715
    %v2617 = vmul.f32 %v2601, 0.044715
    %v2618 = vmul.f32 %v2602, 0.044715
    %v2619 = vmul.f32 %v2603, 0.044715
    %v2620 = vmul.f32 %v2604, 0.044715
    %v2621 = vmul.f32 %v2605, 0.044715
    %v2622 = vmul.f32 %v2606, 0.044715
    %v2623 = vmul.f32 %v2607, 0.044715
    %v2624 = vmul.f32 %v2608, 0.044715
    %v2625 = vmul.f32 %v2609, 0.044715
    %v2626 = vmul.f32 %v2610, 0.044715
    %v2627 = vadd.f32 %v2541, %v2611
    %v2628 = vadd.f32 %v2543, %v2612
    %v2629 = vadd.f32 %v2545, %v2613
    %v2630 = vadd.f32 %v2547, %v2614
    %v2631 = vadd.f32 %v2551, %v2615
    %v2632 = vadd.f32 %v2553, %v2616
    %v2633 = vadd.f32 %v2555, %v2617
    %v2634 = vadd.f32 %v2557, %v2618
    %v2635 = vadd.f32 %v2561, %v2619
    %v2636 = vadd.f32 %v2563, %v2620
    %v2637 = vadd.f32 %v2565, %v2621
    %v2638 = vadd.f32 %v2567, %v2622
    %v2639 = vadd.f32 %v2571, %v2623
    %v2640 = vadd.f32 %v2573, %v2624
    %v2641 = vadd.f32 %v2575, %v2625
    %v2642 = vadd.f32 %v2577, %v2626
    %v2643 = vmul.f32 %v2627, 0.7978846
    %v2644 = vmul.f32 %v2628, 0.7978846
    %v2645 = vmul.f32 %v2629, 0.7978846
    %v2646 = vmul.f32 %v2630, 0.7978846
    %v2647 = vmul.f32 %v2631, 0.7978846
    %v2648 = vmul.f32 %v2632, 0.7978846
    %v2649 = vmul.f32 %v2633, 0.7978846
    %v2650 = vmul.f32 %v2634, 0.7978846
    %v2651 = vmul.f32 %v2635, 0.7978846
    %v2652 = vmul.f32 %v2636, 0.7978846
    %v2653 = vmul.f32 %v2637, 0.7978846
    %v2654 = vmul.f32 %v2638, 0.7978846
    %v2655 = vmul.f32 %v2639, 0.7978846
    %v2656 = vmul.f32 %v2640, 0.7978846
    %v2657 = vmul.f32 %v2641, 0.7978846
    %v2658 = vmul.f32 %v2642, 0.7978846
    %v2659 = vtanh.pop %v2643
    %v2660 = vtanh.pop %v2644
    %v2661 = vtanh.pop %v2645
    %v2662 = vtanh.pop %v2646
    %v2663 = vtanh.pop %v2647
    %v2664 = vtanh.pop %v2648
    %v2665 = vtanh.pop %v2649
    %v2666 = vtanh.pop %v2650
    %v2667 = vtanh.pop %v2651
    %v2668 = vtanh.pop %v2652
    %v2669 = vtanh.pop %v2653
    %v2670 = vtanh.pop %v2654
    %v2671 = vtanh.pop %v2655
    %v2672 = vtanh.pop %v2656
    %v2673 = vtanh.pop %v2657
    %v2674 = vtanh.pop %v2658
    %v2675 = vadd.f32 %v2659, 1.0
    %v2676 = vadd.f32 %v2660, 1.0
    %v2677 = vadd.f32 %v2661, 1.0
    %v2678 = vadd.f32 %v2662, 1.0
    %v2679 = vadd.f32 %v2663, 1.0
    %v2680 = vadd.f32 %v2664, 1.0
    %v2681 = vadd.f32 %v2665, 1.0
    %v2682 = vadd.f32 %v2666, 1.0
    %v2683 = vadd.f32 %v2667, 1.0
    %v2684 = vadd.f32 %v2668, 1.0
    %v2685 = vadd.f32 %v2669, 1.0
    %v2686 = vadd.f32 %v2670, 1.0
    %v2687 = vadd.f32 %v2671, 1.0
    %v2688 = vadd.f32 %v2672, 1.0
    %v2689 = vadd.f32 %v2673, 1.0
    %v2690 = vadd.f32 %v2674, 1.0
    %v2691 = vmul.f32 %v2675, 0.5
    %v2692 = vmul.f32 %v2676, 0.5
    %v2693 = vmul.f32 %v2677, 0.5
    %v2694 = vmul.f32 %v2678, 0.5
    %v2695 = vmul.f32 %v2679, 0.5
    %v2696 = vmul.f32 %v2680, 0.5
    %v2697 = vmul.f32 %v2681, 0.5
    %v2698 = vmul.f32 %v2682, 0.5
    %v2699 = vmul.f32 %v2683, 0.5
    %v2700 = vmul.f32 %v2684, 0.5
    %v2701 = vmul.f32 %v2685, 0.5
    %v2702 = vmul.f32 %v2686, 0.5
    %v2703 = vmul.f32 %v2687, 0.5
    %v2704 = vmul.f32 %v2688, 0.5
    %v2705 = vmul.f32 %v2689, 0.5
    %v2706 = vmul.f32 %v2690, 0.5
    %v2707 = vmul.f32 %v2541, %v2691
    %v2708 = vmul.f32 %v2543, %v2692
    %v2709 = vmul.f32 %v2545, %v2693
    %v2710 = vmul.f32 %v2547, %v2694
    %v2711 = vmul.f32 %v2551, %v2695
    %v2712 = vmul.f32 %v2553, %v2696
    %v2713 = vmul.f32 %v2555, %v2697
    %v2714 = vmul.f32 %v2557, %v2698
    %v2715 = vmul.f32 %v2561, %v2699
    %v2716 = vmul.f32 %v2563, %v2700
    %v2717 = vmul.f32 %v2565, %v2701
    %v2718 = vmul.f32 %v2567, %v2702
    %v2719 = vmul.f32 %v2571, %v2703
    %v2720 = vmul.f32 %v2573, %v2704
    %v2721 = vmul.f32 %v2575, %v2705
    %v2722 = vmul.f32 %v2577, %v2706
    %v2723 = vpack.c.bf16 %v2709, %v2707
    %v2724 = vpack.c.bf16 %v2710, %v2708
    %v2725 = vpack.c.bf16 %v2713, %v2711
    %v2726 = vpack.c.bf16 %v2714, %v2712
    %v2727 = vpack.c.bf16 %v2717, %v2715
    %v2728 = vpack.c.bf16 %v2718, %v2716
    %v2729 = vpack.c.bf16 %v2721, %v2719
    %v2730 = vpack.c.bf16 %v2722, %v2720
    %v2731 = vld [vmem:[%s35] sm:$0xf]
    %v2732 = vld [vmem:[%s35 + $0x4] sm:$0xf]
    %v2733 = vld [vmem:[%s35 + $0x8] sm:$0xf]
    %v2734 = vld [vmem:[%s35 + $0xc] sm:$0xf]
    %v2735 = vld [vmem:[%s35 + $0x10] sm:$0xf]
    %v2736 = vld [vmem:[%s35 + $0x14] sm:$0xf]
    %v2737 = vld [vmem:[%s35 + $0x18] sm:$0xf]
    %v2738 = vld [vmem:[%s35 + $0x1c] sm:$0xf]
    %v2739 = vld [vmem:[%s35 + $0x20] sm:$0xf]
    %v2740 = vld [vmem:[%s35 + $0x24] sm:$0xf]
    %v2741 = vld [vmem:[%s35 + $0x28] sm:$0xf]
    %v2742 = vld [vmem:[%s35 + $0x2c] sm:$0xf]
    %v2743 = vld [vmem:[%s35 + $0x30] sm:$0xf]
    %v2744 = vld [vmem:[%s35 + $0x34] sm:$0xf]
    %v2745 = vld [vmem:[%s35 + $0x38] sm:$0xf]
    %v2746 = vld [vmem:[%s35 + $0x3c] sm:$0xf]
    %v2747 = vld [vmem:[%s35 + $0x40] sm:$0xf]
    %v2748 = vld [vmem:[%s35 + $0x44] sm:$0xf]
    %v2749 = vld [vmem:[%s35 + $0x48] sm:$0xf]
    %v2750 = vld [vmem:[%s35 + $0x4c] sm:$0xf]
    %v2751 = vld [vmem:[%s35 + $0x50] sm:$0xf]
    %v2752 = vld [vmem:[%s35 + $0x54] sm:$0xf]
    %v2753 = vld [vmem:[%s35 + $0x58] sm:$0xf]
    %v2754 = vld [vmem:[%s35 + $0x5c] sm:$0xf]
    %v2755 = vld [vmem:[%s35 + $0x60] sm:$0xf]
    %v2756 = vld [vmem:[%s35 + $0x64] sm:$0xf]
    %v2757 = vld [vmem:[%s35 + $0x68] sm:$0xf]
    %v2758 = vld [vmem:[%s35 + $0x6c] sm:$0xf]
    %v2759 = vld [vmem:[%s35 + $0x70] sm:$0xf]
    %v2760 = vld [vmem:[%s35 + $0x74] sm:$0xf]
    %v2761 = vld [vmem:[%s35 + $0x78] sm:$0xf]
    %v2762 = vld [vmem:[%s35 + $0x7c] sm:$0xf]
    %v2763 = vld [vmem:[%s37] sm:$0x1]
    %v2765 = vlaneseq
    %v2766 = vshrl.u32 %v2765, 7
    %v2767 = vsub.s32 0, %v2766
    %v2768 = vrot.slane %v2763, %v2767
    %v2802 = vunpack.c.l.b16 %v2731
    %v2803 = vunpack.c.l.b16 %v2732
    %v2804 = vunpack.c.l.b16 %v2733
    %v2805 = vunpack.c.l.b16 %v2734
    %v2806 = vunpack.c.l.b16 %v2735
    %v2807 = vunpack.c.l.b16 %v2736
    %v2808 = vunpack.c.l.b16 %v2737
    %v2809 = vunpack.c.l.b16 %v2738
    %v2810 = vunpack.c.l.b16 %v2739
    %v2811 = vunpack.c.l.b16 %v2740
    %v2812 = vunpack.c.l.b16 %v2741
    %v2813 = vunpack.c.l.b16 %v2742
    %v2814 = vunpack.c.l.b16 %v2743
    %v2815 = vunpack.c.l.b16 %v2744
    %v2816 = vunpack.c.l.b16 %v2745
    %v2817 = vunpack.c.l.b16 %v2746
    %v2818 = vunpack.c.l.b16 %v2747
    %v2819 = vunpack.c.l.b16 %v2748
    %v2820 = vunpack.c.l.b16 %v2749
    %v2821 = vunpack.c.l.b16 %v2750
    %v2822 = vunpack.c.l.b16 %v2751
    %v2823 = vunpack.c.l.b16 %v2752
    %v2824 = vunpack.c.l.b16 %v2753
    %v2825 = vunpack.c.l.b16 %v2754
    %v2826 = vunpack.c.l.b16 %v2755
    %v2827 = vunpack.c.l.b16 %v2756
    %v2828 = vunpack.c.l.b16 %v2757
    %v2829 = vunpack.c.l.b16 %v2758
    %v2830 = vunpack.c.l.b16 %v2759
    %v2831 = vunpack.c.l.b16 %v2760
    %v2832 = vunpack.c.l.b16 %v2761
    %v2833 = vunpack.c.l.b16 %v2762
    %v2834 = vpack.c.b16 %v2803, %v2802
    %v2835 = vpack.c.b16 %v2805, %v2804
    %v2836 = vpack.c.b16 %v2807, %v2806
    %v2837 = vpack.c.b16 %v2809, %v2808
    %v2838 = vpack.c.b16 %v2811, %v2810
    %v2839 = vpack.c.b16 %v2813, %v2812
    %v2840 = vpack.c.b16 %v2815, %v2814
    %v2841 = vpack.c.b16 %v2817, %v2816
    %v2842 = vpack.c.b16 %v2819, %v2818
    %v2843 = vpack.c.b16 %v2821, %v2820
    %v2844 = vpack.c.b16 %v2823, %v2822
    %v2845 = vpack.c.b16 %v2825, %v2824
    %v2846 = vpack.c.b16 %v2827, %v2826
    %v2847 = vpack.c.b16 %v2829, %v2828
    %v2848 = vpack.c.b16 %v2831, %v2830
    %v2849 = vpack.c.b16 %v2833, %v2832
    %2866 = vmatprep.subr.bf16.mxu0 0
    %2867 = vmatpush1.bf16.msra.mxu0 %v2834
    %2868 = vmatprep.subr.bf16.mxu0 0
    %2869 = vmatpush1.bf16.msra.mxu0 %v2835
    %2870 = vmatprep.subr.bf16.mxu0 0
    %2871 = vmatpush1.bf16.msra.mxu0 %v2836
    %2872 = vmatprep.subr.bf16.mxu0 0
    %2873 = vmatpush1.bf16.msra.mxu0 %v2837
    %2874 = vmatprep.subr.bf16.mxu0 0
    %2875 = vmatpush1.bf16.msra.mxu0 %v2838
    %2876 = vmatprep.subr.bf16.mxu0 0
    %2877 = vmatpush1.bf16.msra.mxu0 %v2839
    %2878 = vmatprep.subr.bf16.mxu0 0
    %2879 = vmatpush1.bf16.msra.mxu0 %v2840
    %2880 = vmatprep.subr.bf16.mxu0 0
    %2881 = vmatpush1.bf16.msra.mxu0 %v2841
    %2882 = vmatprep.subr.bf16.mxu0 0
    %2883 = vmatpush1.bf16.msra.mxu0 %v2842
    %2884 = vmatprep.subr.bf16.mxu0 0
    %2885 = vmatpush1.bf16.msra.mxu0 %v2843
    %2886 = vmatprep.subr.bf16.mxu0 0
    %2887 = vmatpush1.bf16.msra.mxu0 %v2844
    %2888 = vmatprep.subr.bf16.mxu0 0
    %2889 = vmatpush1.bf16.msra.mxu0 %v2845
    %2890 = vmatprep.subr.bf16.mxu0 0
    %2891 = vmatpush1.bf16.msra.mxu0 %v2846
    %2892 = vmatprep.subr.bf16.mxu0 0
    %2893 = vmatpush1.bf16.msra.mxu0 %v2847
    %2894 = vmatprep.subr.bf16.mxu0 0
    %2895 = vmatpush1.bf16.msra.mxu0 %v2848
    %2896 = vmatprep.subr.bf16.mxu0 0
    %2897 = vmatpush1.bf16.msra.mxu0 %v2849
    %2898 = vmatprep.mubr.bf16.mxu0 %v2724
    %2899 = vmatmul.mubr.bf16.gmra.mrb[0].mxu0 %v2723
    %v2900 = vpop.f32.mrb[0].mxu0
    %v2901 = vadd.f32 %v2768, %v2900
    %v2902 = vpop.f32.mrb[0].mxu0
    %v2903 = vpop.f32.mrb[0].mxu0
    %v2904 = vadd.f32 %v2768, %v2903
    %v2905 = vpop.f32.mrb[0].mxu0
    %2906 = vmatprep.mubr.bf16.mxu0 %v2726
    %2907 = vmatmul.mubr.bf16.gmra.mrb[0].mxu0 %v2725
    %v2908 = vpop.f32.mrb[0].mxu0
    %v2909 = vadd.f32 %v2768, %v2908
    %v2910 = vpop.f32.mrb[0].mxu0
    %v2911 = vpop.f32.mrb[0].mxu0
    %v2912 = vadd.f32 %v2768, %v2911
    %v2913 = vpop.f32.mrb[0].mxu0
    %2914 = vmatprep.mubr.bf16.mxu0 %v2728
    %2915 = vmatmul.mubr.bf16.gmra.mrb[0].mxu0 %v2727
    %v2916 = vpop.f32.mrb[0].mxu0
    %v2917 = vadd.f32 %v2768, %v2916
    %v2918 = vpop.f32.mrb[0].mxu0
    %v2919 = vpop.f32.mrb[0].mxu0
    %v2920 = vadd.f32 %v2768, %v2919
    %v2921 = vpop.f32.mrb[0].mxu0
    %2922 = vmatprep.mubr.bf16.mxu0 %v2730
    %2923 = vmatmul.mubr.bf16.gmra.mrb[0].mxu0 %v2729
    %v2924 = vpop.f32.mrb[0].mxu0
    %v2925 = vadd.f32 %v2768, %v2924
    %v2926 = vpop.f32.mrb[0].mxu0
    %v2927 = vpop.f32.mrb[0].mxu0
    %v2928 = vadd.f32 %v2768, %v2927
    %v2929 = vpop.f32.mrb[0].mxu0
    %2930 = vdwg.mxu0
    %v2931 = vadd.f32 %v2422, %v2901
    %v2932 = vadd.f32 %v2423, %v2904
    %v2933 = vadd.f32 %v2424, %v2909
    %v2934 = vadd.f32 %v2425, %v2912
    %v2935 = vadd.f32 %v2426, %v2917
    %v2936 = vadd.f32 %v2427, %v2920
    %v2937 = vadd.f32 %v2428, %v2925
    %v2938 = vadd.f32 %v2429, %v2928
    %v2939 = vld [vmem:[#allocation20] sm:$0x1]
    %v2940 = vld [vmem:[#allocation22] sm:$0x1]
    %v2941 = vsel %vm431, %v2931, 0.0
    %2942 = vadd.xlane.f32.xlu0 %v2941
    %v2943 = vpop.xlane.xlu0 %2942
    %v2944 = vsel %vm431, %v2932, 0.0
    %2945 = vadd.xlane.f32.xlu0 %v2944
    %v2946 = vpop.xlane.xlu0 %2945
    %v2947 = vsel %vm431, %v2933, 0.0
    %2948 = vadd.xlane.f32.xlu0 %v2947
    %v2949 = vpop.xlane.xlu0 %2948
    %v2950 = vsel %vm431, %v2934, 0.0
    %2951 = vadd.xlane.f32.xlu0 %v2950
    %v2952 = vpop.xlane.xlu0 %2951
    %v2953 = vsel %vm431, %v2935, 0.0
    %2954 = vadd.xlane.f32.xlu0 %v2953
    %v2955 = vpop.xlane.xlu0 %2954
    %v2956 = vsel %vm431, %v2936, 0.0
    %2957 = vadd.xlane.f32.xlu0 %v2956
    %v2958 = vpop.xlane.xlu0 %2957
    %v2959 = vsel %vm431, %v2937, 0.0
    %2960 = vadd.xlane.f32.xlu0 %v2959
    %v2961 = vpop.xlane.xlu0 %2960
    %v2962 = vsel %vm431, %v2938, 0.0
    %2963 = vadd.xlane.f32.xlu0 %v2962
    %v2964 = vpop.xlane.xlu0 %2963
    %v2965 = vmul.f32 %v2943, %v1216
    %v2966 = vmul.f32 %v2946, %v1216
    %v2967 = vmul.f32 %v2949, %v1216
    %v2968 = vmul.f32 %v2952, %v1216
    %v2969 = vmul.f32 %v2955, %v1216
    %v2970 = vmul.f32 %v2958, %v1216
    %v2971 = vmul.f32 %v2961, %v1216
    %v2972 = vmul.f32 %v2964, %v1216
    %v2973 = vmul.f32 %v2931, %v2931
    %v2974 = vmul.f32 %v2932, %v2932
    %v2975 = vmul.f32 %v2933, %v2933
    %v2976 = vmul.f32 %v2934, %v2934
    %v2977 = vmul.f32 %v2935, %v2935
    %v2978 = vmul.f32 %v2936, %v2936
    %v2979 = vmul.f32 %v2937, %v2937
    %v2980 = vmul.f32 %v2938, %v2938
    %v2981 = vsel %vm431, %v2973, 0.0
    %2982 = vadd.xlane.f32.xlu0 %v2981
    %v2983 = vpop.xlane.xlu0 %2982
    %v2984 = vsel %vm431, %v2974, 0.0
    %2985 = vadd.xlane.f32.xlu0 %v2984
    %v2986 = vpop.xlane.xlu0 %2985
    %v2987 = vsel %vm431, %v2975, 0.0
    %2988 = vadd.xlane.f32.xlu0 %v2987
    %v2989 = vpop.xlane.xlu0 %2988
    %v2990 = vsel %vm431, %v2976, 0.0
    %2991 = vadd.xlane.f32.xlu0 %v2990
    %v2992 = vpop.xlane.xlu0 %2991
    %v2993 = vsel %vm431, %v2977, 0.0
    %2994 = vadd.xlane.f32.xlu0 %v2993
    %v2995 = vpop.xlane.xlu0 %2994
    %v2996 = vsel %vm431, %v2978, 0.0
    %2997 = vadd.xlane.f32.xlu0 %v2996
    %v2998 = vpop.xlane.xlu0 %2997
    %v2999 = vsel %vm431, %v2979, 0.0
    %3000 = vadd.xlane.f32.xlu0 %v2999
    %v3001 = vpop.xlane.xlu0 %3000
    %v3002 = vsel %vm431, %v2980, 0.0
    %3003 = vadd.xlane.f32.xlu0 %v3002
    %v3004 = vpop.xlane.xlu0 %3003
    %v3005 = vmul.f32 %v2983, %v1216
    %v3006 = vmul.f32 %v2986, %v1216
    %v3007 = vmul.f32 %v2989, %v1216
    %v3008 = vmul.f32 %v2992, %v1216
    %v3009 = vmul.f32 %v2995, %v1216
    %v3010 = vmul.f32 %v2998, %v1216
    %v3011 = vmul.f32 %v3001, %v1216
    %v3012 = vmul.f32 %v3004, %v1216
    %v3013 = vmul.f32 %v2965, %v2965
    %v3014 = vmul.f32 %v2966, %v2966
    %v3015 = vmul.f32 %v2967, %v2967
    %v3016 = vmul.f32 %v2968, %v2968
    %v3017 = vmul.f32 %v2969, %v2969
    %v3018 = vmul.f32 %v2970, %v2970
    %v3019 = vmul.f32 %v2971, %v2971
    %v3020 = vmul.f32 %v2972, %v2972
    %v3021 = vsub.f32 %v3005, %v3013
    %v3022 = vsub.f32 %v3006, %v3014
    %v3023 = vsub.f32 %v3007, %v3015
    %v3024 = vsub.f32 %v3008, %v3016
    %v3025 = vsub.f32 %v3009, %v3017
    %v3026 = vsub.f32 %v3010, %v3018
    %v3027 = vsub.f32 %v3011, %v3019
    %v3028 = vsub.f32 %v3012, %v3020
    %v3029 = vmax.f32 %v3021, 0.0
    %v3030 = vmax.f32 %v3022, 0.0
    %v3031 = vmax.f32 %v3023, 0.0
    %v3032 = vmax.f32 %v3024, 0.0
    %v3033 = vmax.f32 %v3025, 0.0
    %v3034 = vmax.f32 %v3026, 0.0
    %v3035 = vmax.f32 %v3027, 0.0
    %v3036 = vmax.f32 %v3028, 0.0
    %v3037 = vsub.f32 %v2931, %v2965
    %v3038 = vsub.f32 %v2932, %v2966
    %v3039 = vsub.f32 %v2933, %v2967
    %v3040 = vsub.f32 %v2934, %v2968
    %v3041 = vsub.f32 %v2935, %v2969
    %v3042 = vsub.f32 %v2936, %v2970
    %v3043 = vsub.f32 %v2937, %v2971
    %v3044 = vsub.f32 %v2938, %v2972
    %v3045 = vadd.f32 %v3029, 1e-05
    %v3046 = vadd.f32 %v3030, 1e-05
    %v3047 = vadd.f32 %v3031, 1e-05
    %v3048 = vadd.f32 %v3032, 1e-05
    %v3049 = vadd.f32 %v3033, 1e-05
    %v3050 = vadd.f32 %v3034, 1e-05
    %v3051 = vadd.f32 %v3035, 1e-05
    %v3052 = vadd.f32 %v3036, 1e-05
    %v3053 = vrsqrt.pop %v3045
    %v3054 = vrsqrt.pop %v3046
    %v3055 = vrsqrt.pop %v3047
    %v3056 = vrsqrt.pop %v3048
    %v3057 = vrsqrt.pop %v3049
    %v3058 = vrsqrt.pop %v3050
    %v3059 = vrsqrt.pop %v3051
    %v3060 = vrsqrt.pop %v3052
    %v3061 = vmul.f32 %v3037, %v3053
    %v3062 = vmul.f32 %v3038, %v3054
    %v3063 = vmul.f32 %v3039, %v3055
    %v3064 = vmul.f32 %v3040, %v3056
    %v3065 = vmul.f32 %v3041, %v3057
    %v3066 = vmul.f32 %v3042, %v3058
    %v3067 = vmul.f32 %v3043, %v3059
    %v3068 = vmul.f32 %v3044, %v3060
    %v3070 = vlaneseq
    %v3071 = vshrl.u32 %v3070, 7
    %v3072 = vsub.s32 0, %v3071
    %v3073 = vrot.slane %v2939, %v3072
    %v3075 = vmul.f32 %v3061, %v3073
    %v3076 = vmul.f32 %v3062, %v3073
    %v3077 = vmul.f32 %v3063, %v3073
    %v3078 = vmul.f32 %v3064, %v3073
    %v3079 = vmul.f32 %v3065, %v3073
    %v3080 = vmul.f32 %v3066, %v3073
    %v3081 = vmul.f32 %v3067, %v3073
    %v3082 = vmul.f32 %v3068, %v3073
    %v3084 = vlaneseq
    %v3085 = vshrl.u32 %v3084, 7
    %v3086 = vsub.s32 0, %v3085
    %v3087 = vrot.slane %v2940, %v3086
    %v3089 = vadd.f32 %v3075, %v3087
    %v3090 = vadd.f32 %v3076, %v3087
    %v3091 = vadd.f32 %v3077, %v3087
    %v3092 = vadd.f32 %v3078, %v3087
    %v3093 = vadd.f32 %v3079, %v3087
    %v3094 = vadd.f32 %v3080, %v3087
    %v3095 = vadd.f32 %v3081, %v3087
    %v3096 = vadd.f32 %v3082, %v3087
    %v3097 = vpack.c.bf16 %v3090, %v3089
    %v3098 = vpack.c.bf16 %v3092, %v3091
    %v3099 = vpack.c.bf16 %v3094, %v3093
    %v3100 = vpack.c.bf16 %v3096, %v3095
    %s3101 = scalar_lea.vmem %s19, 64
    %v3102 = vld [vmem:[%s3101] sm:$0xff]
    %v3103 = vld [vmem:[%s3101 + $0x8] sm:$0xff]
    %v3104 = vld [vmem:[%s3101 + $0x10] sm:$0xff]
    %v3105 = vld [vmem:[%s3101 + $0x18] sm:$0xff]
    %v3106 = vld [vmem:[%s3101 + $0x20] sm:$0xff]
    %v3107 = vld [vmem:[%s3101 + $0x28] sm:$0xff]
    %v3108 = vld [vmem:[%s3101 + $0x30] sm:$0xff]
    %v3109 = vld [vmem:[%s3101 + $0x38] sm:$0xff]
    %s3110 = scalar_lea.vmem [#allocation13], 2
    %v3111 = vld [vmem:[%s3110] sm:$0x3]
    %v3113 = vlaneseq
    %v3114 = vshrl.u32 %v3113, 7
    %v3115 = vsub.s32 0, %v3114
    %v3116 = vrot.slane %v3111, %v3115
    %v3117 = vlaneseq
    %v3118 = vshrl.u32 %v3117, 7
    %v3119 = vsub.s32 1, %v3118
    %v3120 = vrot.slane %v3111, %v3119
    %v3131 = vunpack.c.l.b16 %v3102
    %v3132 = vunpack.c.h.b16 %v3102
    %v3133 = vunpack.c.l.b16 %v3103
    %v3134 = vunpack.c.h.b16 %v3103
    %v3135 = vunpack.c.l.b16 %v3104
    %v3136 = vunpack.c.h.b16 %v3104
    %v3137 = vunpack.c.l.b16 %v3105
    %v3138 = vunpack.c.h.b16 %v3105
    %v3139 = vunpack.c.l.b16 %v3106
    %v3140 = vunpack.c.h.b16 %v3106
    %v3141 = vunpack.c.l.b16 %v3107
    %v3142 = vunpack.c.h.b16 %v3107
    %v3143 = vunpack.c.l.b16 %v3108
    %v3144 = vunpack.c.h.b16 %v3108
    %v3145 = vunpack.c.l.b16 %v3109
    %v3146 = vunpack.c.h.b16 %v3109
    %v3147 = vpack.c.b16 %v3133, %v3131
    %v3148 = vpack.c.b16 %v3134, %v3132
    %v3149 = vpack.c.b16 %v3137, %v3135
    %v3150 = vpack.c.b16 %v3138, %v3136
    %v3151 = vpack.c.b16 %v3141, %v3139
    %v3152 = vpack.c.b16 %v3142, %v3140
    %v3153 = vpack.c.b16 %v3145, %v3143
    %v3154 = vpack.c.b16 %v3146, %v3144
    %v3164 = vsel %vm431, %v3097, 0
    %v3167 = vsel %vm431, %v3098, 0
    %v3170 = vsel %vm431, %v3099, 0
    %v3173 = vsel %vm431, %v3100, 0
    %3175 = vmatprep.subr.bf16.mxu0 %v3148
    %3176 = vmatpush1.bf16.msra.mxu0 %v3147
    %3177 = vmatprep.subr.bf16.mxu0 %v3150
    %3178 = vmatpush1.bf16.msra.mxu0 %v3149
    %3179 = vmatprep.subr.bf16.mxu0 %v3152
    %3180 = vmatpush1.bf16.msra.mxu0 %v3151
    %3181 = vmatprep.subr.bf16.mxu0 %v3154
    %3182 = vmatpush1.bf16.msra.mxu0 %v3153
    %3183 = vmatprep.subr.bf16.mxu0 0
    %3184 = vmatpush1.bf16.msra.mxu0 0
    %3185 = vmatprep.subr.bf16.mxu0 0
    %3186 = vmatpush1.bf16.msra.mxu0 0
    %3187 = vmatprep.subr.bf16.mxu0 0
    %3188 = vmatpush1.bf16.msra.mxu0 0
    %3189 = vmatprep.subr.bf16.mxu0 0
    %3190 = vmatpush1.bf16.msra.mxu0 0
    %3191 = vmatprep.subr.bf16.mxu0 0
    %3192 = vmatpush1.bf16.msra.mxu0 0
    %3193 = vmatprep.subr.bf16.mxu0 0
    %3194 = vmatpush1.bf16.msra.mxu0 0
    %3195 = vmatprep.subr.bf16.mxu0 0
    %3196 = vmatpush1.bf16.msra.mxu0 0
    %3197 = vmatprep.subr.bf16.mxu0 0
    %3198 = vmatpush1.bf16.msra.mxu0 0
    %3199 = vmatprep.subr.bf16.mxu0 0
    %3200 = vmatpush1.bf16.msra.mxu0 0
    %3201 = vmatprep.subr.bf16.mxu0 0
    %3202 = vmatpush1.bf16.msra.mxu0 0
    %3203 = vmatprep.subr.bf16.mxu0 0
    %3204 = vmatpush1.bf16.msra.mxu0 0
    %3205 = vmatprep.subr.bf16.mxu0 0
    %3206 = vmatpush1.bf16.msra.mxu0 0
    %3207 = vmatprep.mubr.bf16.mxu0 0
    %3208 = vmatmul.mubr.bf16.gmra.mrb[0].mxu0 %v3164
    %v3209 = vpop.f32.mrb[0].mxu0
    %v3210 = vadd.f32 %v3116, %v3209
    %v3211 = vpop.f32.mrb[0].mxu0
    %v3212 = vadd.f32 %v3120, %v3211
    %v3213 = vpop.f32.mrb[0].mxu0
    %v3214 = vadd.f32 %v3116, %v3213
    %v3215 = vpop.f32.mrb[0].mxu0
    %v3216 = vadd.f32 %v3120, %v3215
    %3217 = vmatprep.mubr.bf16.mxu0 0
    %3218 = vmatmul.mubr.bf16.gmra.mrb[0].mxu0 %v3167
    %v3219 = vpop.f32.mrb[0].mxu0
    %v3220 = vadd.f32 %v3116, %v3219
    %v3221 = vpop.f32.mrb[0].mxu0
    %v3222 = vadd.f32 %v3120, %v3221
    %v3223 = vpop.f32.mrb[0].mxu0
    %v3224 = vadd.f32 %v3116, %v3223
    %v3225 = vpop.f32.mrb[0].mxu0
    %v3226 = vadd.f32 %v3120, %v3225
    %3227 = vmatprep.mubr.bf16.mxu0 0
    %3228 = vmatmul.mubr.bf16.gmra.mrb[0].mxu0 %v3170
    %v3229 = vpop.f32.mrb[0].mxu0
    %v3230 = vadd.f32 %v3116, %v3229
    %v3231 = vpop.f32.mrb[0].mxu0
    %v3232 = vadd.f32 %v3120, %v3231
    %v3233 = vpop.f32.mrb[0].mxu0
    %v3234 = vadd.f32 %v3116, %v3233
    %v3235 = vpop.f32.mrb[0].mxu0
    %v3236 = vadd.f32 %v3120, %v3235
    %3237 = vmatprep.mubr.bf16.mxu0 0
    %3238 = vmatmul.mubr.bf16.gmra.mrb[0].mxu0 %v3173
    %v3239 = vpop.f32.mrb[0].mxu0
    %v3240 = vadd.f32 %v3116, %v3239
    %v3241 = vpop.f32.mrb[0].mxu0
    %v3242 = vadd.f32 %v3120, %v3241
    %v3243 = vpop.f32.mrb[0].mxu0
    %v3244 = vadd.f32 %v3116, %v3243
    %v3245 = vpop.f32.mrb[0].mxu0
    %v3246 = vadd.f32 %v3120, %v3245
    %3247 = vdwg.mxu0
    %v3248 = vpack.c.bf16 %v3214, %v3210
    %v3249 = vpack.c.bf16 %v3224, %v3220
    %v3250 = vpack.c.bf16 %v3234, %v3230
    %v3251 = vpack.c.bf16 %v3244, %v3240
    %3260 = vrot.lane.b32.xlu0 %v3210, 64
    %v3261 = vpop.permute.xlu0 %3260
    %3262 = vrot.lane.b32.xlu0 %v3214, 64
    %v3263 = vpop.permute.xlu0 %3262
    %3264 = vrot.lane.b32.xlu0 %v3220, 64
    %v3265 = vpop.permute.xlu0 %3264
    %3266 = vrot.lane.b32.xlu0 %v3224, 64
    %v3267 = vpop.permute.xlu0 %3266
    %3268 = vrot.lane.b32.xlu0 %v3230, 64
    %v3269 = vpop.permute.xlu0 %3268
    %3270 = vrot.lane.b32.xlu0 %v3234, 64
    %v3271 = vpop.permute.xlu0 %3270
    %3272 = vrot.lane.b32.xlu0 %v3240, 64
    %v3273 = vpop.permute.xlu0 %3272
    %3274 = vrot.lane.b32.xlu0 %v3244, 64
    %v3275 = vpop.permute.xlu0 %3274
    %3284 = vxpose.xlu0.b32.start [1/16] %v3261, 128
    %3285 = vxpose.xlu0.b32.cont [2/16] %v3263, 128
    %3286 = vxpose.xlu0.b32.cont [3/16] %v3265, 128
    %3287 = vxpose.xlu0.b32.cont [4/16] %v3267, 128
    %3288 = vxpose.xlu0.b32.cont [5/16] %v3269, 128
    %3289 = vxpose.xlu0.b32.cont [6/16] %v3271, 128
    %3290 = vxpose.xlu0.b32.cont [7/16] %v3273, 128
    %3291 = vxpose.xlu0.b32.cont [8/16] %v3275, 128
    %3292 = vxpose.xlu0.b32.cont [9/16] 0.0, 128
    %3293 = vxpose.xlu0.b32.cont [10/16] 0.0, 128
    %3294 = vxpose.xlu0.b32.cont [11/16] 0.0, 128
    %3295 = vxpose.xlu0.b32.cont [12/16] 0.0, 128
    %3296 = vxpose.xlu0.b32.cont [13/16] 0.0, 128
    %3297 = vxpose.xlu0.b32.cont [14/16] 0.0, 128
    %3298 = vxpose.xlu0.b32.cont [15/16] 0.0, 128
    %3299 = vxpose.xlu0.b32.end [16/16] 0.0, 128
    %v3300 = vpop.trf.xlu0
    %v3301 = vpop.trf.xlu0
    %v3302 = vpop.trf.xlu0
    %v3303 = vpop.trf.xlu0
    %v3304 = vpop.trf.xlu0
    %v3305 = vpop.trf.xlu0
    %v3306 = vpop.trf.xlu0
    %v3307 = vpop.trf.xlu0
    %v3308 = vpop.trf.xlu0
    %v3309 = vpop.trf.xlu0
    %v3310 = vpop.trf.xlu0
    %v3311 = vpop.trf.xlu0
    %v3312 = vpop.trf.xlu0
    %v3313 = vpop.trf.xlu0
    %v3314 = vpop.trf.xlu0
    %v3315 = vpop.trf.xlu0
    %v3316 = vpack.c.bf16 %v3301, %v3300
    %v3317 = vpack.c.bf16 %v3303, %v3302
    %v3318 = vpack.c.bf16 %v3305, %v3304
    %v3319 = vpack.c.bf16 %v3307, %v3306
    %v3320 = vpack.c.bf16 %v3216, %v3212
    %v3321 = vpack.c.bf16 %v3226, %v3222
    %v3322 = vpack.c.bf16 %v3236, %v3232
    %v3323 = vpack.c.bf16 %v3246, %v3242
    %3328 = vrot.lane.b32.xlu0 %v3316, 64
    %v3329 = vpop.permute.xlu0 %3328
    %3330 = vrot.lane.b32.xlu0 %v3317, 64
    %v3331 = vpop.permute.xlu0 %3330
    %3332 = vrot.lane.b32.xlu0 %v3318, 64
    %v3333 = vpop.permute.xlu0 %3332
    %3334 = vrot.lane.b32.xlu0 %v3319, 64
    %v3335 = vpop.permute.xlu0 %3334
    %v3338 = vsel %vm431, %v3316, %v3329
    %v3342 = vsel %vm431, %v3317, %v3331
    %v3346 = vsel %vm431, %v3318, %v3333
    %v3350 = vsel %vm431, %v3319, %v3335
    %v3352 = vmul.bf16 %v3338, %v1626
    %v3353 = vmul.bf16 %v3338, %v1627
    %v3354 = vmul.bf16 %v3342, %v1628
    %v3355 = vmul.bf16 %v3342, %v1629
    %v3356 = vmul.bf16 %v3346, %v1630
    %v3357 = vmul.bf16 %v3346, %v1631
    %v3358 = vmul.bf16 %v3350, %v1632
    %v3359 = vmul.bf16 %v3350, %v1633
    %v3361 = vsel %vm431, %v3248, 0
    %v3364 = vsel %vm431, %v3249, 0
    %v3367 = vsel %vm431, %v3250, 0
    %v3370 = vsel %vm431, %v3251, 0
    %3372 = vmatprep.subr.bf16.mxu0 %v3353
    %3373 = vmatpush1.bf16.msra.mxu0 %v3352
    %3374 = vmatprep.subr.bf16.mxu0 %v3355
    %3375 = vmatpush1.bf16.msra.mxu0 %v3354
    %3376 = vmatprep.subr.bf16.mxu0 %v3357
    %3377 = vmatpush1.bf16.msra.mxu0 %v3356
    %3378 = vmatprep.subr.bf16.mxu0 %v3359
    %3379 = vmatpush1.bf16.msra.mxu0 %v3358
    %3380 = vmatprep.subr.bf16.mxu0 0
    %3381 = vmatpush1.bf16.msra.mxu0 0
    %3382 = vmatprep.subr.bf16.mxu0 0
    %3383 = vmatpush1.bf16.msra.mxu0 0
    %3384 = vmatprep.subr.bf16.mxu0 0
    %3385 = vmatpush1.bf16.msra.mxu0 0
    %3386 = vmatprep.subr.bf16.mxu0 0
    %3387 = vmatpush1.bf16.msra.mxu0 0
    %3388 = vmatprep.subr.bf16.mxu0 0
    %3389 = vmatpush1.bf16.msra.mxu0 0
    %3390 = vmatprep.subr.bf16.mxu0 0
    %3391 = vmatpush1.bf16.msra.mxu0 0
    %3392 = vmatprep.subr.bf16.mxu0 0
    %3393 = vmatpush1.bf16.msra.mxu0 0
    %3394 = vmatprep.subr.bf16.mxu0 0
    %3395 = vmatpush1.bf16.msra.mxu0 0
    %3396 = vmatprep.subr.bf16.mxu0 0
    %3397 = vmatpush1.bf16.msra.mxu0 0
    %3398 = vmatprep.subr.bf16.mxu0 0
    %3399 = vmatpush1.bf16.msra.mxu0 0
    %3400 = vmatprep.subr.bf16.mxu0 0
    %3401 = vmatpush1.bf16.msra.mxu0 0
    %3402 = vmatprep.subr.bf16.mxu0 0
    %3403 = vmatpush1.bf16.msra.mxu0 0
    %3404 = vmatprep.mubr.bf16.mxu0 0
    %3405 = vmatmul.mubr.bf16.gmra.mrb[0].mxu0 %v3361
    %v3406 = vpop.f32.mrb[0].mxu0
    %v3407 = vadd.f32 %v348, %v3406
    %v3408 = vpop.f32.mrb[0].mxu0
    %v3409 = vadd.f32 %v349, %v3408
    %v3410 = vpop.f32.mrb[0].mxu0
    %v3411 = vadd.f32 %v350, %v3410
    %v3412 = vpop.f32.mrb[0].mxu0
    %v3413 = vadd.f32 %v351, %v3412
    %3414 = vmatprep.mubr.bf16.mxu0 0
    %3415 = vmatmul.mubr.bf16.gmra.mrb[0].mxu0 %v3364
    %v3416 = vpop.f32.mrb[0].mxu0
    %v3417 = vadd.f32 %v352, %v3416
    %v3418 = vpop.f32.mrb[0].mxu0
    %v3419 = vadd.f32 %v353, %v3418
    %v3420 = vpop.f32.mrb[0].mxu0
    %v3421 = vadd.f32 %v354, %v3420
    %v3422 = vpop.f32.mrb[0].mxu0
    %v3423 = vadd.f32 %v355, %v3422
    %3424 = vmatprep.mubr.bf16.mxu0 0
    %3425 = vmatmul.mubr.bf16.gmra.mrb[0].mxu0 %v3367
    %v3426 = vpop.f32.mrb[0].mxu0
    %v3427 = vadd.f32 %v356, %v3426
    %v3428 = vpop.f32.mrb[0].mxu0
    %v3429 = vadd.f32 %v357, %v3428
    %v3430 = vpop.f32.mrb[0].mxu0
    %v3431 = vadd.f32 %v358, %v3430
    %v3432 = vpop.f32.mrb[0].mxu0
    %v3433 = vadd.f32 %v359, %v3432
    %3434 = vmatprep.mubr.bf16.mxu0 0
    %3435 = vmatmul.mubr.bf16.gmra.mrb[0].mxu0 %v3370
    %v3436 = vpop.f32.mrb[0].mxu0
    %v3437 = vadd.f32 %v360, %v3436
    %v3438 = vpop.f32.mrb[0].mxu0
    %v3439 = vadd.f32 %v361, %v3438
    %v3440 = vpop.f32.mrb[0].mxu0
    %v3441 = vadd.f32 %v362, %v3440
    %v3442 = vpop.f32.mrb[0].mxu0
    %v3443 = vadd.f32 %v363, %v3442
    %3444 = vdwg.mxu0
    %v3445 = vmax.f32 %v3407, %v3409
    %3446 = vmax.xlane.f32.xlu0 %v3445
    %v3447 = vpop.xlane.xlu0 %3446
    %v3448 = vmax.f32 %v3411, %v3413
    %3449 = vmax.xlane.f32.xlu0 %v3448
    %v3450 = vpop.xlane.xlu0 %3449
    %v3451 = vmax.f32 %v3417, %v3419
    %3452 = vmax.xlane.f32.xlu0 %v3451
    %v3453 = vpop.xlane.xlu0 %3452
    %v3454 = vmax.f32 %v3421, %v3423
    %3455 = vmax.xlane.f32.xlu0 %v3454
    %v3456 = vpop.xlane.xlu0 %3455
    %v3457 = vmax.f32 %v3427, %v3429
    %3458 = vmax.xlane.f32.xlu0 %v3457
    %v3459 = vpop.xlane.xlu0 %3458
    %v3460 = vmax.f32 %v3431, %v3433
    %3461 = vmax.xlane.f32.xlu0 %v3460
    %v3462 = vpop.xlane.xlu0 %3461
    %v3463 = vmax.f32 %v3437, %v3439
    %3464 = vmax.xlane.f32.xlu0 %v3463
    %v3465 = vpop.xlane.xlu0 %3464
    %v3466 = vmax.f32 %v3441, %v3443
    %3467 = vmax.xlane.f32.xlu0 %v3466
    %v3468 = vpop.xlane.xlu0 %3467
    %v3469 = vsub.f32 %v3407, %v3447
    %v3470 = vsub.f32 %v3409, %v3447
    %v3471 = vsub.f32 %v3411, %v3450
    %v3472 = vsub.f32 %v3413, %v3450
    %v3473 = vsub.f32 %v3417, %v3453
    %v3474 = vsub.f32 %v3419, %v3453
    %v3475 = vsub.f32 %v3421, %v3456
    %v3476 = vsub.f32 %v3423, %v3456
    %v3477 = vsub.f32 %v3427, %v3459
    %v3478 = vsub.f32 %v3429, %v3459
    %v3479 = vsub.f32 %v3431, %v3462
    %v3480 = vsub.f32 %v3433, %v3462
    %v3481 = vsub.f32 %v3437, %v3465
    %v3482 = vsub.f32 %v3439, %v3465
    %v3483 = vsub.f32 %v3441, %v3468
    %v3484 = vsub.f32 %v3443, %v3468
    %v3485 = vmul.f32 %v3469, 1.442695
    %v3486 = vpow.pop %v3485
    %v3487 = vmul.f32 %v3470, 1.442695
    %v3488 = vpow.pop %v3487
    %v3489 = vmul.f32 %v3471, 1.442695
    %v3490 = vpow.pop %v3489
    %v3491 = vmul.f32 %v3472, 1.442695
    %v3492 = vpow.pop %v3491
    %v3493 = vmul.f32 %v3473, 1.442695
    %v3494 = vpow.pop %v3493
    %v3495 = vmul.f32 %v3474, 1.442695
    %v3496 = vpow.pop %v3495
    %v3497 = vmul.f32 %v3475, 1.442695
    %v3498 = vpow.pop %v3497
    %v3499 = vmul.f32 %v3476, 1.442695
    %v3500 = vpow.pop %v3499
    %v3501 = vmul.f32 %v3477, 1.442695
    %v3502 = vpow.pop %v3501
    %v3503 = vmul.f32 %v3478, 1.442695
    %v3504 = vpow.pop %v3503
    %v3505 = vmul.f32 %v3479, 1.442695
    %v3506 = vpow.pop %v3505
    %v3507 = vmul.f32 %v3480, 1.442695
    %v3508 = vpow.pop %v3507
    %v3509 = vmul.f32 %v3481, 1.442695
    %v3510 = vpow.pop %v3509
    %v3511 = vmul.f32 %v3482, 1.442695
    %v3512 = vpow.pop %v3511
    %v3513 = vmul.f32 %v3483, 1.442695
    %v3514 = vpow.pop %v3513
    %v3515 = vmul.f32 %v3484, 1.442695
    %v3516 = vpow.pop %v3515
    %v3517 = vpack.c.bf16 %v3490, %v3486
    %v3518 = vpack.c.bf16 %v3492, %v3488
    %v3519 = vpack.c.bf16 %v3498, %v3494
    %v3520 = vpack.c.bf16 %v3500, %v3496
    %v3521 = vpack.c.bf16 %v3506, %v3502
    %v3522 = vpack.c.bf16 %v3508, %v3504
    %v3523 = vpack.c.bf16 %v3514, %v3510
    %v3524 = vpack.c.bf16 %v3516, %v3512
    %v3525 = vmul.bf16 %v3320, %v1879
    %v3526 = vmul.bf16 %v3321, %v1880
    %v3527 = vmul.bf16 %v3322, %v1881
    %v3528 = vmul.bf16 %v3323, %v1882
    %v3529 = vmul.bf16 %v3320, %v1883
    %v3530 = vmul.bf16 %v3321, %v1884
    %v3531 = vmul.bf16 %v3322, %v1885
    %v3532 = vmul.bf16 %v3323, %v1886
    %v3533 = vmul.bf16 %v3320, %v1887
    %v3534 = vmul.bf16 %v3321, %v1888
    %v3535 = vmul.bf16 %v3322, %v1889
    %v3536 = vmul.bf16 %v3323, %v1890
    %v3537 = vmul.bf16 %v3320, %v1891
    %v3538 = vmul.bf16 %v3321, %v1892
    %v3539 = vmul.bf16 %v3322, %v1893
    %v3540 = vmul.bf16 %v3323, %v1894
    %v3542 = vsel %vm431, %v3525, %v1928
    %v3545 = vsel %vm431, %v3526, %v1930
    %v3548 = vsel %vm431, %v3527, %v1932
    %v3551 = vsel %vm431, %v3528, %v1934
    %v3554 = vsel %vm431, %v3529, %v1936
    %v3557 = vsel %vm431, %v3530, %v1938
    %v3560 = vsel %vm431, %v3531, %v1940
    %v3563 = vsel %vm431, %v3532, %v1942
    %v3566 = vsel %vm431, %v3533, %v1944
    %v3569 = vsel %vm431, %v3534, %v1946
    %v3572 = vsel %vm431, %v3535, %v1948
    %v3575 = vsel %vm431, %v3536, %v1950
    %v3578 = vsel %vm431, %v3537, %v1952
    %v3581 = vsel %vm431, %v3538, %v1954
    %v3584 = vsel %vm431, %v3539, %v1956
    %v3587 = vsel %vm431, %v3540, %v1958
    %3589 = vmatprep.subr.bf16.mxu0 0
    %3590 = vmatpush1.bf16.msra.mxu0 %v3542
    %3591 = vmatprep.subr.bf16.mxu0 0
    %3592 = vmatpush1.bf16.msra.mxu0 %v3545
    %3593 = vmatprep.subr.bf16.mxu0 0
    %3594 = vmatpush1.bf16.msra.mxu0 %v3548
    %3595 = vmatprep.subr.bf16.mxu0 0
    %3596 = vmatpush1.bf16.msra.mxu0 %v3551
    %3597 = vmatprep.subr.bf16.mxu0 0
    %3598 = vmatpush1.bf16.msra.mxu0 %v3554
    %3599 = vmatprep.subr.bf16.mxu0 0
    %3600 = vmatpush1.bf16.msra.mxu0 %v3557
    %3601 = vmatprep.subr.bf16.mxu0 0
    %3602 = vmatpush1.bf16.msra.mxu0 %v3560
    %3603 = vmatprep.subr.bf16.mxu0 0
    %3604 = vmatpush1.bf16.msra.mxu0 %v3563
    %3605 = vmatprep.subr.bf16.mxu0 0
    %3606 = vmatpush1.bf16.msra.mxu0 %v3566
    %3607 = vmatprep.subr.bf16.mxu0 0
    %3608 = vmatpush1.bf16.msra.mxu0 %v3569
    %3609 = vmatprep.subr.bf16.mxu0 0
    %3610 = vmatpush1.bf16.msra.mxu0 %v3572
    %3611 = vmatprep.subr.bf16.mxu0 0
    %3612 = vmatpush1.bf16.msra.mxu0 %v3575
    %3613 = vmatprep.subr.bf16.mxu0 0
    %3614 = vmatpush1.bf16.msra.mxu0 %v3578
    %3615 = vmatprep.subr.bf16.mxu0 0
    %3616 = vmatpush1.bf16.msra.mxu0 %v3581
    %3617 = vmatprep.subr.bf16.mxu0 0
    %3618 = vmatpush1.bf16.msra.mxu0 %v3584
    %3619 = vmatprep.subr.bf16.mxu0 0
    %3620 = vmatpush1.bf16.msra.mxu0 %v3587
    %3621 = vmatprep.mubr.bf16.mxu0 %v3518
    %3622 = vmatmul.mubr.bf16.gmra.mrb[0].mxu0 %v3517
    %v3623 = vpop.f32.mrb[0].mxu0
    %v3624 = vadd.f32 0.0, %v3623
    %v3625 = vpop.f32.mrb[0].mxu0
    %v3626 = vpop.f32.mrb[0].mxu0
    %v3627 = vadd.f32 0.0, %v3626
    %v3628 = vpop.f32.mrb[0].mxu0
    %3629 = vmatprep.mubr.bf16.mxu0 %v3520
    %3630 = vmatmul.mubr.bf16.gmra.mrb[0].mxu0 %v3519
    %v3631 = vpop.f32.mrb[0].mxu0
    %v3632 = vadd.f32 0.0, %v3631
    %v3633 = vpop.f32.mrb[0].mxu0
    %v3634 = vpop.f32.mrb[0].mxu0
    %v3635 = vadd.f32 0.0, %v3634
    %v3636 = vpop.f32.mrb[0].mxu0
    %3637 = vmatprep.mubr.bf16.mxu0 %v3522
    %3638 = vmatmul.mubr.bf16.gmra.mrb[0].mxu0 %v3521
    %v3639 = vpop.f32.mrb[0].mxu0
    %v3640 = vadd.f32 0.0, %v3639
    %v3641 = vpop.f32.mrb[0].mxu0
    %v3642 = vpop.f32.mrb[0].mxu0
    %v3643 = vadd.f32 0.0, %v3642
    %v3644 = vpop.f32.mrb[0].mxu0
    %3645 = vmatprep.mubr.bf16.mxu0 %v3524
    %3646 = vmatmul.mubr.bf16.gmra.mrb[0].mxu0 %v3523
    %v3647 = vpop.f32.mrb[0].mxu0
    %v3648 = vadd.f32 0.0, %v3647
    %v3649 = vpop.f32.mrb[0].mxu0
    %v3650 = vpop.f32.mrb[0].mxu0
    %v3651 = vadd.f32 0.0, %v3650
    %v3652 = vpop.f32.mrb[0].mxu0
    %3653 = vdwg.mxu0
    %v3654 = vmax.f32 %v3624, 1e-20
    %v3655 = vmax.f32 %v3627, 1e-20
    %v3656 = vmax.f32 %v3632, 1e-20
    %v3657 = vmax.f32 %v3635, 1e-20
    %v3658 = vmax.f32 %v3640, 1e-20
    %v3659 = vmax.f32 %v3643, 1e-20
    %v3660 = vmax.f32 %v3648, 1e-20
    %v3661 = vmax.f32 %v3651, 1e-20
    %3670 = vrot.lane.b32.xlu0 %v3654, 64
    %v3671 = vpop.permute.xlu0 %3670
    %3672 = vrot.lane.b32.xlu0 %v3655, 64
    %v3673 = vpop.permute.xlu0 %3672
    %3674 = vrot.lane.b32.xlu0 %v3656, 64
    %v3675 = vpop.permute.xlu0 %3674
    %3676 = vrot.lane.b32.xlu0 %v3657, 64
    %v3677 = vpop.permute.xlu0 %3676
    %3678 = vrot.lane.b32.xlu0 %v3658, 64
    %v3679 = vpop.permute.xlu0 %3678
    %3680 = vrot.lane.b32.xlu0 %v3659, 64
    %v3681 = vpop.permute.xlu0 %3680
    %3682 = vrot.lane.b32.xlu0 %v3660, 64
    %v3683 = vpop.permute.xlu0 %3682
    %3684 = vrot.lane.b32.xlu0 %v3661, 64
    %v3685 = vpop.permute.xlu0 %3684
    %v3694 = vrcp.pop %v3671
    %v3695 = vmul.f32 %v3624, %v3694
    %v3696 = vrcp.pop %v3673
    %v3697 = vmul.f32 %v3627, %v3696
    %v3698 = vrcp.pop %v3675
    %v3699 = vmul.f32 %v3632, %v3698
    %v3700 = vrcp.pop %v3677
    %v3701 = vmul.f32 %v3635, %v3700
    %v3702 = vrcp.pop %v3679
    %v3703 = vmul.f32 %v3640, %v3702
    %v3704 = vrcp.pop %v3681
    %v3705 = vmul.f32 %v3643, %v3704
    %v3706 = vrcp.pop %v3683
    %v3707 = vmul.f32 %v3648, %v3706
    %v3708 = vrcp.pop %v3685
    %v3709 = vmul.f32 %v3651, %v3708
    %v3710 = vpack.c.bf16 %v3697, %v3695
    %v3711 = vpack.c.bf16 %v3701, %v3699
    %v3712 = vpack.c.bf16 %v3705, %v3703
    %v3713 = vpack.c.bf16 %v3709, %v3707
    %s3714 = scalar_lea.vmem %s23, 32
    %v3715 = vld [vmem:[%s3714] sm:$0xf]
    %v3716 = vld [vmem:[%s3714 + $0x4] sm:$0xf]
    %v3717 = vld [vmem:[%s3714 + $0x8] sm:$0xf]
    %v3718 = vld [vmem:[%s3714 + $0xc] sm:$0xf]
    %v3719 = vld [vmem:[%s3714 + $0x10] sm:$0xf]
    %v3720 = vld [vmem:[%s3714 + $0x14] sm:$0xf]
    %v3721 = vld [vmem:[%s3714 + $0x18] sm:$0xf]
    %v3722 = vld [vmem:[%s3714 + $0x1c] sm:$0xf]
    %s3723 = scalar_lea.vmem [#allocation14], 1
    %v3724 = vld [vmem:[%s3723] sm:$0x1]
    %v3726 = vlaneseq
    %v3727 = vshrl.u32 %v3726, 7
    %v3728 = vsub.s32 0, %v3727
    %v3729 = vrot.slane %v3724, %v3728
    %v3739 = vunpack.c.l.b16 %v3715
    %v3740 = vunpack.c.l.b16 %v3716
    %v3741 = vunpack.c.l.b16 %v3717
    %v3742 = vunpack.c.l.b16 %v3718
    %v3743 = vunpack.c.l.b16 %v3719
    %v3744 = vunpack.c.l.b16 %v3720
    %v3745 = vunpack.c.l.b16 %v3721
    %v3746 = vunpack.c.l.b16 %v3722
    %v3747 = vpack.c.b16 %v3740, %v3739
    %v3748 = vpack.c.b16 %v3742, %v3741
    %v3749 = vpack.c.b16 %v3744, %v3743
    %v3750 = vpack.c.b16 %v3746, %v3745
    %v3756 = vsel %vm431, %v3710, 0
    %v3759 = vsel %vm431, %v3711, 0
    %v3762 = vsel %vm431, %v3712, 0
    %v3765 = vsel %vm431, %v3713, 0
    %3767 = vmatprep.subr.bf16.mxu0 0
    %3768 = vmatpush1.bf16.msra.mxu0 %v3747
    %3769 = vmatprep.subr.bf16.mxu0 0
    %3770 = vmatpush1.bf16.msra.mxu0 %v3748
    %3771 = vmatprep.subr.bf16.mxu0 0
    %3772 = vmatpush1.bf16.msra.mxu0 %v3749
    %3773 = vmatprep.subr.bf16.mxu0 0
    %3774 = vmatpush1.bf16.msra.mxu0 %v3750
    %3775 = vmatprep.subr.bf16.mxu0 0
    %3776 = vmatpush1.bf16.msra.mxu0 0
    %3777 = vmatprep.subr.bf16.mxu0 0
    %3778 = vmatpush1.bf16.msra.mxu0 0
    %3779 = vmatprep.subr.bf16.mxu0 0
    %3780 = vmatpush1.bf16.msra.mxu0 0
    %3781 = vmatprep.subr.bf16.mxu0 0
    %3782 = vmatpush1.bf16.msra.mxu0 0
    %3783 = vmatprep.subr.bf16.mxu0 0
    %3784 = vmatpush1.bf16.msra.mxu0 0
    %3785 = vmatprep.subr.bf16.mxu0 0
    %3786 = vmatpush1.bf16.msra.mxu0 0
    %3787 = vmatprep.subr.bf16.mxu0 0
    %3788 = vmatpush1.bf16.msra.mxu0 0
    %3789 = vmatprep.subr.bf16.mxu0 0
    %3790 = vmatpush1.bf16.msra.mxu0 0
    %3791 = vmatprep.subr.bf16.mxu0 0
    %3792 = vmatpush1.bf16.msra.mxu0 0
    %3793 = vmatprep.subr.bf16.mxu0 0
    %3794 = vmatpush1.bf16.msra.mxu0 0
    %3795 = vmatprep.subr.bf16.mxu0 0
    %3796 = vmatpush1.bf16.msra.mxu0 0
    %3797 = vmatprep.subr.bf16.mxu0 0
    %3798 = vmatpush1.bf16.msra.mxu0 0
    %3799 = vmatprep.mubr.bf16.mxu0 0
    %3800 = vmatmul.mubr.bf16.gmra.mrb[0].mxu0 %v3756
    %v3801 = vpop.f32.mrb[0].mxu0
    %v3802 = vadd.f32 %v3729, %v3801
    %v3803 = vpop.f32.mrb[0].mxu0
    %v3804 = vpop.f32.mrb[0].mxu0
    %v3805 = vadd.f32 %v3729, %v3804
    %v3806 = vpop.f32.mrb[0].mxu0
    %3807 = vmatprep.mubr.bf16.mxu0 0
    %3808 = vmatmul.mubr.bf16.gmra.mrb[0].mxu0 %v3759
    %v3809 = vpop.f32.mrb[0].mxu0
    %v3810 = vadd.f32 %v3729, %v3809
    %v3811 = vpop.f32.mrb[0].mxu0
    %v3812 = vpop.f32.mrb[0].mxu0
    %v3813 = vadd.f32 %v3729, %v3812
    %v3814 = vpop.f32.mrb[0].mxu0
    %3815 = vmatprep.mubr.bf16.mxu0 0
    %3816 = vmatmul.mubr.bf16.gmra.mrb[0].mxu0 %v3762
    %v3817 = vpop.f32.mrb[0].mxu0
    %v3818 = vadd.f32 %v3729, %v3817
    %v3819 = vpop.f32.mrb[0].mxu0
    %v3820 = vpop.f32.mrb[0].mxu0
    %v3821 = vadd.f32 %v3729, %v3820
    %v3822 = vpop.f32.mrb[0].mxu0
    %3823 = vmatprep.mubr.bf16.mxu0 0
    %3824 = vmatmul.mubr.bf16.gmra.mrb[0].mxu0 %v3765
    %v3825 = vpop.f32.mrb[0].mxu0
    %v3826 = vadd.f32 %v3729, %v3825
    %v3827 = vpop.f32.mrb[0].mxu0
    %v3828 = vpop.f32.mrb[0].mxu0
    %v3829 = vadd.f32 %v3729, %v3828
    %v3830 = vpop.f32.mrb[0].mxu0
    %3831 = vdwg.mxu0
    %v3832 = vadd.f32 %v3089, %v3802
    %v3833 = vadd.f32 %v3090, %v3805
    %v3834 = vadd.f32 %v3091, %v3810
    %v3835 = vadd.f32 %v3092, %v3813
    %v3836 = vadd.f32 %v3093, %v3818
    %v3837 = vadd.f32 %v3094, %v3821
    %v3838 = vadd.f32 %v3095, %v3826
    %v3839 = vadd.f32 %v3096, %v3829
    %s3840 = scalar_lea.vmem [#allocation16], 1
    %v3841 = vld [vmem:[%s3840] sm:$0x1]
    %s3842 = scalar_lea.vmem [#allocation17], 1
    %v3843 = vld [vmem:[%s3842] sm:$0x1]
    %v3844 = vsel %vm431, %v3832, 0.0
    %3845 = vadd.xlane.f32.xlu0 %v3844
    %v3846 = vpop.xlane.xlu0 %3845
    %v3847 = vsel %vm431, %v3833, 0.0
    %3848 = vadd.xlane.f32.xlu0 %v3847
    %v3849 = vpop.xlane.xlu0 %3848
    %v3850 = vsel %vm431, %v3834, 0.0
    %3851 = vadd.xlane.f32.xlu0 %v3850
    %v3852 = vpop.xlane.xlu0 %3851
    %v3853 = vsel %vm431, %v3835, 0.0
    %3854 = vadd.xlane.f32.xlu0 %v3853
    %v3855 = vpop.xlane.xlu0 %3854
    %v3856 = vsel %vm431, %v3836, 0.0
    %3857 = vadd.xlane.f32.xlu0 %v3856
    %v3858 = vpop.xlane.xlu0 %3857
    %v3859 = vsel %vm431, %v3837, 0.0
    %3860 = vadd.xlane.f32.xlu0 %v3859
    %v3861 = vpop.xlane.xlu0 %3860
    %v3862 = vsel %vm431, %v3838, 0.0
    %3863 = vadd.xlane.f32.xlu0 %v3862
    %v3864 = vpop.xlane.xlu0 %3863
    %v3865 = vsel %vm431, %v3839, 0.0
    %3866 = vadd.xlane.f32.xlu0 %v3865
    %v3867 = vpop.xlane.xlu0 %3866
    %v3868 = vmul.f32 %v3846, %v1216
    %v3869 = vmul.f32 %v3849, %v1216
    %v3870 = vmul.f32 %v3852, %v1216
    %v3871 = vmul.f32 %v3855, %v1216
    %v3872 = vmul.f32 %v3858, %v1216
    %v3873 = vmul.f32 %v3861, %v1216
    %v3874 = vmul.f32 %v3864, %v1216
    %v3875 = vmul.f32 %v3867, %v1216
    %v3876 = vmul.f32 %v3832, %v3832
    %v3877 = vmul.f32 %v3833, %v3833
    %v3878 = vmul.f32 %v3834, %v3834
    %v3879 = vmul.f32 %v3835, %v3835
    %v3880 = vmul.f32 %v3836, %v3836
    %v3881 = vmul.f32 %v3837, %v3837
    %v3882 = vmul.f32 %v3838, %v3838
    %v3883 = vmul.f32 %v3839, %v3839
    %v3884 = vsel %vm431, %v3876, 0.0
    %3885 = vadd.xlane.f32.xlu0 %v3884
    %v3886 = vpop.xlane.xlu0 %3885
    %v3887 = vsel %vm431, %v3877, 0.0
    %3888 = vadd.xlane.f32.xlu0 %v3887
    %v3889 = vpop.xlane.xlu0 %3888
    %v3890 = vsel %vm431, %v3878, 0.0
    %3891 = vadd.xlane.f32.xlu0 %v3890
    %v3892 = vpop.xlane.xlu0 %3891
    %v3893 = vsel %vm431, %v3879, 0.0
    %3894 = vadd.xlane.f32.xlu0 %v3893
    %v3895 = vpop.xlane.xlu0 %3894
    %v3896 = vsel %vm431, %v3880, 0.0
    %3897 = vadd.xlane.f32.xlu0 %v3896
    %v3898 = vpop.xlane.xlu0 %3897
    %v3899 = vsel %vm431, %v3881, 0.0
    %3900 = vadd.xlane.f32.xlu0 %v3899
    %v3901 = vpop.xlane.xlu0 %3900
    %v3902 = vsel %vm431, %v3882, 0.0
    %3903 = vadd.xlane.f32.xlu0 %v3902
    %v3904 = vpop.xlane.xlu0 %3903
    %v3905 = vsel %vm431, %v3883, 0.0
    %3906 = vadd.xlane.f32.xlu0 %v3905
    %v3907 = vpop.xlane.xlu0 %3906
    %v3908 = vmul.f32 %v3886, %v1216
    %v3909 = vmul.f32 %v3889, %v1216
    %v3910 = vmul.f32 %v3892, %v1216
    %v3911 = vmul.f32 %v3895, %v1216
    %v3912 = vmul.f32 %v3898, %v1216
    %v3913 = vmul.f32 %v3901, %v1216
    %v3914 = vmul.f32 %v3904, %v1216
    %v3915 = vmul.f32 %v3907, %v1216
    %v3916 = vmul.f32 %v3868, %v3868
    %v3917 = vmul.f32 %v3869, %v3869
    %v3918 = vmul.f32 %v3870, %v3870
    %v3919 = vmul.f32 %v3871, %v3871
    %v3920 = vmul.f32 %v3872, %v3872
    %v3921 = vmul.f32 %v3873, %v3873
    %v3922 = vmul.f32 %v3874, %v3874
    %v3923 = vmul.f32 %v3875, %v3875
    %v3924 = vsub.f32 %v3908, %v3916
    %v3925 = vsub.f32 %v3909, %v3917
    %v3926 = vsub.f32 %v3910, %v3918
    %v3927 = vsub.f32 %v3911, %v3919
    %v3928 = vsub.f32 %v3912, %v3920
    %v3929 = vsub.f32 %v3913, %v3921
    %v3930 = vsub.f32 %v3914, %v3922
    %v3931 = vsub.f32 %v3915, %v3923
    %v3932 = vmax.f32 %v3924, 0.0
    %v3933 = vmax.f32 %v3925, 0.0
    %v3934 = vmax.f32 %v3926, 0.0
    %v3935 = vmax.f32 %v3927, 0.0
    %v3936 = vmax.f32 %v3928, 0.0
    %v3937 = vmax.f32 %v3929, 0.0
    %v3938 = vmax.f32 %v3930, 0.0
    %v3939 = vmax.f32 %v3931, 0.0
    %v3940 = vsub.f32 %v3832, %v3868
    %v3941 = vsub.f32 %v3833, %v3869
    %v3942 = vsub.f32 %v3834, %v3870
    %v3943 = vsub.f32 %v3835, %v3871
    %v3944 = vsub.f32 %v3836, %v3872
    %v3945 = vsub.f32 %v3837, %v3873
    %v3946 = vsub.f32 %v3838, %v3874
    %v3947 = vsub.f32 %v3839, %v3875
    %v3948 = vadd.f32 %v3932, 1e-05
    %v3949 = vadd.f32 %v3933, 1e-05
    %v3950 = vadd.f32 %v3934, 1e-05
    %v3951 = vadd.f32 %v3935, 1e-05
    %v3952 = vadd.f32 %v3936, 1e-05
    %v3953 = vadd.f32 %v3937, 1e-05
    %v3954 = vadd.f32 %v3938, 1e-05
    %v3955 = vadd.f32 %v3939, 1e-05
    %v3956 = vrsqrt.pop %v3948
    %v3957 = vrsqrt.pop %v3949
    %v3958 = vrsqrt.pop %v3950
    %v3959 = vrsqrt.pop %v3951
    %v3960 = vrsqrt.pop %v3952
    %v3961 = vrsqrt.pop %v3953
    %v3962 = vrsqrt.pop %v3954
    %v3963 = vrsqrt.pop %v3955
    %v3964 = vmul.f32 %v3940, %v3956
    %v3965 = vmul.f32 %v3941, %v3957
    %v3966 = vmul.f32 %v3942, %v3958
    %v3967 = vmul.f32 %v3943, %v3959
    %v3968 = vmul.f32 %v3944, %v3960
    %v3969 = vmul.f32 %v3945, %v3961
    %v3970 = vmul.f32 %v3946, %v3962
    %v3971 = vmul.f32 %v3947, %v3963
    %v3973 = vlaneseq
    %v3974 = vshrl.u32 %v3973, 7
    %v3975 = vsub.s32 0, %v3974
    %v3976 = vrot.slane %v3841, %v3975
    %v3978 = vmul.f32 %v3964, %v3976
    %v3979 = vmul.f32 %v3965, %v3976
    %v3980 = vmul.f32 %v3966, %v3976
    %v3981 = vmul.f32 %v3967, %v3976
    %v3982 = vmul.f32 %v3968, %v3976
    %v3983 = vmul.f32 %v3969, %v3976
    %v3984 = vmul.f32 %v3970, %v3976
    %v3985 = vmul.f32 %v3971, %v3976
    %v3987 = vlaneseq
    %v3988 = vshrl.u32 %v3987, 7
    %v3989 = vsub.s32 0, %v3988
    %v3990 = vrot.slane %v3843, %v3989
    %v3992 = vadd.f32 %v3978, %v3990
    %v3993 = vadd.f32 %v3979, %v3990
    %v3994 = vadd.f32 %v3980, %v3990
    %v3995 = vadd.f32 %v3981, %v3990
    %v3996 = vadd.f32 %v3982, %v3990
    %v3997 = vadd.f32 %v3983, %v3990
    %v3998 = vadd.f32 %v3984, %v3990
    %v3999 = vadd.f32 %v3985, %v3990
    %v4000 = vpack.c.bf16 %v3993, %v3992
    %v4001 = vpack.c.bf16 %v3995, %v3994
    %v4002 = vpack.c.bf16 %v3997, %v3996
    %v4003 = vpack.c.bf16 %v3999, %v3998
    %s4004 = scalar_lea.vmem %s31, 64
    %v4005 = vld [vmem:[%s4004] sm:$0xff]
    %v4006 = vld [vmem:[%s4004 + $0x8] sm:$0xff]
    %v4007 = vld [vmem:[%s4004 + $0x10] sm:$0xff]
    %v4008 = vld [vmem:[%s4004 + $0x18] sm:$0xff]
    %v4009 = vld [vmem:[%s4004 + $0x20] sm:$0xff]
    %v4010 = vld [vmem:[%s4004 + $0x28] sm:$0xff]
    %v4011 = vld [vmem:[%s4004 + $0x30] sm:$0xff]
    %v4012 = vld [vmem:[%s4004 + $0x38] sm:$0xff]
    %s4013 = scalar_lea.vmem [#allocation19], 2
    %v4014 = vld [vmem:[%s4013] sm:$0x3]
    %v4016 = vlaneseq
    %v4017 = vshrl.u32 %v4016, 7
    %v4018 = vsub.s32 0, %v4017
    %v4019 = vrot.slane %v4014, %v4018
    %v4020 = vlaneseq
    %v4021 = vshrl.u32 %v4020, 7
    %v4022 = vsub.s32 1, %v4021
    %v4023 = vrot.slane %v4014, %v4022
    %v4034 = vunpack.c.l.b16 %v4005
    %v4035 = vunpack.c.h.b16 %v4005
    %v4036 = vunpack.c.l.b16 %v4006
    %v4037 = vunpack.c.h.b16 %v4006
    %v4038 = vunpack.c.l.b16 %v4007
    %v4039 = vunpack.c.h.b16 %v4007
    %v4040 = vunpack.c.l.b16 %v4008
    %v4041 = vunpack.c.h.b16 %v4008
    %v4042 = vunpack.c.l.b16 %v4009
    %v4043 = vunpack.c.h.b16 %v4009
    %v4044 = vunpack.c.l.b16 %v4010
    %v4045 = vunpack.c.h.b16 %v4010
    %v4046 = vunpack.c.l.b16 %v4011
    %v4047 = vunpack.c.h.b16 %v4011
    %v4048 = vunpack.c.l.b16 %v4012
    %v4049 = vunpack.c.h.b16 %v4012
    %v4050 = vpack.c.b16 %v4036, %v4034
    %v4051 = vpack.c.b16 %v4037, %v4035
    %v4052 = vpack.c.b16 %v4040, %v4038
    %v4053 = vpack.c.b16 %v4041, %v4039
    %v4054 = vpack.c.b16 %v4044, %v4042
    %v4055 = vpack.c.b16 %v4045, %v4043
    %v4056 = vpack.c.b16 %v4048, %v4046
    %v4057 = vpack.c.b16 %v4049, %v4047
    %v4067 = vsel %vm431, %v4000, 0
    %v4070 = vsel %vm431, %v4001, 0
    %v4073 = vsel %vm431, %v4002, 0
    %v4076 = vsel %vm431, %v4003, 0
    %4078 = vmatprep.subr.bf16.mxu0 %v4051
    %4079 = vmatpush1.bf16.msra.mxu0 %v4050
    %4080 = vmatprep.subr.bf16.mxu0 %v4053
    %4081 = vmatpush1.bf16.msra.mxu0 %v4052
    %4082 = vmatprep.subr.bf16.mxu0 %v4055
    %4083 = vmatpush1.bf16.msra.mxu0 %v4054
    %4084 = vmatprep.subr.bf16.mxu0 %v4057
    %4085 = vmatpush1.bf16.msra.mxu0 %v4056
    %4086 = vmatprep.subr.bf16.mxu0 0
    %4087 = vmatpush1.bf16.msra.mxu0 0
    %4088 = vmatprep.subr.bf16.mxu0 0
    %4089 = vmatpush1.bf16.msra.mxu0 0
    %4090 = vmatprep.subr.bf16.mxu0 0
    %4091 = vmatpush1.bf16.msra.mxu0 0
    %4092 = vmatprep.subr.bf16.mxu0 0
    %4093 = vmatpush1.bf16.msra.mxu0 0
    %4094 = vmatprep.subr.bf16.mxu0 0
    %4095 = vmatpush1.bf16.msra.mxu0 0
    %4096 = vmatprep.subr.bf16.mxu0 0
    %4097 = vmatpush1.bf16.msra.mxu0 0
    %4098 = vmatprep.subr.bf16.mxu0 0
    %4099 = vmatpush1.bf16.msra.mxu0 0
    %4100 = vmatprep.subr.bf16.mxu0 0
    %4101 = vmatpush1.bf16.msra.mxu0 0
    %4102 = vmatprep.subr.bf16.mxu0 0
    %4103 = vmatpush1.bf16.msra.mxu0 0
    %4104 = vmatprep.subr.bf16.mxu0 0
    %4105 = vmatpush1.bf16.msra.mxu0 0
    %4106 = vmatprep.subr.bf16.mxu0 0
    %4107 = vmatpush1.bf16.msra.mxu0 0
    %4108 = vmatprep.subr.bf16.mxu0 0
    %4109 = vmatpush1.bf16.msra.mxu0 0
    %4110 = vmatprep.mubr.bf16.mxu0 0
    %4111 = vmatmul.mubr.bf16.gmra.mrb[0].mxu0 %v4067
    %v4112 = vpop.f32.mrb[0].mxu0
    %v4113 = vadd.f32 %v4019, %v4112
    %v4114 = vpop.f32.mrb[0].mxu0
    %v4115 = vadd.f32 %v4023, %v4114
    %v4116 = vpop.f32.mrb[0].mxu0
    %v4117 = vadd.f32 %v4019, %v4116
    %v4118 = vpop.f32.mrb[0].mxu0
    %v4119 = vadd.f32 %v4023, %v4118
    %4120 = vmatprep.mubr.bf16.mxu0 0
    %4121 = vmatmul.mubr.bf16.gmra.mrb[0].mxu0 %v4070
    %v4122 = vpop.f32.mrb[0].mxu0
    %v4123 = vadd.f32 %v4019, %v4122
    %v4124 = vpop.f32.mrb[0].mxu0
    %v4125 = vadd.f32 %v4023, %v4124
    %v4126 = vpop.f32.mrb[0].mxu0
    %v4127 = vadd.f32 %v4019, %v4126
    %v4128 = vpop.f32.mrb[0].mxu0
    %v4129 = vadd.f32 %v4023, %v4128
    %4130 = vmatprep.mubr.bf16.mxu0 0
    %4131 = vmatmul.mubr.bf16.gmra.mrb[0].mxu0 %v4073
    %v4132 = vpop.f32.mrb[0].mxu0
    %v4133 = vadd.f32 %v4019, %v4132
    %v4134 = vpop.f32.mrb[0].mxu0
    %v4135 = vadd.f32 %v4023, %v4134
    %v4136 = vpop.f32.mrb[0].mxu0
    %v4137 = vadd.f32 %v4019, %v4136
    %v4138 = vpop.f32.mrb[0].mxu0
    %v4139 = vadd.f32 %v4023, %v4138
    %4140 = vmatprep.mubr.bf16.mxu0 0
    %4141 = vmatmul.mubr.bf16.gmra.mrb[0].mxu0 %v4076
    %v4142 = vpop.f32.mrb[0].mxu0
    %v4143 = vadd.f32 %v4019, %v4142
    %v4144 = vpop.f32.mrb[0].mxu0
    %v4145 = vadd.f32 %v4023, %v4144
    %v4146 = vpop.f32.mrb[0].mxu0
    %v4147 = vadd.f32 %v4019, %v4146
    %v4148 = vpop.f32.mrb[0].mxu0
    %v4149 = vadd.f32 %v4023, %v4148
    %4150 = vdwg.mxu0
    %v4151 = vmul.f32 %v4113, %v4113
    %v4152 = vmul.f32 %v4115, %v4115
    %v4153 = vmul.f32 %v4117, %v4117
    %v4154 = vmul.f32 %v4119, %v4119
    %v4155 = vmul.f32 %v4123, %v4123
    %v4156 = vmul.f32 %v4125, %v4125
    %v4157 = vmul.f32 %v4127, %v4127
    %v4158 = vmul.f32 %v4129, %v4129
    %v4159 = vmul.f32 %v4133, %v4133
    %v4160 = vmul.f32 %v4135, %v4135
    %v4161 = vmul.f32 %v4137, %v4137
    %v4162 = vmul.f32 %v4139, %v4139
    %v4163 = vmul.f32 %v4143, %v4143
    %v4164 = vmul.f32 %v4145, %v4145
    %v4165 = vmul.f32 %v4147, %v4147
    %v4166 = vmul.f32 %v4149, %v4149
    %v4167 = vmul.f32 %v4113, %v4151
    %v4168 = vmul.f32 %v4115, %v4152
    %v4169 = vmul.f32 %v4117, %v4153
    %v4170 = vmul.f32 %v4119, %v4154
    %v4171 = vmul.f32 %v4123, %v4155
    %v4172 = vmul.f32 %v4125, %v4156
    %v4173 = vmul.f32 %v4127, %v4157
    %v4174 = vmul.f32 %v4129, %v4158
    %v4175 = vmul.f32 %v4133, %v4159
    %v4176 = vmul.f32 %v4135, %v4160
    %v4177 = vmul.f32 %v4137, %v4161
    %v4178 = vmul.f32 %v4139, %v4162
    %v4179 = vmul.f32 %v4143, %v4163
    %v4180 = vmul.f32 %v4145, %v4164
    %v4181 = vmul.f32 %v4147, %v4165
    %v4182 = vmul.f32 %v4149, %v4166
    %v4183 = vmul.f32 %v4167, 0.044715
    %v4184 = vmul.f32 %v4168, 0.044715
    %v4185 = vmul.f32 %v4169, 0.044715
    %v4186 = vmul.f32 %v4170, 0.044715
    %v4187 = vmul.f32 %v4171, 0.044715
    %v4188 = vmul.f32 %v4172, 0.044715
    %v4189 = vmul.f32 %v4173, 0.044715
    %v4190 = vmul.f32 %v4174, 0.044715
    %v4191 = vmul.f32 %v4175, 0.044715
    %v4192 = vmul.f32 %v4176, 0.044715
    %v4193 = vmul.f32 %v4177, 0.044715
    %v4194 = vmul.f32 %v4178, 0.044715
    %v4195 = vmul.f32 %v4179, 0.044715
    %v4196 = vmul.f32 %v4180, 0.044715
    %v4197 = vmul.f32 %v4181, 0.044715
    %v4198 = vmul.f32 %v4182, 0.044715
    %v4199 = vadd.f32 %v4113, %v4183
    %v4200 = vadd.f32 %v4115, %v4184
    %v4201 = vadd.f32 %v4117, %v4185
    %v4202 = vadd.f32 %v4119, %v4186
    %v4203 = vadd.f32 %v4123, %v4187
    %v4204 = vadd.f32 %v4125, %v4188
    %v4205 = vadd.f32 %v4127, %v4189
    %v4206 = vadd.f32 %v4129, %v4190
    %v4207 = vadd.f32 %v4133, %v4191
    %v4208 = vadd.f32 %v4135, %v4192
    %v4209 = vadd.f32 %v4137, %v4193
    %v4210 = vadd.f32 %v4139, %v4194
    %v4211 = vadd.f32 %v4143, %v4195
    %v4212 = vadd.f32 %v4145, %v4196
    %v4213 = vadd.f32 %v4147, %v4197
    %v4214 = vadd.f32 %v4149, %v4198
    %v4215 = vmul.f32 %v4199, 0.7978846
    %v4216 = vmul.f32 %v4200, 0.7978846
    %v4217 = vmul.f32 %v4201, 0.7978846
    %v4218 = vmul.f32 %v4202, 0.7978846
    %v4219 = vmul.f32 %v4203, 0.7978846
    %v4220 = vmul.f32 %v4204, 0.7978846
    %v4221 = vmul.f32 %v4205, 0.7978846
    %v4222 = vmul.f32 %v4206, 0.7978846
    %v4223 = vmul.f32 %v4207, 0.7978846
    %v4224 = vmul.f32 %v4208, 0.7978846
    %v4225 = vmul.f32 %v4209, 0.7978846
    %v4226 = vmul.f32 %v4210, 0.7978846
    %v4227 = vmul.f32 %v4211, 0.7978846
    %v4228 = vmul.f32 %v4212, 0.7978846
    %v4229 = vmul.f32 %v4213, 0.7978846
    %v4230 = vmul.f32 %v4214, 0.7978846
    %v4231 = vtanh.pop %v4215
    %v4232 = vtanh.pop %v4216
    %v4233 = vtanh.pop %v4217
    %v4234 = vtanh.pop %v4218
    %v4235 = vtanh.pop %v4219
    %v4236 = vtanh.pop %v4220
    %v4237 = vtanh.pop %v4221
    %v4238 = vtanh.pop %v4222
    %v4239 = vtanh.pop %v4223
    %v4240 = vtanh.pop %v4224
    %v4241 = vtanh.pop %v4225
    %v4242 = vtanh.pop %v4226
    %v4243 = vtanh.pop %v4227
    %v4244 = vtanh.pop %v4228
    %v4245 = vtanh.pop %v4229
    %v4246 = vtanh.pop %v4230
    %v4247 = vadd.f32 %v4231, 1.0
    %v4248 = vadd.f32 %v4232, 1.0
    %v4249 = vadd.f32 %v4233, 1.0
    %v4250 = vadd.f32 %v4234, 1.0
    %v4251 = vadd.f32 %v4235, 1.0
    %v4252 = vadd.f32 %v4236, 1.0
    %v4253 = vadd.f32 %v4237, 1.0
    %v4254 = vadd.f32 %v4238, 1.0
    %v4255 = vadd.f32 %v4239, 1.0
    %v4256 = vadd.f32 %v4240, 1.0
    %v4257 = vadd.f32 %v4241, 1.0
    %v4258 = vadd.f32 %v4242, 1.0
    %v4259 = vadd.f32 %v4243, 1.0
    %v4260 = vadd.f32 %v4244, 1.0
    %v4261 = vadd.f32 %v4245, 1.0
    %v4262 = vadd.f32 %v4246, 1.0
    %v4263 = vmul.f32 %v4247, 0.5
    %v4264 = vmul.f32 %v4248, 0.5
    %v4265 = vmul.f32 %v4249, 0.5
    %v4266 = vmul.f32 %v4250, 0.5
    %v4267 = vmul.f32 %v4251, 0.5
    %v4268 = vmul.f32 %v4252, 0.5
    %v4269 = vmul.f32 %v4253, 0.5
    %v4270 = vmul.f32 %v4254, 0.5
    %v4271 = vmul.f32 %v4255, 0.5
    %v4272 = vmul.f32 %v4256, 0.5
    %v4273 = vmul.f32 %v4257, 0.5
    %v4274 = vmul.f32 %v4258, 0.5
    %v4275 = vmul.f32 %v4259, 0.5
    %v4276 = vmul.f32 %v4260, 0.5
    %v4277 = vmul.f32 %v4261, 0.5
    %v4278 = vmul.f32 %v4262, 0.5
    %v4279 = vmul.f32 %v4113, %v4263
    %v4280 = vmul.f32 %v4115, %v4264
    %v4281 = vmul.f32 %v4117, %v4265
    %v4282 = vmul.f32 %v4119, %v4266
    %v4283 = vmul.f32 %v4123, %v4267
    %v4284 = vmul.f32 %v4125, %v4268
    %v4285 = vmul.f32 %v4127, %v4269
    %v4286 = vmul.f32 %v4129, %v4270
    %v4287 = vmul.f32 %v4133, %v4271
    %v4288 = vmul.f32 %v4135, %v4272
    %v4289 = vmul.f32 %v4137, %v4273
    %v4290 = vmul.f32 %v4139, %v4274
    %v4291 = vmul.f32 %v4143, %v4275
    %v4292 = vmul.f32 %v4145, %v4276
    %v4293 = vmul.f32 %v4147, %v4277
    %v4294 = vmul.f32 %v4149, %v4278
    %v4295 = vpack.c.bf16 %v4281, %v4279
    %v4296 = vpack.c.bf16 %v4282, %v4280
    %v4297 = vpack.c.bf16 %v4285, %v4283
    %v4298 = vpack.c.bf16 %v4286, %v4284
    %v4299 = vpack.c.bf16 %v4289, %v4287
    %v4300 = vpack.c.bf16 %v4290, %v4288
    %v4301 = vpack.c.bf16 %v4293, %v4291
    %v4302 = vpack.c.bf16 %v4294, %v4292
    %s4303 = scalar_lea.vmem %s35, 128
    %v4304 = vld [vmem:[%s4303] sm:$0xf]
    %v4305 = vld [vmem:[%s4303 + $0x4] sm:$0xf]
    %v4306 = vld [vmem:[%s4303 + $0x8] sm:$0xf]
    %v4307 = vld [vmem:[%s4303 + $0xc] sm:$0xf]
    %v4308 = vld [vmem:[%s4303 + $0x10] sm:$0xf]
    %v4309 = vld [vmem:[%s4303 + $0x14] sm:$0xf]
    %v4310 = vld [vmem:[%s4303 + $0x18] sm:$0xf]
    %v4311 = vld [vmem:[%s4303 + $0x1c] sm:$0xf]
    %v4312 = vld [vmem:[%s4303 + $0x20] sm:$0xf]
    %v4313 = vld [vmem:[%s4303 + $0x24] sm:$0xf]
    %v4314 = vld [vmem:[%s4303 + $0x28] sm:$0xf]
    %v4315 = vld [vmem:[%s4303 + $0x2c] sm:$0xf]
    %v4316 = vld [vmem:[%s4303 + $0x30] sm:$0xf]
    %v4317 = vld [vmem:[%s4303 + $0x34] sm:$0xf]
    %v4318 = vld [vmem:[%s4303 + $0x38] sm:$0xf]
    %v4319 = vld [vmem:[%s4303 + $0x3c] sm:$0xf]
    %v4320 = vld [vmem:[%s4303 + $0x40] sm:$0xf]
    %v4321 = vld [vmem:[%s4303 + $0x44] sm:$0xf]
    %v4322 = vld [vmem:[%s4303 + $0x48] sm:$0xf]
    %v4323 = vld [vmem:[%s4303 + $0x4c] sm:$0xf]
    %v4324 = vld [vmem:[%s4303 + $0x50] sm:$0xf]
    %v4325 = vld [vmem:[%s4303 + $0x54] sm:$0xf]
    %v4326 = vld [vmem:[%s4303 + $0x58] sm:$0xf]
    %v4327 = vld [vmem:[%s4303 + $0x5c] sm:$0xf]
    %v4328 = vld [vmem:[%s4303 + $0x60] sm:$0xf]
    %v4329 = vld [vmem:[%s4303 + $0x64] sm:$0xf]
    %v4330 = vld [vmem:[%s4303 + $0x68] sm:$0xf]
    %v4331 = vld [vmem:[%s4303 + $0x6c] sm:$0xf]
    %v4332 = vld [vmem:[%s4303 + $0x70] sm:$0xf]
    %v4333 = vld [vmem:[%s4303 + $0x74] sm:$0xf]
    %v4334 = vld [vmem:[%s4303 + $0x78] sm:$0xf]
    %v4335 = vld [vmem:[%s4303 + $0x7c] sm:$0xf]
    %s4336 = scalar_lea.vmem %s37, 1
    %v4337 = vld [vmem:[%s4336] sm:$0x1]
    %v4339 = vlaneseq
    %v4340 = vshrl.u32 %v4339, 7
    %v4341 = vsub.s32 0, %v4340
    %v4342 = vrot.slane %v4337, %v4341
    %v4376 = vunpack.c.l.b16 %v4304
    %v4377 = vunpack.c.l.b16 %v4305
    %v4378 = vunpack.c.l.b16 %v4306
    %v4379 = vunpack.c.l.b16 %v4307
    %v4380 = vunpack.c.l.b16 %v4308
    %v4381 = vunpack.c.l.b16 %v4309
    %v4382 = vunpack.c.l.b16 %v4310
    %v4383 = vunpack.c.l.b16 %v4311
    %v4384 = vunpack.c.l.b16 %v4312
    %v4385 = vunpack.c.l.b16 %v4313
    %v4386 = vunpack.c.l.b16 %v4314
    %v4387 = vunpack.c.l.b16 %v4315
    %v4388 = vunpack.c.l.b16 %v4316
    %v4389 = vunpack.c.l.b16 %v4317
    %v4390 = vunpack.c.l.b16 %v4318
    %v4391 = vunpack.c.l.b16 %v4319
    %v4392 = vunpack.c.l.b16 %v4320
    %v4393 = vunpack.c.l.b16 %v4321
    %v4394 = vunpack.c.l.b16 %v4322
    %v4395 = vunpack.c.l.b16 %v4323
    %v4396 = vunpack.c.l.b16 %v4324
    %v4397 = vunpack.c.l.b16 %v4325
    %v4398 = vunpack.c.l.b16 %v4326
    %v4399 = vunpack.c.l.b16 %v4327
    %v4400 = vunpack.c.l.b16 %v4328
    %v4401 = vunpack.c.l.b16 %v4329
    %v4402 = vunpack.c.l.b16 %v4330
    %v4403 = vunpack.c.l.b16 %v4331
    %v4404 = vunpack.c.l.b16 %v4332
    %v4405 = vunpack.c.l.b16 %v4333
    %v4406 = vunpack.c.l.b16 %v4334
    %v4407 = vunpack.c.l.b16 %v4335
    %v4408 = vpack.c.b16 %v4377, %v4376
    %v4409 = vpack.c.b16 %v4379, %v4378
    %v4410 = vpack.c.b16 %v4381, %v4380
    %v4411 = vpack.c.b16 %v4383, %v4382
    %v4412 = vpack.c.b16 %v4385, %v4384
    %v4413 = vpack.c.b16 %v4387, %v4386
    %v4414 = vpack.c.b16 %v4389, %v4388
    %v4415 = vpack.c.b16 %v4391, %v4390
    %v4416 = vpack.c.b16 %v4393, %v4392
    %v4417 = vpack.c.b16 %v4395, %v4394
    %v4418 = vpack.c.b16 %v4397, %v4396
    %v4419 = vpack.c.b16 %v4399, %v4398
    %v4420 = vpack.c.b16 %v4401, %v4400
    %v4421 = vpack.c.b16 %v4403, %v4402
    %v4422 = vpack.c.b16 %v4405, %v4404
    %v4423 = vpack.c.b16 %v4407, %v4406
    %4440 = vmatprep.subr.bf16.mxu0 0
    %4441 = vmatpush1.bf16.msra.mxu0 %v4408
    %4442 = vmatprep.subr.bf16.mxu0 0
    %4443 = vmatpush1.bf16.msra.mxu0 %v4409
    %4444 = vmatprep.subr.bf16.mxu0 0
    %4445 = vmatpush1.bf16.msra.mxu0 %v4410
    %4446 = vmatprep.subr.bf16.mxu0 0
    %4447 = vmatpush1.bf16.msra.mxu0 %v4411
    %4448 = vmatprep.subr.bf16.mxu0 0
    %4449 = vmatpush1.bf16.msra.mxu0 %v4412
    %4450 = vmatprep.subr.bf16.mxu0 0
    %4451 = vmatpush1.bf16.msra.mxu0 %v4413
    %4452 = vmatprep.subr.bf16.mxu0 0
    %4453 = vmatpush1.bf16.msra.mxu0 %v4414
    %4454 = vmatprep.subr.bf16.mxu0 0
    %4455 = vmatpush1.bf16.msra.mxu0 %v4415
    %4456 = vmatprep.subr.bf16.mxu0 0
    %4457 = vmatpush1.bf16.msra.mxu0 %v4416
    %4458 = vmatprep.subr.bf16.mxu0 0
    %4459 = vmatpush1.bf16.msra.mxu0 %v4417
    %4460 = vmatprep.subr.bf16.mxu0 0
    %4461 = vmatpush1.bf16.msra.mxu0 %v4418
    %4462 = vmatprep.subr.bf16.mxu0 0
    %4463 = vmatpush1.bf16.msra.mxu0 %v4419
    %4464 = vmatprep.subr.bf16.mxu0 0
    %4465 = vmatpush1.bf16.msra.mxu0 %v4420
    %4466 = vmatprep.subr.bf16.mxu0 0
    %4467 = vmatpush1.bf16.msra.mxu0 %v4421
    %4468 = vmatprep.subr.bf16.mxu0 0
    %4469 = vmatpush1.bf16.msra.mxu0 %v4422
    %4470 = vmatprep.subr.bf16.mxu0 0
    %4471 = vmatpush1.bf16.msra.mxu0 %v4423
    %4472 = vmatprep.mubr.bf16.mxu0 %v4296
    %4473 = vmatmul.mubr.bf16.gmra.mrb[0].mxu0 %v4295
    %v4474 = vpop.f32.mrb[0].mxu0
    %v4475 = vadd.f32 %v4342, %v4474
    %v4476 = vpop.f32.mrb[0].mxu0
    %v4477 = vpop.f32.mrb[0].mxu0
    %v4478 = vadd.f32 %v4342, %v4477
    %v4479 = vpop.f32.mrb[0].mxu0
    %4480 = vmatprep.mubr.bf16.mxu0 %v4298
    %4481 = vmatmul.mubr.bf16.gmra.mrb[0].mxu0 %v4297
    %v4482 = vpop.f32.mrb[0].mxu0
    %v4483 = vadd.f32 %v4342, %v4482
    %v4484 = vpop.f32.mrb[0].mxu0
    %v4485 = vpop.f32.mrb[0].mxu0
    %v4486 = vadd.f32 %v4342, %v4485
    %v4487 = vpop.f32.mrb[0].mxu0
    %4488 = vmatprep.mubr.bf16.mxu0 %v4300
    %4489 = vmatmul.mubr.bf16.gmra.mrb[0].mxu0 %v4299
    %v4490 = vpop.f32.mrb[0].mxu0
    %v4491 = vadd.f32 %v4342, %v4490
    %v4492 = vpop.f32.mrb[0].mxu0
    %v4493 = vpop.f32.mrb[0].mxu0
    %v4494 = vadd.f32 %v4342, %v4493
    %v4495 = vpop.f32.mrb[0].mxu0
    %4496 = vmatprep.mubr.bf16.mxu0 %v4302
    %4497 = vmatmul.mubr.bf16.gmra.mrb[0].mxu0 %v4301
    %v4498 = vpop.f32.mrb[0].mxu0
    %v4499 = vadd.f32 %v4342, %v4498
    %v4500 = vpop.f32.mrb[0].mxu0
    %v4501 = vpop.f32.mrb[0].mxu0
    %v4502 = vadd.f32 %v4342, %v4501
    %v4503 = vpop.f32.mrb[0].mxu0
    %4504 = vdwg.mxu0
    %v4505 = vadd.f32 %v3992, %v4475
    %v4506 = vadd.f32 %v3993, %v4478
    %v4507 = vadd.f32 %v3994, %v4483
    %v4508 = vadd.f32 %v3995, %v4486
    %v4509 = vadd.f32 %v3996, %v4491
    %v4510 = vadd.f32 %v3997, %v4494
    %v4511 = vadd.f32 %v3998, %v4499
    %v4512 = vadd.f32 %v3999, %v4502
    %s4513 = scalar_lea.vmem [#allocation20], 1
    %v4514 = vld [vmem:[%s4513] sm:$0x1]
    %s4515 = scalar_lea.vmem [#allocation22], 1
    %v4516 = vld [vmem:[%s4515] sm:$0x1]
    %v4517 = vsel %vm431, %v4505, 0.0
    %4518 = vadd.xlane.f32.xlu0 %v4517
    %v4519 = vpop.xlane.xlu0 %4518
    %v4520 = vsel %vm431, %v4506, 0.0
    %4521 = vadd.xlane.f32.xlu0 %v4520
    %v4522 = vpop.xlane.xlu0 %4521
    %v4523 = vsel %vm431, %v4507, 0.0
    %4524 = vadd.xlane.f32.xlu0 %v4523
    %v4525 = vpop.xlane.xlu0 %4524
    %v4526 = vsel %vm431, %v4508, 0.0
    %4527 = vadd.xlane.f32.xlu0 %v4526
    %v4528 = vpop.xlane.xlu0 %4527
    %v4529 = vsel %vm431, %v4509, 0.0
    %4530 = vadd.xlane.f32.xlu0 %v4529
    %v4531 = vpop.xlane.xlu0 %4530
    %v4532 = vsel %vm431, %v4510, 0.0
    %4533 = vadd.xlane.f32.xlu0 %v4532
    %v4534 = vpop.xlane.xlu0 %4533
    %v4535 = vsel %vm431, %v4511, 0.0
    %4536 = vadd.xlane.f32.xlu0 %v4535
    %v4537 = vpop.xlane.xlu0 %4536
    %v4538 = vsel %vm431, %v4512, 0.0
    %4539 = vadd.xlane.f32.xlu0 %v4538
    %v4540 = vpop.xlane.xlu0 %4539
    %v4541 = vmul.f32 %v4519, %v1216
    %v4542 = vmul.f32 %v4522, %v1216
    %v4543 = vmul.f32 %v4525, %v1216
    %v4544 = vmul.f32 %v4528, %v1216
    %v4545 = vmul.f32 %v4531, %v1216
    %v4546 = vmul.f32 %v4534, %v1216
    %v4547 = vmul.f32 %v4537, %v1216
    %v4548 = vmul.f32 %v4540, %v1216
    %v4549 = vmul.f32 %v4505, %v4505
    %v4550 = vmul.f32 %v4506, %v4506
    %v4551 = vmul.f32 %v4507, %v4507
    %v4552 = vmul.f32 %v4508, %v4508
    %v4553 = vmul.f32 %v4509, %v4509
    %v4554 = vmul.f32 %v4510, %v4510
    %v4555 = vmul.f32 %v4511, %v4511
    %v4556 = vmul.f32 %v4512, %v4512
    %v4557 = vsel %vm431, %v4549, 0.0
    %4558 = vadd.xlane.f32.xlu0 %v4557
    %v4559 = vpop.xlane.xlu0 %4558
    %v4560 = vsel %vm431, %v4550, 0.0
    %4561 = vadd.xlane.f32.xlu0 %v4560
    %v4562 = vpop.xlane.xlu0 %4561
    %v4563 = vsel %vm431, %v4551, 0.0
    %4564 = vadd.xlane.f32.xlu0 %v4563
    %v4565 = vpop.xlane.xlu0 %4564
    %v4566 = vsel %vm431, %v4552, 0.0
    %4567 = vadd.xlane.f32.xlu0 %v4566
    %v4568 = vpop.xlane.xlu0 %4567
    %v4569 = vsel %vm431, %v4553, 0.0
    %4570 = vadd.xlane.f32.xlu0 %v4569
    %v4571 = vpop.xlane.xlu0 %4570
    %v4572 = vsel %vm431, %v4554, 0.0
    %4573 = vadd.xlane.f32.xlu0 %v4572
    %v4574 = vpop.xlane.xlu0 %4573
    %v4575 = vsel %vm431, %v4555, 0.0
    %4576 = vadd.xlane.f32.xlu0 %v4575
    %v4577 = vpop.xlane.xlu0 %4576
    %v4578 = vsel %vm431, %v4556, 0.0
    %4579 = vadd.xlane.f32.xlu0 %v4578
    %v4580 = vpop.xlane.xlu0 %4579
    %v4581 = vmul.f32 %v4559, %v1216
    %v4582 = vmul.f32 %v4562, %v1216
    %v4583 = vmul.f32 %v4565, %v1216
    %v4584 = vmul.f32 %v4568, %v1216
    %v4585 = vmul.f32 %v4571, %v1216
    %v4586 = vmul.f32 %v4574, %v1216
    %v4587 = vmul.f32 %v4577, %v1216
    %v4588 = vmul.f32 %v4580, %v1216
    %v4589 = vmul.f32 %v4541, %v4541
    %v4590 = vmul.f32 %v4542, %v4542
    %v4591 = vmul.f32 %v4543, %v4543
    %v4592 = vmul.f32 %v4544, %v4544
    %v4593 = vmul.f32 %v4545, %v4545
    %v4594 = vmul.f32 %v4546, %v4546
    %v4595 = vmul.f32 %v4547, %v4547
    %v4596 = vmul.f32 %v4548, %v4548
    %v4597 = vsub.f32 %v4581, %v4589
    %v4598 = vsub.f32 %v4582, %v4590
    %v4599 = vsub.f32 %v4583, %v4591
    %v4600 = vsub.f32 %v4584, %v4592
    %v4601 = vsub.f32 %v4585, %v4593
    %v4602 = vsub.f32 %v4586, %v4594
    %v4603 = vsub.f32 %v4587, %v4595
    %v4604 = vsub.f32 %v4588, %v4596
    %v4605 = vmax.f32 %v4597, 0.0
    %v4606 = vmax.f32 %v4598, 0.0
    %v4607 = vmax.f32 %v4599, 0.0
    %v4608 = vmax.f32 %v4600, 0.0
    %v4609 = vmax.f32 %v4601, 0.0
    %v4610 = vmax.f32 %v4602, 0.0
    %v4611 = vmax.f32 %v4603, 0.0
    %v4612 = vmax.f32 %v4604, 0.0
    %v4613 = vsub.f32 %v4505, %v4541
    %v4614 = vsub.f32 %v4506, %v4542
    %v4615 = vsub.f32 %v4507, %v4543
    %v4616 = vsub.f32 %v4508, %v4544
    %v4617 = vsub.f32 %v4509, %v4545
    %v4618 = vsub.f32 %v4510, %v4546
    %v4619 = vsub.f32 %v4511, %v4547
    %v4620 = vsub.f32 %v4512, %v4548
    %v4621 = vadd.f32 %v4605, 1e-05
    %v4622 = vadd.f32 %v4606, 1e-05
    %v4623 = vadd.f32 %v4607, 1e-05
    %v4624 = vadd.f32 %v4608, 1e-05
    %v4625 = vadd.f32 %v4609, 1e-05
    %v4626 = vadd.f32 %v4610, 1e-05
    %v4627 = vadd.f32 %v4611, 1e-05
    %v4628 = vadd.f32 %v4612, 1e-05
    %v4629 = vrsqrt.pop %v4621
    %v4630 = vrsqrt.pop %v4622
    %v4631 = vrsqrt.pop %v4623
    %v4632 = vrsqrt.pop %v4624
    %v4633 = vrsqrt.pop %v4625
    %v4634 = vrsqrt.pop %v4626
    %v4635 = vrsqrt.pop %v4627
    %v4636 = vrsqrt.pop %v4628
    %v4637 = vmul.f32 %v4613, %v4629
    %v4638 = vmul.f32 %v4614, %v4630
    %v4639 = vmul.f32 %v4615, %v4631
    %v4640 = vmul.f32 %v4616, %v4632
    %v4641 = vmul.f32 %v4617, %v4633
    %v4642 = vmul.f32 %v4618, %v4634
    %v4643 = vmul.f32 %v4619, %v4635
    %v4644 = vmul.f32 %v4620, %v4636
    %v4646 = vlaneseq
    %v4647 = vshrl.u32 %v4646, 7
    %v4648 = vsub.s32 0, %v4647
    %v4649 = vrot.slane %v4514, %v4648
    %v4651 = vmul.f32 %v4637, %v4649
    %v4652 = vmul.f32 %v4638, %v4649
    %v4653 = vmul.f32 %v4639, %v4649
    %v4654 = vmul.f32 %v4640, %v4649
    %v4655 = vmul.f32 %v4641, %v4649
    %v4656 = vmul.f32 %v4642, %v4649
    %v4657 = vmul.f32 %v4643, %v4649
    %v4658 = vmul.f32 %v4644, %v4649
    %v4660 = vlaneseq
    %v4661 = vshrl.u32 %v4660, 7
    %v4662 = vsub.s32 0, %v4661
    %v4663 = vrot.slane %v4516, %v4662
    %v4665 = vadd.f32 %v4651, %v4663
    %v4666 = vadd.f32 %v4652, %v4663
    %v4667 = vadd.f32 %v4653, %v4663
    %v4668 = vadd.f32 %v4654, %v4663
    %v4669 = vadd.f32 %v4655, %v4663
    %v4670 = vadd.f32 %v4656, %v4663
    %v4671 = vadd.f32 %v4657, %v4663
    %v4672 = vadd.f32 %v4658, %v4663
    %v4673 = vpack.c.bf16 %v4666, %v4665
    %v4674 = vpack.c.bf16 %v4668, %v4667
    %v4675 = vpack.c.bf16 %v4670, %v4669
    %v4676 = vpack.c.bf16 %v4672, %v4671
    %v4677 = vsel %vm431, %v4665, -inf
    %v4678 = vsel %vm431, %v4666, -inf
    %v4679 = vsel %vm431, %v4667, -inf
    %v4680 = vmax.f32 %v4677, %v4679
    %v4681 = vsel %vm431, %v4668, -inf
    %v4682 = vmax.f32 %v4678, %v4681
    %v4683 = vmax.f32 %v4680, %v4682
    %v4684 = vrot.slane %v4683, 4
    %v4685 = vmax.f32 %v4683, %v4684
    %v4686 = vrot.slane %v4685, 2
    %v4687 = vmax.f32 %v4685, %v4686
    %v4688 = vrot.slane %v4687, 1
    %v4689 = vmax.f32 %v4687, %v4688
    %v4690 = vsel %vm431, %v4669, -inf
    %v4691 = vsel %vm431, %v4670, -inf
    %v4692 = vsel %vm431, %v4671, -inf
    %v4693 = vmax.f32 %v4690, %v4692
    %v4694 = vsel %vm431, %v4672, -inf
    %v4695 = vmax.f32 %v4691, %v4694
    %v4696 = vmax.f32 %v4693, %v4695
    %v4697 = vrot.slane %v4696, 4
    %v4698 = vmax.f32 %v4696, %v4697
    %v4699 = vrot.slane %v4698, 2
    %v4700 = vmax.f32 %v4698, %v4699
    %v4701 = vrot.slane %v4700, 1
    %v4702 = vmax.f32 %v4700, %v4701
    %v4703 = vpack.c.bf16 %v4689, %v4689
    %v4704 = vpack.c.bf16 %v4702, %v4702
    %v4705 = vld [vmem:[%s49] sm:$0xf]
    %v4706 = vld [vmem:[%s49 + $0x4] sm:$0xf]
    %v4707 = vld [vmem:[%s49 + $0x8] sm:$0xf]
    %v4708 = vld [vmem:[%s49 + $0xc] sm:$0xf]
    %v4709 = vld [vmem:[%s49 + $0x10] sm:$0xf]
    %v4710 = vld [vmem:[%s49 + $0x14] sm:$0xf]
    %v4711 = vld [vmem:[%s49 + $0x18] sm:$0xf]
    %v4712 = vld [vmem:[%s49 + $0x1c] sm:$0xf]
    %v4715 = vunpack.c.l.b16 %v4703
    %v4716 = vunpack.c.l.b16 %v4704
    %vm4717 = vcmask 1041409
    %v4718 = vsel %vm4717, %v4716, %v4715
    %v4719 = vpack.c.b16 %v4718, %v4718
    %v4728 = vunpack.c.l.b16 %v4705
    %v4729 = vunpack.c.l.b16 %v4706
    %v4730 = vunpack.c.l.b16 %v4707
    %v4731 = vunpack.c.l.b16 %v4708
    %v4732 = vunpack.c.l.b16 %v4709
    %v4733 = vunpack.c.l.b16 %v4710
    %v4734 = vunpack.c.l.b16 %v4711
    %v4735 = vunpack.c.l.b16 %v4712
    %v4736 = vpack.c.b16 %v4729, %v4728
    %v4737 = vpack.c.b16 %v4731, %v4730
    %v4738 = vpack.c.b16 %v4733, %v4732
    %v4739 = vpack.c.b16 %v4735, %v4734
    %v4745 = vsel %vm431, %v4719, 0
    %4747 = vmatprep.subr.bf16.mxu0 0
    %4748 = vmatpush1.bf16.msra.mxu0 %v4736
    %4749 = vmatprep.subr.bf16.mxu0 0
    %4750 = vmatpush1.bf16.msra.mxu0 %v4737
    %4751 = vmatprep.subr.bf16.mxu0 0
    %4752 = vmatpush1.bf16.msra.mxu0 %v4738
    %4753 = vmatprep.subr.bf16.mxu0 0
    %4754 = vmatpush1.bf16.msra.mxu0 %v4739
    %4755 = vmatprep.subr.bf16.mxu0 0
    %4756 = vmatpush1.bf16.msra.mxu0 0
    %4757 = vmatprep.subr.bf16.mxu0 0
    %4758 = vmatpush1.bf16.msra.mxu0 0
    %4759 = vmatprep.subr.bf16.mxu0 0
    %4760 = vmatpush1.bf16.msra.mxu0 0
    %4761 = vmatprep.subr.bf16.mxu0 0
    %4762 = vmatpush1.bf16.msra.mxu0 0
    %4763 = vmatprep.subr.bf16.mxu0 0
    %4764 = vmatpush1.bf16.msra.mxu0 0
    %4765 = vmatprep.subr.bf16.mxu0 0
    %4766 = vmatpush1.bf16.msra.mxu0 0
    %4767 = vmatprep.subr.bf16.mxu0 0
    %4768 = vmatpush1.bf16.msra.mxu0 0
    %4769 = vmatprep.subr.bf16.mxu0 0
    %4770 = vmatpush1.bf16.msra.mxu0 0
    %4771 = vmatprep.subr.bf16.mxu0 0
    %4772 = vmatpush1.bf16.msra.mxu0 0
    %4773 = vmatprep.subr.bf16.mxu0 0
    %4774 = vmatpush1.bf16.msra.mxu0 0
    %4775 = vmatprep.subr.bf16.mxu0 0
    %4776 = vmatpush1.bf16.msra.mxu0 0
    %4777 = vmatprep.subr.bf16.mxu0 0
    %4778 = vmatpush1.bf16.msra.mxu0 0
    %4779 = vmatprep.mubr.bf16.mxu0 0
    %4780 = vmatmul.mubr.bf16.gmra.mrb[0].mxu0 %v4745
    %v4781 = vpop.f32.mrb[0].mxu0
    %v4782 = vadd.f32 0.0, %v4781
    %v4783 = vpop.f32.mrb[0].mxu0
    %v4784 = vpop.f32.mrb[0].mxu0
    %v4785 = vpop.f32.mrb[0].mxu0
    %4786 = vdwg.mxu0
    %v4787 = vld [vmem:[%s51] sm:$0xf]
    %v4788 = vld [vmem:[%s51 + $0x4] sm:$0xf]
    %v4789 = vld [vmem:[%s51 + $0x8] sm:$0xf]
    %v4790 = vld [vmem:[%s51 + $0xc] sm:$0xf]
    %v4791 = vld [vmem:[%s51 + $0x10] sm:$0xf]
    %v4792 = vld [vmem:[%s51 + $0x14] sm:$0xf]
    %v4793 = vld [vmem:[%s51 + $0x18] sm:$0xf]
    %v4794 = vld [vmem:[%s51 + $0x1c] sm:$0xf]
    %v4803 = vunpack.c.l.b16 %v4787
    %v4804 = vunpack.c.l.b16 %v4788
    %v4805 = vunpack.c.l.b16 %v4789
    %v4806 = vunpack.c.l.b16 %v4790
    %v4807 = vunpack.c.l.b16 %v4791
    %v4808 = vunpack.c.l.b16 %v4792
    %v4809 = vunpack.c.l.b16 %v4793
    %v4810 = vunpack.c.l.b16 %v4794
    %v4811 = vpack.c.b16 %v4804, %v4803
    %v4812 = vpack.c.b16 %v4806, %v4805
    %v4813 = vpack.c.b16 %v4808, %v4807
    %v4814 = vpack.c.b16 %v4810, %v4809
    %v4820 = vsel %vm431, %v4673, 0
    %v4823 = vsel %vm431, %v4674, 0
    %v4826 = vsel %vm431, %v4675, 0
    %v4829 = vsel %vm431, %v4676, 0
    %4831 = vmatprep.subr.bf16.mxu0 0
    %4832 = vmatpush1.bf16.msra.mxu0 %v4811
    %4833 = vmatprep.subr.bf16.mxu0 0
    %4834 = vmatpush1.bf16.msra.mxu0 %v4812
    %4835 = vmatprep.subr.bf16.mxu0 0
    %4836 = vmatpush1.bf16.msra.mxu0 %v4813
    %4837 = vmatprep.subr.bf16.mxu0 0
    %4838 = vmatpush1.bf16.msra.mxu0 %v4814
    %4839 = vmatprep.subr.bf16.mxu0 0
    %4840 = vmatpush1.bf16.msra.mxu0 0
    %4841 = vmatprep.subr.bf16.mxu0 0
    %4842 = vmatpush1.bf16.msra.mxu0 0
    %4843 = vmatprep.subr.bf16.mxu0 0
    %4844 = vmatpush1.bf16.msra.mxu0 0
    %4845 = vmatprep.subr.bf16.mxu0 0
    %4846 = vmatpush1.bf16.msra.mxu0 0
    %4847 = vmatprep.subr.bf16.mxu0 0
    %4848 = vmatpush1.bf16.msra.mxu0 0
    %4849 = vmatprep.subr.bf16.mxu0 0
    %4850 = vmatpush1.bf16.msra.mxu0 0
    %4851 = vmatprep.subr.bf16.mxu0 0
    %4852 = vmatpush1.bf16.msra.mxu0 0
    %4853 = vmatprep.subr.bf16.mxu0 0
    %4854 = vmatpush1.bf16.msra.mxu0 0
    %4855 = vmatprep.subr.bf16.mxu0 0
    %4856 = vmatpush1.bf16.msra.mxu0 0
    %4857 = vmatprep.subr.bf16.mxu0 0
    %4858 = vmatpush1.bf16.msra.mxu0 0
    %4859 = vmatprep.subr.bf16.mxu0 0
    %4860 = vmatpush1.bf16.msra.mxu0 0
    %4861 = vmatprep.subr.bf16.mxu0 0
    %4862 = vmatpush1.bf16.msra.mxu0 0
    %4863 = vmatprep.mubr.bf16.mxu0 0
    %4864 = vmatmul.mubr.bf16.gmra.mrb[0].mxu0 %v4820
    %v4865 = vpop.f32.mrb[0].mxu0
    %v4866 = vadd.f32 0.0, %v4865
    %v4867 = vpop.f32.mrb[0].mxu0
    %v4868 = vpop.f32.mrb[0].mxu0
    %v4869 = vadd.f32 0.0, %v4868
    %v4870 = vpop.f32.mrb[0].mxu0
    %4871 = vmatprep.mubr.bf16.mxu0 0
    %4872 = vmatmul.mubr.bf16.gmra.mrb[0].mxu0 %v4823
    %v4873 = vpop.f32.mrb[0].mxu0
    %v4874 = vadd.f32 0.0, %v4873
    %v4875 = vpop.f32.mrb[0].mxu0
    %v4876 = vpop.f32.mrb[0].mxu0
    %v4877 = vadd.f32 0.0, %v4876
    %v4878 = vpop.f32.mrb[0].mxu0
    %4879 = vmatprep.mubr.bf16.mxu0 0
    %4880 = vmatmul.mubr.bf16.gmra.mrb[0].mxu0 %v4826
    %v4881 = vpop.f32.mrb[0].mxu0
    %v4882 = vadd.f32 0.0, %v4881
    %v4883 = vpop.f32.mrb[0].mxu0
    %v4884 = vpop.f32.mrb[0].mxu0
    %v4885 = vadd.f32 0.0, %v4884
    %v4886 = vpop.f32.mrb[0].mxu0
    %4887 = vmatprep.mubr.bf16.mxu0 0
    %4888 = vmatmul.mubr.bf16.gmra.mrb[0].mxu0 %v4829
    %v4889 = vpop.f32.mrb[0].mxu0
    %v4890 = vadd.f32 0.0, %v4889
    %v4891 = vpop.f32.mrb[0].mxu0
    %v4892 = vpop.f32.mrb[0].mxu0
    %v4893 = vadd.f32 0.0, %v4892
    %v4894 = vpop.f32.mrb[0].mxu0
    %4895 = vdwg.mxu0
    %v4898 = vunpack.c.l.s4 1966171168
    %v4899 = vunpack.c.0.s8 %v4898
    %v4900 = vlaneseq
    %v4901 = vshrl.u32 %v4900, 7
    %v4902 = vsub.s32 %v4899, %v4901
    %v4903 = vrot.slane %v4782, %v4902
    %v4904 = vcombine.high %v4903, %v4903
    %v4906 = vunpack.c.l.s4 1966171168
    %v4907 = vunpack.c.0.s8 %v4906
    %v4908 = vlaneseq
    %v4909 = vshrl.u32 %v4908, 7
    %v4910 = vsub.s32 %v4907, %v4909
    %v4911 = vrot.slane %v4903, %v4910
    %v4913 = vunpack.c.l.s4 1966171168
    %v4914 = vunpack.c.0.s8 %v4913
    %v4915 = vlaneseq
    %v4916 = vshrl.u32 %v4915, 7
    %v4917 = vsub.s32 %v4914, %v4916
    %v4918 = vrot.slane %v4904, %v4917
    %v4919 = vlaneseq
    %v4920 = vshrl.u32 %v4919, 7
    %v4921 = vsub.s32 0, %v4920
    %v4922 = vrot.slane %v4911, %v4921
    %v4923 = vlaneseq
    %v4924 = vshrl.u32 %v4923, 7
    %v4925 = vsub.s32 0, %v4924
    %v4926 = vrot.slane %v4918, %v4925
    %v4929 = vmul.f32 %v4866, %v4922
    %v4930 = vmul.f32 %v4869, %v4922
    %v4931 = vmul.f32 %v4874, %v4922
    %v4932 = vmul.f32 %v4877, %v4922
    %v4933 = vmul.f32 %v4882, %v4926
    %v4934 = vmul.f32 %v4885, %v4926
    %v4935 = vmul.f32 %v4890, %v4926
    %v4936 = vmul.f32 %v4893, %v4926
    %v4937 = vpack.c.bf16 %v4930, %v4929
    %v4938 = vpack.c.bf16 %v4932, %v4931
    %v4939 = vpack.c.bf16 %v4934, %v4933
    %v4940 = vpack.c.bf16 %v4936, %v4935
    %v4941 = vld [vmem:[%s55] sm:$0xf]
    %v4942 = vld [vmem:[%s55 + $0x4] sm:$0xf]
    %v4943 = vld [vmem:[%s55 + $0x8] sm:$0xf]
    %v4944 = vld [vmem:[%s55 + $0xc] sm:$0xf]
    %v4945 = vld [vmem:[%s55 + $0x10] sm:$0xf]
    %v4946 = vld [vmem:[%s55 + $0x14] sm:$0xf]
    %v4947 = vld [vmem:[%s55 + $0x18] sm:$0xf]
    %v4948 = vld [vmem:[%s55 + $0x1c] sm:$0xf]
    %v4957 = vunpack.c.l.b16 %v4941
    %v4958 = vunpack.c.l.b16 %v4942
    %v4959 = vunpack.c.l.b16 %v4943
    %v4960 = vunpack.c.l.b16 %v4944
    %v4961 = vunpack.c.l.b16 %v4945
    %v4962 = vunpack.c.l.b16 %v4946
    %v4963 = vunpack.c.l.b16 %v4947
    %v4964 = vunpack.c.l.b16 %v4948
    %v4965 = vpack.c.b16 %v4958, %v4957
    %v4966 = vpack.c.b16 %v4960, %v4959
    %v4967 = vpack.c.b16 %v4962, %v4961
    %v4968 = vpack.c.b16 %v4964, %v4963
    %v4974 = vsel %vm431, %v4937, 0
    %v4977 = vsel %vm431, %v4938, 0
    %v4980 = vsel %vm431, %v4939, 0
    %v4983 = vsel %vm431, %v4940, 0
    %4985 = vmatprep.subr.bf16.mxu0 0
    %4986 = vmatpush1.bf16.msra.mxu0 %v4965
    %4987 = vmatprep.subr.bf16.mxu0 0
    %4988 = vmatpush1.bf16.msra.mxu0 %v4966
    %4989 = vmatprep.subr.bf16.mxu0 0
    %4990 = vmatpush1.bf16.msra.mxu0 %v4967
    %4991 = vmatprep.subr.bf16.mxu0 0
    %4992 = vmatpush1.bf16.msra.mxu0 %v4968
    %4993 = vmatprep.subr.bf16.mxu0 0
    %4994 = vmatpush1.bf16.msra.mxu0 0
    %4995 = vmatprep.subr.bf16.mxu0 0
    %4996 = vmatpush1.bf16.msra.mxu0 0
    %4997 = vmatprep.subr.bf16.mxu0 0
    %4998 = vmatpush1.bf16.msra.mxu0 0
    %4999 = vmatprep.subr.bf16.mxu0 0
    %5000 = vmatpush1.bf16.msra.mxu0 0
    %5001 = vmatprep.subr.bf16.mxu0 0
    %5002 = vmatpush1.bf16.msra.mxu0 0
    %5003 = vmatprep.subr.bf16.mxu0 0
    %5004 = vmatpush1.bf16.msra.mxu0 0
    %5005 = vmatprep.subr.bf16.mxu0 0
    %5006 = vmatpush1.bf16.msra.mxu0 0
    %5007 = vmatprep.subr.bf16.mxu0 0
    %5008 = vmatpush1.bf16.msra.mxu0 0
    %5009 = vmatprep.subr.bf16.mxu0 0
    %5010 = vmatpush1.bf16.msra.mxu0 0
    %5011 = vmatprep.subr.bf16.mxu0 0
    %5012 = vmatpush1.bf16.msra.mxu0 0
    %5013 = vmatprep.subr.bf16.mxu0 0
    %5014 = vmatpush1.bf16.msra.mxu0 0
    %5015 = vmatprep.subr.bf16.mxu0 0
    %5016 = vmatpush1.bf16.msra.mxu0 0
    %5017 = vmatprep.mubr.bf16.mxu0 0
    %5018 = vmatmul.mubr.bf16.gmra.mrb[0].mxu0 %v4974
    %v5019 = vpop.f32.mrb[0].mxu0
    %v5020 = vadd.f32 0.0, %v5019
    %v5021 = vpop.f32.mrb[0].mxu0
    %v5022 = vpop.f32.mrb[0].mxu0
    %v5023 = vadd.f32 0.0, %v5022
    %v5024 = vpop.f32.mrb[0].mxu0
    %5025 = vmatprep.mubr.bf16.mxu0 0
    %5026 = vmatmul.mubr.bf16.gmra.mrb[0].mxu0 %v4977
    %v5027 = vpop.f32.mrb[0].mxu0
    %v5028 = vadd.f32 0.0, %v5027
    %v5029 = vpop.f32.mrb[0].mxu0
    %v5030 = vpop.f32.mrb[0].mxu0
    %v5031 = vadd.f32 0.0, %v5030
    %v5032 = vpop.f32.mrb[0].mxu0
    %5033 = vmatprep.mubr.bf16.mxu0 0
    %5034 = vmatmul.mubr.bf16.gmra.mrb[0].mxu0 %v4980
    %v5035 = vpop.f32.mrb[0].mxu0
    %v5036 = vadd.f32 0.0, %v5035
    %v5037 = vpop.f32.mrb[0].mxu0
    %v5038 = vpop.f32.mrb[0].mxu0
    %v5039 = vadd.f32 0.0, %v5038
    %v5040 = vpop.f32.mrb[0].mxu0
    %5041 = vmatprep.mubr.bf16.mxu0 0
    %5042 = vmatmul.mubr.bf16.gmra.mrb[0].mxu0 %v4983
    %v5043 = vpop.f32.mrb[0].mxu0
    %v5044 = vadd.f32 0.0, %v5043
    %v5045 = vpop.f32.mrb[0].mxu0
    %v5046 = vpop.f32.mrb[0].mxu0
    %v5047 = vadd.f32 0.0, %v5046
    %v5048 = vpop.f32.mrb[0].mxu0
    %5049 = vdwg.mxu0
    %v5050 = vsel %vm431, %v5020, -inf
    %v5051 = vsel %vm431, %v5023, -inf
    %v5052 = vsel %vm431, %v5028, -inf
    %v5053 = vmax.f32 %v5050, %v5052
    %v5054 = vsel %vm431, %v5031, -inf
    %v5055 = vmax.f32 %v5051, %v5054
    %v5056 = vmax.f32 %v5053, %v5055
    %v5057 = vrot.slane %v5056, 4
    %v5058 = vmax.f32 %v5056, %v5057
    %v5059 = vrot.slane %v5058, 2
    %v5060 = vmax.f32 %v5058, %v5059
    %v5061 = vrot.slane %v5060, 1
    %v5062 = vmax.f32 %v5060, %v5061
    %v5063 = vsel %vm431, %v5036, -inf
    %v5064 = vsel %vm431, %v5039, -inf
    %v5065 = vsel %vm431, %v5044, -inf
    %v5066 = vmax.f32 %v5063, %v5065
    %v5067 = vsel %vm431, %v5047, -inf
    %v5068 = vmax.f32 %v5064, %v5067
    %v5069 = vmax.f32 %v5066, %v5068
    %v5070 = vrot.slane %v5069, 4
    %v5071 = vmax.f32 %v5069, %v5070
    %v5072 = vrot.slane %v5071, 2
    %v5073 = vmax.f32 %v5071, %v5072
    %v5074 = vrot.slane %v5073, 1
    %v5075 = vmax.f32 %v5073, %v5074
    %v5076 = vsub.f32 %v5020, %v5062
    %v5077 = vsub.f32 %v5023, %v5062
    %v5078 = vsub.f32 %v5028, %v5062
    %v5079 = vsub.f32 %v5031, %v5062
    %v5080 = vsub.f32 %v5036, %v5075
    %v5081 = vsub.f32 %v5039, %v5075
    %v5082 = vsub.f32 %v5044, %v5075
    %v5083 = vsub.f32 %v5047, %v5075
    %v5084 = vmul.f32 %v5076, 1.442695
    %v5085 = vpow.pop %v5084
    %v5086 = vmul.f32 %v5077, 1.442695
    %v5087 = vpow.pop %v5086
    %v5088 = vmul.f32 %v5078, 1.442695
    %v5089 = vpow.pop %v5088
    %v5090 = vmul.f32 %v5079, 1.442695
    %v5091 = vpow.pop %v5090
    %v5092 = vmul.f32 %v5080, 1.442695
    %v5093 = vpow.pop %v5092
    %v5094 = vmul.f32 %v5081, 1.442695
    %v5095 = vpow.pop %v5094
    %v5096 = vmul.f32 %v5082, 1.442695
    %v5097 = vpow.pop %v5096
    %v5098 = vmul.f32 %v5083, 1.442695
    %v5099 = vpow.pop %v5098
    %v5100 = vsel %vm431, %v5085, 0.0
    %v5101 = vsel %vm431, %v5087, 0.0
    %v5102 = vadd.f32 %v5100, %v5101
    %v5103 = vsel %vm431, %v5089, 0.0
    %v5104 = vadd.f32 %v5102, %v5103
    %v5105 = vsel %vm431, %v5091, 0.0
    %v5106 = vadd.f32 %v5104, %v5105
    %v5107 = vrot.slane %v5106, 4
    %v5108 = vadd.f32 %v5106, %v5107
    %v5109 = vrot.slane %v5108, 2
    %v5110 = vadd.f32 %v5108, %v5109
    %v5111 = vrot.slane %v5110, 1
    %v5112 = vadd.f32 %v5110, %v5111
    %v5113 = vsel %vm431, %v5093, 0.0
    %v5114 = vsel %vm431, %v5095, 0.0
    %v5115 = vadd.f32 %v5113, %v5114
    %v5116 = vsel %vm431, %v5097, 0.0
    %v5117 = vadd.f32 %v5115, %v5116
    %v5118 = vsel %vm431, %v5099, 0.0
    %v5119 = vadd.f32 %v5117, %v5118
    %v5120 = vrot.slane %v5119, 4
    %v5121 = vadd.f32 %v5119, %v5120
    %v5122 = vrot.slane %v5121, 2
    %v5123 = vadd.f32 %v5121, %v5122
    %v5124 = vrot.slane %v5123, 1
    %v5125 = vadd.f32 %v5123, %v5124
    %v5126 = vmax.f32 %v5112, 1e-20
    %v5127 = vmax.f32 %v5125, 1e-20
    %v5128 = vrcp.pop %v5126
    %v5129 = vmul.f32 %v5085, %v5128
    %v5130 = vmul.f32 %v5087, %v5128
    %v5131 = vmul.f32 %v5089, %v5128
    %v5132 = vmul.f32 %v5091, %v5128
    %v5133 = vrcp.pop %v5127
    %v5134 = vmul.f32 %v5093, %v5133
    %v5135 = vmul.f32 %v5095, %v5133
    %v5136 = vmul.f32 %v5097, %v5133
    %v5137 = vmul.f32 %v5099, %v5133
    %5146 = vrot.lane.b32.xlu0 %v4866, 64
    %v5147 = vpop.permute.xlu0 %5146
    %5148 = vrot.lane.b32.xlu0 %v4869, 64
    %v5149 = vpop.permute.xlu0 %5148
    %5150 = vrot.lane.b32.xlu0 %v4874, 64
    %v5151 = vpop.permute.xlu0 %5150
    %5152 = vrot.lane.b32.xlu0 %v4877, 64
    %v5153 = vpop.permute.xlu0 %5152
    %5154 = vrot.lane.b32.xlu0 %v4882, 64
    %v5155 = vpop.permute.xlu0 %5154
    %5156 = vrot.lane.b32.xlu0 %v4885, 64
    %v5157 = vpop.permute.xlu0 %5156
    %5158 = vrot.lane.b32.xlu0 %v4890, 64
    %v5159 = vpop.permute.xlu0 %5158
    %5160 = vrot.lane.b32.xlu0 %v4893, 64
    %v5161 = vpop.permute.xlu0 %5160
    %v5170 = vmul.f32 %v5129, %v5147
    %v5171 = vmul.f32 %v5130, %v5149
    %v5172 = vmul.f32 %v5131, %v5151
    %v5173 = vmul.f32 %v5132, %v5153
    %v5174 = vmul.f32 %v5134, %v5155
    %v5175 = vmul.f32 %v5135, %v5157
    %v5176 = vmul.f32 %v5136, %v5159
    %v5177 = vmul.f32 %v5137, %v5161
    %v5178 = vsel %vm431, %v5170, 0.0
    %v5179 = vsel %vm431, %v5171, 0.0
    %v5180 = vadd.f32 %v5178, %v5179
    %v5181 = vsel %vm431, %v5172, 0.0
    %v5182 = vadd.f32 %v5180, %v5181
    %v5183 = vsel %vm431, %v5173, 0.0
    %v5184 = vadd.f32 %v5182, %v5183
    %v5185 = vrot.slane %v5184, 4
    %v5186 = vadd.f32 %v5184, %v5185
    %v5187 = vrot.slane %v5186, 2
    %v5188 = vadd.f32 %v5186, %v5187
    %v5189 = vrot.slane %v5188, 1
    %v5190 = vadd.f32 %v5188, %v5189
    %v5191 = vsel %vm431, %v5174, 0.0
    %v5192 = vsel %vm431, %v5175, 0.0
    %v5193 = vadd.f32 %v5191, %v5192
    %v5194 = vsel %vm431, %v5176, 0.0
    %v5195 = vadd.f32 %v5193, %v5194
    %v5196 = vsel %vm431, %v5177, 0.0
    %v5197 = vadd.f32 %v5195, %v5196
    %v5198 = vrot.slane %v5197, 4
    %v5199 = vadd.f32 %v5197, %v5198
    %v5200 = vrot.slane %v5199, 2
    %v5201 = vadd.f32 %v5199, %v5200
    %v5202 = vrot.slane %v5201, 1
    %v5203 = vadd.f32 %v5201, %v5202
    %v5204 = vpack.c.bf16 %v5190, %v5190
    %v5205 = vpack.c.bf16 %v5203, %v5203
    %v5206 = vld [vmem:[%s53] sm:$0xf]
    %v5207 = vld [vmem:[%s53 + $0x4] sm:$0xf]
    %v5208 = vld [vmem:[%s53 + $0x8] sm:$0xf]
    %v5209 = vld [vmem:[%s53 + $0xc] sm:$0xf]
    %v5210 = vld [vmem:[%s53 + $0x10] sm:$0xf]
    %v5211 = vld [vmem:[%s53 + $0x14] sm:$0xf]
    %v5212 = vld [vmem:[%s53 + $0x18] sm:$0xf]
    %v5213 = vld [vmem:[%s53 + $0x1c] sm:$0xf]
    %v5216 = vunpack.c.l.b16 %v5204
    %v5217 = vunpack.c.l.b16 %v5205
    %v5218 = vsel %vm4717, %v5217, %v5216
    %v5219 = vpack.c.b16 %v5218, %v5218
    %v5228 = vunpack.c.l.b16 %v5206
    %v5229 = vunpack.c.l.b16 %v5207
    %v5230 = vunpack.c.l.b16 %v5208
    %v5231 = vunpack.c.l.b16 %v5209
    %v5232 = vunpack.c.l.b16 %v5210
    %v5233 = vunpack.c.l.b16 %v5211
    %v5234 = vunpack.c.l.b16 %v5212
    %v5235 = vunpack.c.l.b16 %v5213
    %v5236 = vpack.c.b16 %v5229, %v5228
    %v5237 = vpack.c.b16 %v5231, %v5230
    %v5238 = vpack.c.b16 %v5233, %v5232
    %v5239 = vpack.c.b16 %v5235, %v5234
    %v5245 = vsel %vm431, %v5219, 0
    %5247 = vmatprep.subr.bf16.mxu0 0
    %5248 = vmatpush1.bf16.msra.mxu0 %v5236
    %5249 = vmatprep.subr.bf16.mxu0 0
    %5250 = vmatpush1.bf16.msra.mxu0 %v5237
    %5251 = vmatprep.subr.bf16.mxu0 0
    %5252 = vmatpush1.bf16.msra.mxu0 %v5238
    %5253 = vmatprep.subr.bf16.mxu0 0
    %5254 = vmatpush1.bf16.msra.mxu0 %v5239
    %5255 = vmatprep.subr.bf16.mxu0 0
    %5256 = vmatpush1.bf16.msra.mxu0 0
    %5257 = vmatprep.subr.bf16.mxu0 0
    %5258 = vmatpush1.bf16.msra.mxu0 0
    %5259 = vmatprep.subr.bf16.mxu0 0
    %5260 = vmatpush1.bf16.msra.mxu0 0
    %5261 = vmatprep.subr.bf16.mxu0 0
    %5262 = vmatpush1.bf16.msra.mxu0 0
    %5263 = vmatprep.subr.bf16.mxu0 0
    %5264 = vmatpush1.bf16.msra.mxu0 0
    %5265 = vmatprep.subr.bf16.mxu0 0
    %5266 = vmatpush1.bf16.msra.mxu0 0
    %5267 = vmatprep.subr.bf16.mxu0 0
    %5268 = vmatpush1.bf16.msra.mxu0 0
    %5269 = vmatprep.subr.bf16.mxu0 0
    %5270 = vmatpush1.bf16.msra.mxu0 0
    %5271 = vmatprep.subr.bf16.mxu0 0
    %5272 = vmatpush1.bf16.msra.mxu0 0
    %5273 = vmatprep.subr.bf16.mxu0 0
    %5274 = vmatpush1.bf16.msra.mxu0 0
    %5275 = vmatprep.subr.bf16.mxu0 0
    %5276 = vmatpush1.bf16.msra.mxu0 0
    %5277 = vmatprep.subr.bf16.mxu0 0
    %5278 = vmatpush1.bf16.msra.mxu0 0
    %5279 = vmatprep.mubr.bf16.mxu0 0
    %5280 = vmatmul.mubr.bf16.gmra.mrb[0].mxu0 %v5245
    %v5281 = vpop.f32.mrb[0].mxu0
    %v5282 = vadd.f32 0.0, %v5281
    %v5283 = vpop.f32.mrb[0].mxu0
    %v5284 = vpop.f32.mrb[0].mxu0
    %v5285 = vpop.f32.mrb[0].mxu0
    %5286 = vdwg.mxu0
    %v5287 = vld [vmem:[#allocation23] sm:$0xf]
    %v5288 = vld [vmem:[#allocation23 + $0x4] sm:$0xf]
    %v5289 = vld [vmem:[#allocation23 + $0x8] sm:$0xf]
    %v5290 = vld [vmem:[#allocation23 + $0xc] sm:$0xf]
    %v5291 = vld [vmem:[#allocation23 + $0x10] sm:$0xf]
    %v5292 = vld [vmem:[#allocation23 + $0x14] sm:$0xf]
    %v5293 = vld [vmem:[#allocation23 + $0x18] sm:$0xf]
    %v5294 = vld [vmem:[#allocation23 + $0x1c] sm:$0xf]
    %v5295 = vld [vmem:[%s59] sm:$0x1]
    %v5297 = vlaneseq
    %v5298 = vshrl.u32 %v5297, 7
    %v5299 = vsub.s32 0, %v5298
    %v5300 = vrot.slane %v5295, %v5299
    %v5310 = vunpack.c.l.b16 %v5287
    %v5311 = vunpack.c.l.b16 %v5288
    %v5312 = vunpack.c.l.b16 %v5289
    %v5313 = vunpack.c.l.b16 %v5290
    %v5314 = vunpack.c.l.b16 %v5291
    %v5315 = vunpack.c.l.b16 %v5292
    %v5316 = vunpack.c.l.b16 %v5293
    %v5317 = vunpack.c.l.b16 %v5294
    %v5318 = vpack.c.b16 %v5311, %v5310
    %v5319 = vpack.c.b16 %v5313, %v5312
    %v5320 = vpack.c.b16 %v5315, %v5314
    %v5321 = vpack.c.b16 %v5317, %v5316
    %5326 = vmatprep.subr.bf16.mxu0 0
    %5327 = vmatpush1.bf16.msra.mxu0 %v5318
    %5328 = vmatprep.subr.bf16.mxu0 0
    %5329 = vmatpush1.bf16.msra.mxu0 %v5319
    %5330 = vmatprep.subr.bf16.mxu0 0
    %5331 = vmatpush1.bf16.msra.mxu0 %v5320
    %5332 = vmatprep.subr.bf16.mxu0 0
    %5333 = vmatpush1.bf16.msra.mxu0 %v5321
    %5334 = vmatprep.subr.bf16.mxu0 0
    %5335 = vmatpush1.bf16.msra.mxu0 0
    %5336 = vmatprep.subr.bf16.mxu0 0
    %5337 = vmatpush1.bf16.msra.mxu0 0
    %5338 = vmatprep.subr.bf16.mxu0 0
    %5339 = vmatpush1.bf16.msra.mxu0 0
    %5340 = vmatprep.subr.bf16.mxu0 0
    %5341 = vmatpush1.bf16.msra.mxu0 0
    %5342 = vmatprep.subr.bf16.mxu0 0
    %5343 = vmatpush1.bf16.msra.mxu0 0
    %5344 = vmatprep.subr.bf16.mxu0 0
    %5345 = vmatpush1.bf16.msra.mxu0 0
    %5346 = vmatprep.subr.bf16.mxu0 0
    %5347 = vmatpush1.bf16.msra.mxu0 0
    %5348 = vmatprep.subr.bf16.mxu0 0
    %5349 = vmatpush1.bf16.msra.mxu0 0
    %5350 = vmatprep.subr.bf16.mxu0 0
    %5351 = vmatpush1.bf16.msra.mxu0 0
    %5352 = vmatprep.subr.bf16.mxu0 0
    %5353 = vmatpush1.bf16.msra.mxu0 0
    %5354 = vmatprep.subr.bf16.mxu0 0
    %5355 = vmatpush1.bf16.msra.mxu0 0
    %5356 = vmatprep.subr.bf16.mxu0 0
    %5357 = vmatpush1.bf16.msra.mxu0 0
    %5358 = vmatprep.mubr.bf16.mxu0 0
    %5359 = vmatmul.mubr.bf16.gmra.mrb[0].mxu0 %v5245
    %v5360 = vpop.f32.mrb[0].mxu0
    %v5361 = vadd.f32 %v5300, %v5360
    %v5362 = vpop.f32.mrb[0].mxu0
    %v5363 = vpop.f32.mrb[0].mxu0
    %v5364 = vpop.f32.mrb[0].mxu0
    %5365 = vdwg.mxu0
    %v5366 = vsel %vm431, %v5282, 0.0
    %v5369 = vunpack.c.l.s4 1966171168
    %v5370 = vunpack.c.0.s8 %v5369
    %v5371 = vlaneseq
    %v5372 = vshrl.u32 %v5371, 7
    %v5373 = vsub.s32 %v5370, %v5372
    %v5374 = vrot.slane %v5361, %v5373
    %v5375 = vcombine.high %v5374, %v5374
    %v5377 = vunpack.c.l.s4 1966171168
    %v5378 = vunpack.c.0.s8 %v5377
    %v5379 = vlaneseq
    %v5380 = vshrl.u32 %v5379, 7
    %v5381 = vsub.s32 %v5378, %v5380
    %v5382 = vrot.slane %v5374, %v5381
    %v5384 = vunpack.c.l.s4 1966171168
    %v5385 = vunpack.c.0.s8 %v5384
    %v5386 = vlaneseq
    %v5387 = vshrl.u32 %v5386, 7
    %v5388 = vsub.s32 %v5385, %v5387
    %v5389 = vrot.slane %v5375, %v5388
    %v5394 = vunpack.c.l.s4 1966171168
    %v5395 = vunpack.c.0.s8 %v5394
    %v5396 = vlaneseq
    %v5397 = vshrl.u32 %v5396, 7
    %v5398 = vsub.s32 %v5395, %v5397
    %v5399 = vrot.slane %v5366, %v5398
    %v5400 = vcombine.high %v5399, %v5399
    %v5402 = vunpack.c.l.s4 1966171168
    %v5403 = vunpack.c.0.s8 %v5402
    %v5404 = vlaneseq
    %v5405 = vshrl.u32 %v5404, 7
    %v5406 = vsub.s32 %v5403, %v5405
    %v5407 = vrot.slane %v5399, %v5406
    %v5409 = vunpack.c.l.s4 1966171168
    %v5410 = vunpack.c.0.s8 %v5409
    %v5411 = vlaneseq
    %v5412 = vshrl.u32 %v5411, 7
    %v5413 = vsub.s32 %v5410, %v5412
    %v5414 = vrot.slane %v5400, %v5413
    %v5415 = vlaneseq
    %v5416 = vshrl.u32 %v5415, 7
    %v5417 = vsub.s32 0, %v5416
    %v5418 = vrot.slane %v5407, %v5417
    %v5419 = vlaneseq
    %v5420 = vshrl.u32 %v5419, 7
    %v5421 = vsub.s32 0, %v5420
    %v5422 = vrot.slane %v5414, %v5421
    %vm5425 = vcmask 1040384
    %v5426 = vsel %vm5425, %v5382, %v5418
    %v5427 = vsel %vm5425, %v5389, %v5422
    %vm5428 = vcmask 1041408
    %v5429 = vsel %vm5428, %v5426, 0.0
    %v5430 = vsel %vm5428, %v5427, 0.0
    %5431 = vst [vmem:[#allocation25] sm:$0xff] %v5429
    %5432 = vst [vmem:[#allocation25 + $0x8] sm:$0xff] %v5430
    // Predicated region
    $region178: #{tpu_custom_call.1} parent=1 // pred_check
      _
    $region179: #{tpu_custom_call.1} parent=1 // pred_check_branch
      %5434 = sbr.rel (0) target = $region181
    $region180: #{tpu_custom_call.1} parent=1 // pred_region
      %s5436 = ssub.s32 256, 256
      %5437 = vsyncadd [#allocation4], %s5436
      %s5438 = sshll.u32 [#allocation25], 4
      %s5439 = int_to_ptr.vmem [resolvable:$true] %s5438
      %5444 = dma.vmem_to_hbm [thread:$0]  %s5439, 256, %s61, [#allocation4], 128, 128, 8
    $region181: #{tpu_custom_call.1} parent=1 // pred_fallthru
      _
    // Predicated region
    $region182: #{tpu_custom_call.1} parent=1 // pred_check
      _
    $region183: #{tpu_custom_call.1} parent=1 // pred_check_branch
      %5446 = sbr.rel (0) target = $region185
    $region184: #{tpu_custom_call.1} parent=1 // pred_region
      %5447 = dma.done [#allocation4], 256
    $region185: #{tpu_custom_call.1} parent=1 // pred_fallthru
      _
    %5448 = vsyncpa [#allocation3], 1
    %5449 = vsyncpa [#allocation6], 1
    %5450 = vsyncpa [#allocation9], 1
    %5451 = vsyncpa [#allocation12], 1
    %5452 = vsyncpa [#allocation15], 1
    %5453 = vsyncpa [#allocation18], 1
    %5454 = vsyncpa [#allocation21], 1
    %5455 = vsyncpa [#allocation24], 1
    %5456 = vsyncpa [#allocation4], 1

</llo_original>
